<compile_context>
chip_gen: v6e
topology: v6e:2x2x1
jax: 0.10.0
libtpu: 0.0.40
codegen_flags: <defaults>
</compile_context>

<pallas_src>
import functools
import math

import jax
import jax.numpy as jnp
from jax.experimental import pallas as pl
from jax.experimental.pallas import tpu as pltpu


_LANE = 128  # classifier logits padded to a full lane tile (unmasked final store)


# ----------------------------- fused encoder kernel -----------------------------

def _encoder_kernel(mask_ref, emb_ref, embg_ref, embb_ref,
                    wqkv_ref, bqkv_ref, wo_ref, bo_ref, ln1g_ref, ln1b_ref,
                    w1_ref, b1_ref, w2_ref, b2_ref, ln2g_ref, ln2b_ref,
                    wp_ref, bp_ref, wc_ref, bc_ref,
                    logits_ref,
                    x_scr, ctx_scr,
                    *, B, S, NH, DH, eps, scale):
    H = NH * DH
    layer = pl.program_id(0)

    def layernorm(h, g, b):
        mu = jnp.mean(h, axis=-1, keepdims=True)
        d = h - mu
        var = jnp.mean(d * d, axis=-1, keepdims=True)
        return d * jax.lax.rsqrt(var + eps) * g + b

    def matmul(a, w):
        # bf16 operands, f32 accumulation on the MXU
        return jnp.dot(a.astype(jnp.bfloat16), w.astype(jnp.bfloat16),
                       preferred_element_type=jnp.float32)

    # --- grid step 0: embedding LayerNorm (no dummy residual) ---
    @pl.when(layer == 0)
    def _():
        x_scr[...] = layernorm(emb_ref[...], embg_ref[...], embb_ref[...])

    x = x_scr[...]                                     # (B*S, H), resident in VMEM

    # --- fused QKV projection ---
    qkv = matmul(x, wqkv_ref[0]) + bqkv_ref[0]         # (B*S, 3H) f32
    q = qkv[:, 0:H]
    k = qkv[:, H:2 * H]
    v = qkv[:, 2 * H:3 * H]

    # additive attention mask built in-kernel from the (B, S) mask vector
    neg = (1.0 - mask_ref[...]) * -1e9                 # (B, S) f32

    # --- multi-head self-attention: all (batch, head) pairs inside one kernel invocation ---
    for b in range(B):
        add_b = neg[b:b + 1, :]                        # (1, S) broadcast over query rows
        r0, r1 = b * S, (b + 1) * S
        for h in range(NH):
            c0, c1 = h * DH, (h + 1) * DH
            q_bh = q[r0:r1, c0:c1].astype(jnp.bfloat16)
            k_bh = k[r0:r1, c0:c1].astype(jnp.bfloat16)
            v_bh = v[r0:r1, c0:c1].astype(jnp.bfloat16)
            s = jax.lax.dot_general(q_bh, k_bh, (((1,), (1,)), ((), ())),
                                    preferred_element_type=jnp.float32)
            s = s * scale + add_b
            s = s - jnp.max(s, axis=-1, keepdims=True)
            p = jnp.exp(s)
            p = p * pl.reciprocal(jnp.sum(p, axis=-1, keepdims=True), approx=True)
            ctx_scr[r0:r1, c0:c1] = jnp.dot(p.astype(jnp.bfloat16), v_bh,
                                            preferred_element_type=jnp.float32)

    # --- attention output projection + LN1 (residual fused) ---
    attn = matmul(ctx_scr[...], wo_ref[0]) + bo_ref[0]
    x1 = layernorm(attn + x, ln1g_ref[0], ln1b_ref[0])

    # --- FFN + LN2 (residual fused) ---
    inter = matmul(x1, w1_ref[0]) + b1_ref[0]
    # TODO(synk): HF "gelu" is the exact erf form; tanh approximation used here.
    gc = 0.7978845608028654
    inter = 0.5 * inter * (1.0 + jnp.tanh(gc * (inter + 0.044715 * inter * inter * inter)))
    ffn = matmul(inter, w2_ref[0]) + b2_ref[0]
    x2 = layernorm(ffn + x1, ln2g_ref[0], ln2b_ref[0])
    x_scr[...] = x2                                    # carry hidden state to next layer

    # --- last layer: pooler (tanh) + classifier, lane-padded logits ---
    @pl.when(layer == pl.num_programs(0) - 1)
    def _():
        for b in range(B):
            cls_b = x2[b * S:b * S + 1, :]             # (1, H) == hidden[b, 0, :]
            pooled = jnp.tanh(matmul(cls_b, wp_ref[...]) + bp_ref[...])
            logits_ref[b:b + 1, :] = matmul(pooled, wc_ref[...]) + bc_ref[...]


# ----------------------------- parameters -----------------------------

CONFIG = dict(
    vocab_size=100,
    hidden_size=32,
    num_heads=4,
    num_layers=2,
    intermediate_size=64,
    max_position=64,
    type_vocab_size=1,
    pad_token_id=1,
    layer_norm_eps=1e-5,
    num_labels=4,
)


def _dense(key, din, dout):
    kw, kb = jax.random.split(key)
    return {
        "w": 0.02 * jax.random.normal(kw, (din, dout), jnp.float32),
        "b": 0.02 * jax.random.normal(kb, (dout,), jnp.float32),
    }


def init_params(key, cfg):
    H, I = cfg["hidden_size"], cfg["intermediate_size"]
    keys = jax.random.split(key, 5 + cfg["num_layers"])
    params = {
        "word_emb": 0.02 * jax.random.normal(keys[0], (cfg["vocab_size"], H), jnp.float32),
        "pos_emb": 0.02 * jax.random.normal(keys[1], (cfg["max_position"], H), jnp.float32),
        "type_emb": 0.02 * jax.random.normal(keys[2], (cfg["type_vocab_size"], H), jnp.float32),
        "emb_ln_g": jnp.ones((H,), jnp.float32),
        "emb_ln_b": jnp.zeros((H,), jnp.float32),
        "pooler": _dense(keys[3], H, H),
        "classifier": _dense(keys[4], H, cfg["num_labels"]),   # nn.Linear(hidden_size, 4)
        "layers": [],
    }
    for i in range(cfg["num_layers"]):
        k = jax.random.split(keys[5 + i], 6)
        params["layers"].append({
            "q": _dense(k[0], H, H),
            "k": _dense(k[1], H, H),
            "v": _dense(k[2], H, H),
            "o": _dense(k[3], H, H),
            "ln1_g": jnp.ones((H,), jnp.float32),
            "ln1_b": jnp.zeros((H,), jnp.float32),
            "fc1": _dense(k[4], H, I),
            "fc2": _dense(k[5], I, H),
            "ln2_g": jnp.ones((H,), jnp.float32),
            "ln2_b": jnp.zeros((H,), jnp.float32),
        })
    return params


def pack_params(params, cfg):
    """Fuse QKV, stack per-layer params along a leading layer axis, cast matmul
    weights to bf16, and lane-pad the classifier head to 128 outputs."""
    H, I = cfg["hidden_size"], cfg["intermediate_size"]
    n_labels = cfg["num_labels"]
    layers = params["layers"]

    def stack(fn, dtype=None):
        arr = jnp.stack([fn(lyr) for lyr in layers], axis=0)
        return arr.astype(dtype) if dtype is not None else arr

    packed = {
        "word_emb": params["word_emb"],
        "pos_emb": params["pos_emb"],
        "type_emb": params["type_emb"],
        "emb_ln_g": params["emb_ln_g"].reshape(1, H),
        "emb_ln_b": params["emb_ln_b"].reshape(1, H),
        # fused QKV: (L, H, 3H) weight / (L, 1, 3H) bias
        "wqkv": stack(lambda l: jnp.concatenate(
            [l["q"]["w"], l["k"]["w"], l["v"]["w"]], axis=1), jnp.bfloat16),
        "bqkv": stack(lambda l: jnp.concatenate(
            [l["q"]["b"], l["k"]["b"], l["v"]["b"]]).reshape(1, 3 * H)),
        "wo": stack(lambda l: l["o"]["w"], jnp.bfloat16),
        "bo": stack(lambda l: l["o"]["b"].reshape(1, H)),
        "ln1_g": stack(lambda l: l["ln1_g"].reshape(1, H)),
        "ln1_b": stack(lambda l: l["ln1_b"].reshape(1, H)),
        "w1": stack(lambda l: l["fc1"]["w"], jnp.bfloat16),
        "b1": stack(lambda l: l["fc1"]["b"].reshape(1, I)),
        "w2": stack(lambda l: l["fc2"]["w"], jnp.bfloat16),
        "b2": stack(lambda l: l["fc2"]["b"].reshape(1, H)),
        "ln2_g": stack(lambda l: l["ln2_g"].reshape(1, H)),
        "ln2_b": stack(lambda l: l["ln2_b"].reshape(1, H)),
        "wp": params["pooler"]["w"].astype(jnp.bfloat16),
        "bp": params["pooler"]["b"].reshape(1, H),
        "wc": jnp.pad(params["classifier"]["w"],
                      ((0, 0), (0, _LANE - n_labels))).astype(jnp.bfloat16),
        "bc": jnp.pad(params["classifier"]["b"], (0, _LANE - n_labels)).reshape(1, _LANE),
    }
    return packed


# ----------------------------- forward -----------------------------

def my_bertweet_forward(packed, input_ids, attention_mask, cfg):
    B, S = input_ids.shape
    H, NH = cfg["hidden_size"], cfg["num_heads"]
    DH = H // NH
    I = cfg["intermediate_size"]
    L = cfg["num_layers"]
    pad_id = cfg["pad_token_id"]
    M = B * S

    # --- embeddings (gather is glue; everything else runs inside the fused kernel) ---
    mask_f = attention_mask.astype(jnp.float32)
    # RoBERTa-style position ids: cumulative over non-pad positions, offset by pad idx.
    pos_ids = (jnp.cumsum(attention_mask, axis=1) * attention_mask + pad_id).astype(jnp.int32)
    tok_type = jnp.zeros_like(input_ids)
    emb = (packed["word_emb"][input_ids]
           + packed["pos_emb"][pos_ids]
           + packed["type_emb"][tok_type]).astype(jnp.float32).reshape(M, H)

    kern = functools.partial(_encoder_kernel, B=B, S=S, NH=NH, DH=DH,
                             eps=cfg["layer_norm_eps"], scale=1.0 / math.sqrt(DH))

    def const_spec(shape):
        return pl.BlockSpec(shape, lambda l: (0,) * len(shape))

    def layer_spec(shape):
        return pl.BlockSpec((1,) + shape, lambda l: (l, 0, 0))

    logits_pad = pl.pallas_call(
        kern,
        out_shape=jax.ShapeDtypeStruct((B, _LANE), jnp.float32),
        grid=(L,),
        in_specs=[
            const_spec((B, S)),            # attention mask
            const_spec((M, H)),            # embeddings
            const_spec((1, H)),            # emb LN gamma
            const_spec((1, H)),            # emb LN beta
            layer_spec((H, 3 * H)),        # fused QKV weight
            layer_spec((1, 3 * H)),        # fused QKV bias
            layer_spec((H, H)),            # attn output weight
            layer_spec((1, H)),            # attn output bias
            layer_spec((1, H)),            # LN1 gamma
            layer_spec((1, H)),            # LN1 beta
            layer_spec((H, I)),            # FFN fc1 weight
            layer_spec((1, I)),            # FFN fc1 bias
            layer_spec((I, H)),            # FFN fc2 weight
            layer_spec((1, H)),            # FFN fc2 bias
            layer_spec((1, H)),            # LN2 gamma
            layer_spec((1, H)),            # LN2 beta
            const_spec((H, H)),            # pooler weight
            const_spec((1, H)),            # pooler bias
            const_spec((H, _LANE)),        # classifier weight (lane padded)
            const_spec((1, _LANE)),        # classifier bias (lane padded)
        ],
        out_specs=pl.BlockSpec((B, _LANE), lambda l: (0, 0)),
        scratch_shapes=[
            pltpu.VMEM((M, H), jnp.float32),   # hidden-state carry across layers
            pltpu.VMEM((M, H), jnp.float32),   # attention context assembly
        ],
        compiler_params=pltpu.CompilerParams(
            dimension_semantics=("arbitrary",)),
    )(mask_f, emb, packed["emb_ln_g"], packed["emb_ln_b"],
      packed["wqkv"], packed["bqkv"], packed["wo"], packed["bo"],
      packed["ln1_g"], packed["ln1_b"], packed["w1"], packed["b1"],
      packed["w2"], packed["b2"], packed["ln2_g"], packed["ln2_b"],
      packed["wp"], packed["bp"], packed["wc"], packed["bc"])

    logits = logits_pad[:, :cfg["num_labels"]]
    # outputs[2:] (hidden states / attentions) are empty with the default HF config
    return (logits,)


if __name__ == "__main__":
    cfg = CONFIG
    key = jax.random.PRNGKey(0)
    pkey, ikey = jax.random.split(key)
    params = init_params(pkey, cfg)
    packed = pack_params(params, cfg)

    B, S = 2, 8
    input_ids = jax.random.randint(ikey, (B, S), 2, cfg["vocab_size"], dtype=jnp.int32)
    attention_mask = jnp.ones((B, S), dtype=jnp.int32)

    fwd = jax.jit(functools.partial(my_bertweet_forward, cfg=cfg))
    out = fwd(packed, input_ids, attention_mask)
    logits = jax.block_until_ready(out[0])
    assert logits.shape == (B, cfg["num_labels"]) and logits.dtype == jnp.float32
    print("KERNEL_OK")
</pallas_src>

<mosaic_0001>
module attributes {stable_mosaic.version = 11 : i64} {
  func.func @_encoder_kernel(%arg0: i32, %arg1: memref<2x8xf32, #tpu.memory_space<vmem>>, %arg2: memref<16x32xf32, #tpu.memory_space<vmem>>, %arg3: memref<1x32xf32, #tpu.memory_space<vmem>>, %arg4: memref<1x32xf32, #tpu.memory_space<vmem>>, %arg5: memref<1x32x96xbf16, #tpu.memory_space<vmem>>, %arg6: memref<1x1x96xf32, #tpu.memory_space<vmem>>, %arg7: memref<1x32x32xbf16, #tpu.memory_space<vmem>>, %arg8: memref<1x1x32xf32, #tpu.memory_space<vmem>>, %arg9: memref<1x1x32xf32, #tpu.memory_space<vmem>>, %arg10: memref<1x1x32xf32, #tpu.memory_space<vmem>>, %arg11: memref<1x32x64xbf16, #tpu.memory_space<vmem>>, %arg12: memref<1x1x64xf32, #tpu.memory_space<vmem>>, %arg13: memref<1x64x32xbf16, #tpu.memory_space<vmem>>, %arg14: memref<1x1x32xf32, #tpu.memory_space<vmem>>, %arg15: memref<1x1x32xf32, #tpu.memory_space<vmem>>, %arg16: memref<1x1x32xf32, #tpu.memory_space<vmem>>, %arg17: memref<32x32xbf16, #tpu.memory_space<vmem>>, %arg18: memref<1x32xf32, #tpu.memory_space<vmem>>, %arg19: memref<32x128xbf16, #tpu.memory_space<vmem>>, %arg20: memref<1x128xf32, #tpu.memory_space<vmem>>, %arg21: memref<2x128xf32, #tpu.memory_space<vmem>>, %arg22: memref<16x32xf32, #tpu.memory_space<vmem>>, %arg23: memref<16x32xf32, #tpu.memory_space<vmem>>) attributes {dimension_semantics = [#tpu.dimension_semantics<arbitrary>], iteration_bounds = array<i64: 2>, scalar_prefetch = 0 : i64, scratch_operands = 2 : i64, tpu.core_type = #tpu.core_type<tc>, window_params = [{pipeline_mode = #tpu.pipeline_mode<synchronous>, transform_indices = @transform_0, window_bounds = array<i64: 2, 8>}, {pipeline_mode = #tpu.pipeline_mode<synchronous>, transform_indices = @transform_1, window_bounds = array<i64: 16, 32>}, {pipeline_mode = #tpu.pipeline_mode<synchronous>, transform_indices = @transform_2, window_bounds = array<i64: 1, 32>}, {pipeline_mode = #tpu.pipeline_mode<synchronous>, transform_indices = @transform_3, window_bounds = array<i64: 1, 32>}, {transform_indices = @transform_4, window_bounds = array<i64: 1, 32, 96>}, {transform_indices = @transform_5, window_bounds = array<i64: 1, 1, 96>}, {transform_indices = @transform_6, window_bounds = array<i64: 1, 32, 32>}, {transform_indices = @transform_7, window_bounds = array<i64: 1, 1, 32>}, {transform_indices = @transform_8, window_bounds = array<i64: 1, 1, 32>}, {transform_indices = @transform_9, window_bounds = array<i64: 1, 1, 32>}, {transform_indices = @transform_10, window_bounds = array<i64: 1, 32, 64>}, {transform_indices = @transform_11, window_bounds = array<i64: 1, 1, 64>}, {transform_indices = @transform_12, window_bounds = array<i64: 1, 64, 32>}, {transform_indices = @transform_13, window_bounds = array<i64: 1, 1, 32>}, {transform_indices = @transform_14, window_bounds = array<i64: 1, 1, 32>}, {transform_indices = @transform_15, window_bounds = array<i64: 1, 1, 32>}, {pipeline_mode = #tpu.pipeline_mode<synchronous>, transform_indices = @transform_16, window_bounds = array<i64: 32, 32>}, {pipeline_mode = #tpu.pipeline_mode<synchronous>, transform_indices = @transform_17, window_bounds = array<i64: 1, 32>}, {pipeline_mode = #tpu.pipeline_mode<synchronous>, transform_indices = @transform_18, window_bounds = array<i64: 32, 128>}, {pipeline_mode = #tpu.pipeline_mode<synchronous>, transform_indices = @transform_19, window_bounds = array<i64: 1, 128>}, {pipeline_mode = #tpu.pipeline_mode<synchronous>, transform_indices = @transform_20, window_bounds = array<i64: 2, 128>}]} {
    %c0_i32 = arith.constant 0 : i32
    %0 = arith.cmpi eq, %arg0, %c0_i32 : i32
    %1 = arith.extui %0 : i1 to i32
    %c0_i32_0 = arith.constant 0 : i32
    %2 = arith.cmpi ne, %1, %c0_i32_0 : i32
    scf.if %2 {
      %c0_117 = arith.constant 0 : index
      %c0_118 = arith.constant 0 : index
      %306 = vector.load %arg2[%c0_117, %c0_118] : memref<16x32xf32, #tpu.memory_space<vmem>>, vector<16x32xf32>
      %c0_119 = arith.constant 0 : index
      %c0_120 = arith.constant 0 : index
      %307 = vector.load %arg3[%c0_119, %c0_120] : memref<1x32xf32, #tpu.memory_space<vmem>>, vector<1x32xf32>
      %c0_121 = arith.constant 0 : index
      %c0_122 = arith.constant 0 : index
      %308 = vector.load %arg4[%c0_121, %c0_122] : memref<1x32xf32, #tpu.memory_space<vmem>>, vector<1x32xf32>
      %cst_123 = arith.constant dense<0.000000e+00> : vector<16xf32>
      %309 = vector.multi_reduction <add>, %306, %cst_123 [1] : vector<16x32xf32> to vector<16xf32>
      %310 = vector.shape_cast %309 : vector<16xf32> to vector<16x1xf32>
      %cst_124 = arith.constant 3.200000e+01 : f32
      %311 = vector.broadcast %cst_124 : f32 to vector<16x1xf32>
      %312 = arith.divf %310, %311 : vector<16x1xf32>
      %313 = vector.broadcast %312 : vector<16x1xf32> to vector<16x32xf32>
      %314 = arith.subf %306, %313 : vector<16x32xf32>
      %315 = arith.mulf %314, %314 : vector<16x32xf32>
      %cst_125 = arith.constant dense<0.000000e+00> : vector<16xf32>
      %316 = vector.multi_reduction <add>, %315, %cst_125 [1] : vector<16x32xf32> to vector<16xf32>
      %317 = vector.shape_cast %316 : vector<16xf32> to vector<16x1xf32>
      %cst_126 = arith.constant 3.200000e+01 : f32
      %318 = vector.broadcast %cst_126 : f32 to vector<16x1xf32>
      %319 = arith.divf %317, %318 : vector<16x1xf32>
      %cst_127 = arith.constant 9.99999974E-6 : f32
      %320 = vector.broadcast %cst_127 : f32 to vector<16x1xf32>
      %321 = arith.addf %319, %320 : vector<16x1xf32>
      %322 = math.rsqrt %321 : vector<16x1xf32>
      %323 = vector.broadcast %322 : vector<16x1xf32> to vector<16x32xf32>
      %324 = arith.mulf %314, %323 : vector<16x32xf32>
      %325 = vector.broadcast %307 : vector<1x32xf32> to vector<16x32xf32>
      %326 = arith.mulf %324, %325 : vector<16x32xf32>
      %327 = vector.broadcast %308 : vector<1x32xf32> to vector<16x32xf32>
      %328 = arith.addf %326, %327 : vector<16x32xf32>
      %c0_128 = arith.constant 0 : index
      %c0_129 = arith.constant 0 : index
      %329 = vector.load %arg22[%c0_128, %c0_129] : memref<16x32xf32, #tpu.memory_space<vmem>>, vector<16x32xf32>
      tpu.vector_store %arg22[%c0_128, %c0_129], %328 {strides = array<i32>} : memref<16x32xf32, #tpu.memory_space<vmem>>, vector<16x32xf32>,
    } else {
    }
    %c0 = arith.constant 0 : index
    %c0_1 = arith.constant 0 : index
    %3 = vector.load %arg22[%c0, %c0_1] : memref<16x32xf32, #tpu.memory_space<vmem>>, vector<16x32xf32>
    %c0_2 = arith.constant 0 : index
    %c0_3 = arith.constant 0 : index
    %c0_4 = arith.constant 0 : index
    %4 = vector.load %arg5[%c0_2, %c0_3, %c0_4] : memref<1x32x96xbf16, #tpu.memory_space<vmem>>, vector<1x32x96xbf16>
    %5 = vector.shape_cast %4 : vector<1x32x96xbf16> to vector<32x96xbf16>
    %6 = arith.truncf %3 : vector<16x32xf32> to vector<16x32xbf16>
    %cst = arith.constant dense<0.000000e+00> : vector<16x96xf32>
    %7 = tpu.matmul %6, %5, %cst {dimension_numbers = #tpu.dot_dimension_numbers<[1], [0], [0], [1], [0, 0, 1, 1], [], []>} : vector<16x32xbf16>, vector<32x96xbf16>, vector<16x96xf32> -> vector<16x96xf32>
    %c0_5 = arith.constant 0 : index
    %c0_6 = arith.constant 0 : index
    %c0_7 = arith.constant 0 : index
    %8 = vector.load %arg6[%c0_5, %c0_6, %c0_7] : memref<1x1x96xf32, #tpu.memory_space<vmem>>, vector<1x1x96xf32>
    %9 = vector.shape_cast %8 : vector<1x1x96xf32> to vector<1x96xf32>
    %10 = vector.broadcast %9 : vector<1x96xf32> to vector<16x96xf32>
    %11 = arith.addf %7, %10 : vector<16x96xf32>
    %12 = vector.extract_strided_slice %11 {offsets = [0, 0], sizes = [16, 32], strides = [1, 1]} : vector<16x96xf32> to vector<16x32xf32>
    %13 = vector.extract_strided_slice %11 {offsets = [0, 32], sizes = [16, 32], strides = [1, 1]} : vector<16x96xf32> to vector<16x32xf32>
    %14 = vector.extract_strided_slice %11 {offsets = [0, 64], sizes = [16, 32], strides = [1, 1]} : vector<16x96xf32> to vector<16x32xf32>
    %c0_8 = arith.constant 0 : index
    %c0_9 = arith.constant 0 : index
    %15 = vector.load %arg1[%c0_8, %c0_9] : memref<2x8xf32, #tpu.memory_space<vmem>>, vector<2x8xf32>
    %cst_10 = arith.constant 1.000000e+00 : f32
    %16 = vector.broadcast %cst_10 : f32 to vector<2x8xf32>
    %17 = arith.subf %16, %15 : vector<2x8xf32>
    %cst_11 = arith.constant -1.000000e+09 : f32
    %18 = vector.broadcast %cst_11 : f32 to vector<2x8xf32>
    %19 = arith.mulf %17, %18 : vector<2x8xf32>
    %20 = vector.extract_strided_slice %19 {offsets = [0, 0], sizes = [1, 8], strides = [1, 1]} : vector<2x8xf32> to vector<1x8xf32>
    %21 = vector.extract_strided_slice %12 {offsets = [0, 0], sizes = [8, 8], strides = [1, 1]} : vector<16x32xf32> to vector<8x8xf32>
    %22 = arith.truncf %21 : vector<8x8xf32> to vector<8x8xbf16>
    %23 = vector.extract_strided_slice %13 {offsets = [0, 0], sizes = [8, 8], strides = [1, 1]} : vector<16x32xf32> to vector<8x8xf32>
    %24 = arith.truncf %23 : vector<8x8xf32> to vector<8x8xbf16>
    %25 = vector.extract_strided_slice %14 {offsets = [0, 0], sizes = [8, 8], strides = [1, 1]} : vector<16x32xf32> to vector<8x8xf32>
    %26 = arith.truncf %25 : vector<8x8xf32> to vector<8x8xbf16>
    %cst_12 = arith.constant dense<0.000000e+00> : vector<8x8xf32>
    %27 = tpu.matmul %22, %24, %cst_12 {dimension_numbers = #tpu.dot_dimension_numbers<[1], [1], [0], [0], [0, 0, 1, 0], [], []>} : vector<8x8xbf16>, vector<8x8xbf16>, vector<8x8xf32> -> vector<8x8xf32>
    %cst_13 = arith.constant 0.353553385 : f32
    %28 = vector.broadcast %cst_13 : f32 to vector<8x8xf32>
    %29 = arith.mulf %27, %28 : vector<8x8xf32>
    %30 = vector.broadcast %20 : vector<1x8xf32> to vector<8x8xf32>
    %31 = arith.addf %29, %30 : vector<8x8xf32>
    %cst_14 = arith.constant dense<0xFF800000> : vector<8xf32>
    %32 = vector.multi_reduction <maximumf>, %31, %cst_14 [1] : vector<8x8xf32> to vector<8xf32>
    %33 = vector.shape_cast %32 : vector<8xf32> to vector<8x1xf32>
    %34 = vector.broadcast %33 : vector<8x1xf32> to vector<8x8xf32>
    %35 = arith.subf %31, %34 : vector<8x8xf32>
    %36 = math.exp %35 : vector<8x8xf32>
    %cst_15 = arith.constant dense<0.000000e+00> : vector<8xf32>
    %37 = vector.multi_reduction <add>, %36, %cst_15 [1] : vector<8x8xf32> to vector<8xf32>
    %38 = vector.shape_cast %37 : vector<8xf32> to vector<8x1xf32>
    %39 = tpu.reciprocal %38 {approx = true} : vector<8x1xf32> -> vector<8x1xf32>
    %40 = vector.broadcast %39 : vector<8x1xf32> to vector<8x8xf32>
    %41 = arith.mulf %36, %40 : vector<8x8xf32>
    %42 = arith.truncf %41 : vector<8x8xf32> to vector<8x8xbf16>
    %cst_16 = arith.constant dense<0.000000e+00> : vector<8x8xf32>
    %43 = tpu.matmul %42, %26, %cst_16 {dimension_numbers = #tpu.dot_dimension_numbers<[1], [0], [0], [1], [0, 0, 1, 1], [], []>} : vector<8x8xbf16>, vector<8x8xbf16>, vector<8x8xf32> -> vector<8x8xf32>
    %c0_17 = arith.constant 0 : index
    %c0_18 = arith.constant 0 : index
    %44 = vector.load %arg23[%c0_17, %c0_18] : memref<16x32xf32, #tpu.memory_space<vmem>>, vector<8x8xf32>
    tpu.vector_store %arg23[%c0_17, %c0_18], %43 {strides = array<i32>} : memref<16x32xf32, #tpu.memory_space<vmem>>, vector<8x8xf32>,
    %45 = vector.extract_strided_slice %12 {offsets = [0, 8], sizes = [8, 8], strides = [1, 1]} : vector<16x32xf32> to vector<8x8xf32>
    %46 = arith.truncf %45 : vector<8x8xf32> to vector<8x8xbf16>
    %47 = vector.extract_strided_slice %13 {offsets = [0, 8], sizes = [8, 8], strides = [1, 1]} : vector<16x32xf32> to vector<8x8xf32>
    %48 = arith.truncf %47 : vector<8x8xf32> to vector<8x8xbf16>
    %49 = vector.extract_strided_slice %14 {offsets = [0, 8], sizes = [8, 8], strides = [1, 1]} : vector<16x32xf32> to vector<8x8xf32>
    %50 = arith.truncf %49 : vector<8x8xf32> to vector<8x8xbf16>
    %cst_19 = arith.constant dense<0.000000e+00> : vector<8x8xf32>
    %51 = tpu.matmul %46, %48, %cst_19 {dimension_numbers = #tpu.dot_dimension_numbers<[1], [1], [0], [0], [0, 0, 1, 0], [], []>} : vector<8x8xbf16>, vector<8x8xbf16>, vector<8x8xf32> -> vector<8x8xf32>
    %cst_20 = arith.constant 0.353553385 : f32
    %52 = vector.broadcast %cst_20 : f32 to vector<8x8xf32>
    %53 = arith.mulf %51, %52 : vector<8x8xf32>
    %54 = vector.broadcast %20 : vector<1x8xf32> to vector<8x8xf32>
    %55 = arith.addf %53, %54 : vector<8x8xf32>
    %cst_21 = arith.constant dense<0xFF800000> : vector<8xf32>
    %56 = vector.multi_reduction <maximumf>, %55, %cst_21 [1] : vector<8x8xf32> to vector<8xf32>
    %57 = vector.shape_cast %56 : vector<8xf32> to vector<8x1xf32>
    %58 = vector.broadcast %57 : vector<8x1xf32> to vector<8x8xf32>
    %59 = arith.subf %55, %58 : vector<8x8xf32>
    %60 = math.exp %59 : vector<8x8xf32>
    %cst_22 = arith.constant dense<0.000000e+00> : vector<8xf32>
    %61 = vector.multi_reduction <add>, %60, %cst_22 [1] : vector<8x8xf32> to vector<8xf32>
    %62 = vector.shape_cast %61 : vector<8xf32> to vector<8x1xf32>
    %63 = tpu.reciprocal %62 {approx = true} : vector<8x1xf32> -> vector<8x1xf32>
    %64 = vector.broadcast %63 : vector<8x1xf32> to vector<8x8xf32>
    %65 = arith.mulf %60, %64 : vector<8x8xf32>
    %66 = arith.truncf %65 : vector<8x8xf32> to vector<8x8xbf16>
    %cst_23 = arith.constant dense<0.000000e+00> : vector<8x8xf32>
    %67 = tpu.matmul %66, %50, %cst_23 {dimension_numbers = #tpu.dot_dimension_numbers<[1], [0], [0], [1], [0, 0, 1, 1], [], []>} : vector<8x8xbf16>, vector<8x8xbf16>, vector<8x8xf32> -> vector<8x8xf32>
    %c0_24 = arith.constant 0 : index
    %c8 = arith.constant 8 : index
    %68 = vector.load %arg23[%c0_24, %c8] : memref<16x32xf32, #tpu.memory_space<vmem>>, vector<8x8xf32>
    tpu.vector_store %arg23[%c0_24, %c8], %67 {strides = array<i32>} : memref<16x32xf32, #tpu.memory_space<vmem>>, vector<8x8xf32>,
    %69 = vector.extract_strided_slice %12 {offsets = [0, 16], sizes = [8, 8], strides = [1, 1]} : vector<16x32xf32> to vector<8x8xf32>
    %70 = arith.truncf %69 : vector<8x8xf32> to vector<8x8xbf16>
    %71 = vector.extract_strided_slice %13 {offsets = [0, 16], sizes = [8, 8], strides = [1, 1]} : vector<16x32xf32> to vector<8x8xf32>
    %72 = arith.truncf %71 : vector<8x8xf32> to vector<8x8xbf16>
    %73 = vector.extract_strided_slice %14 {offsets = [0, 16], sizes = [8, 8], strides = [1, 1]} : vector<16x32xf32> to vector<8x8xf32>
    %74 = arith.truncf %73 : vector<8x8xf32> to vector<8x8xbf16>
    %cst_25 = arith.constant dense<0.000000e+00> : vector<8x8xf32>
    %75 = tpu.matmul %70, %72, %cst_25 {dimension_numbers = #tpu.dot_dimension_numbers<[1], [1], [0], [0], [0, 0, 1, 0], [], []>} : vector<8x8xbf16>, vector<8x8xbf16>, vector<8x8xf32> -> vector<8x8xf32>
    %cst_26 = arith.constant 0.353553385 : f32
    %76 = vector.broadcast %cst_26 : f32 to vector<8x8xf32>
    %77 = arith.mulf %75, %76 : vector<8x8xf32>
    %78 = vector.broadcast %20 : vector<1x8xf32> to vector<8x8xf32>
    %79 = arith.addf %77, %78 : vector<8x8xf32>
    %cst_27 = arith.constant dense<0xFF800000> : vector<8xf32>
    %80 = vector.multi_reduction <maximumf>, %79, %cst_27 [1] : vector<8x8xf32> to vector<8xf32>
    %81 = vector.shape_cast %80 : vector<8xf32> to vector<8x1xf32>
    %82 = vector.broadcast %81 : vector<8x1xf32> to vector<8x8xf32>
    %83 = arith.subf %79, %82 : vector<8x8xf32>
    %84 = math.exp %83 : vector<8x8xf32>
    %cst_28 = arith.constant dense<0.000000e+00> : vector<8xf32>
    %85 = vector.multi_reduction <add>, %84, %cst_28 [1] : vector<8x8xf32> to vector<8xf32>
    %86 = vector.shape_cast %85 : vector<8xf32> to vector<8x1xf32>
    %87 = tpu.reciprocal %86 {approx = true} : vector<8x1xf32> -> vector<8x1xf32>
    %88 = vector.broadcast %87 : vector<8x1xf32> to vector<8x8xf32>
    %89 = arith.mulf %84, %88 : vector<8x8xf32>
    %90 = arith.truncf %89 : vector<8x8xf32> to vector<8x8xbf16>
    %cst_29 = arith.constant dense<0.000000e+00> : vector<8x8xf32>
    %91 = tpu.matmul %90, %74, %cst_29 {dimension_numbers = #tpu.dot_dimension_numbers<[1], [0], [0], [1], [0, 0, 1, 1], [], []>} : vector<8x8xbf16>, vector<8x8xbf16>, vector<8x8xf32> -> vector<8x8xf32>
    %c0_30 = arith.constant 0 : index
    %c16 = arith.constant 16 : index
    %92 = vector.load %arg23[%c0_30, %c16] : memref<16x32xf32, #tpu.memory_space<vmem>>, vector<8x8xf32>
    tpu.vector_store %arg23[%c0_30, %c16], %91 {strides = array<i32>} : memref<16x32xf32, #tpu.memory_space<vmem>>, vector<8x8xf32>,
    %93 = vector.extract_strided_slice %12 {offsets = [0, 24], sizes = [8, 8], strides = [1, 1]} : vector<16x32xf32> to vector<8x8xf32>
    %94 = arith.truncf %93 : vector<8x8xf32> to vector<8x8xbf16>
    %95 = vector.extract_strided_slice %13 {offsets = [0, 24], sizes = [8, 8], strides = [1, 1]} : vector<16x32xf32> to vector<8x8xf32>
    %96 = arith.truncf %95 : vector<8x8xf32> to vector<8x8xbf16>
    %97 = vector.extract_strided_slice %14 {offsets = [0, 24], sizes = [8, 8], strides = [1, 1]} : vector<16x32xf32> to vector<8x8xf32>
    %98 = arith.truncf %97 : vector<8x8xf32> to vector<8x8xbf16>
    %cst_31 = arith.constant dense<0.000000e+00> : vector<8x8xf32>
    %99 = tpu.matmul %94, %96, %cst_31 {dimension_numbers = #tpu.dot_dimension_numbers<[1], [1], [0], [0], [0, 0, 1, 0], [], []>} : vector<8x8xbf16>, vector<8x8xbf16>, vector<8x8xf32> -> vector<8x8xf32>
    %cst_32 = arith.constant 0.353553385 : f32
    %100 = vector.broadcast %cst_32 : f32 to vector<8x8xf32>
    %101 = arith.mulf %99, %100 : vector<8x8xf32>
    %102 = vector.broadcast %20 : vector<1x8xf32> to vector<8x8xf32>
    %103 = arith.addf %101, %102 : vector<8x8xf32>
    %cst_33 = arith.constant dense<0xFF800000> : vector<8xf32>
    %104 = vector.multi_reduction <maximumf>, %103, %cst_33 [1] : vector<8x8xf32> to vector<8xf32>
    %105 = vector.shape_cast %104 : vector<8xf32> to vector<8x1xf32>
    %106 = vector.broadcast %105 : vector<8x1xf32> to vector<8x8xf32>
    %107 = arith.subf %103, %106 : vector<8x8xf32>
    %108 = math.exp %107 : vector<8x8xf32>
    %cst_34 = arith.constant dense<0.000000e+00> : vector<8xf32>
    %109 = vector.multi_reduction <add>, %108, %cst_34 [1] : vector<8x8xf32> to vector<8xf32>
    %110 = vector.shape_cast %109 : vector<8xf32> to vector<8x1xf32>
    %111 = tpu.reciprocal %110 {approx = true} : vector<8x1xf32> -> vector<8x1xf32>
    %112 = vector.broadcast %111 : vector<8x1xf32> to vector<8x8xf32>
    %113 = arith.mulf %108, %112 : vector<8x8xf32>
    %114 = arith.truncf %113 : vector<8x8xf32> to vector<8x8xbf16>
    %cst_35 = arith.constant dense<0.000000e+00> : vector<8x8xf32>
    %115 = tpu.matmul %114, %98, %cst_35 {dimension_numbers = #tpu.dot_dimension_numbers<[1], [0], [0], [1], [0, 0, 1, 1], [], []>} : vector<8x8xbf16>, vector<8x8xbf16>, vector<8x8xf32> -> vector<8x8xf32>
    %c0_36 = arith.constant 0 : index
    %c24 = arith.constant 24 : index
    %116 = vector.load %arg23[%c0_36, %c24] : memref<16x32xf32, #tpu.memory_space<vmem>>, vector<8x8xf32>
    tpu.vector_store %arg23[%c0_36, %c24], %115 {strides = array<i32>} : memref<16x32xf32, #tpu.memory_space<vmem>>, vector<8x8xf32>,
    %117 = vector.extract_strided_slice %19 {offsets = [1, 0], sizes = [1, 8], strides = [1, 1]} : vector<2x8xf32> to vector<1x8xf32>
    %118 = vector.extract_strided_slice %12 {offsets = [8, 0], sizes = [8, 8], strides = [1, 1]} : vector<16x32xf32> to vector<8x8xf32>
    %119 = arith.truncf %118 : vector<8x8xf32> to vector<8x8xbf16>
    %120 = vector.extract_strided_slice %13 {offsets = [8, 0], sizes = [8, 8], strides = [1, 1]} : vector<16x32xf32> to vector<8x8xf32>
    %121 = arith.truncf %120 : vector<8x8xf32> to vector<8x8xbf16>
    %122 = vector.extract_strided_slice %14 {offsets = [8, 0], sizes = [8, 8], strides = [1, 1]} : vector<16x32xf32> to vector<8x8xf32>
    %123 = arith.truncf %122 : vector<8x8xf32> to vector<8x8xbf16>
    %cst_37 = arith.constant dense<0.000000e+00> : vector<8x8xf32>
    %124 = tpu.matmul %119, %121, %cst_37 {dimension_numbers = #tpu.dot_dimension_numbers<[1], [1], [0], [0], [0, 0, 1, 0], [], []>} : vector<8x8xbf16>, vector<8x8xbf16>, vector<8x8xf32> -> vector<8x8xf32>
    %cst_38 = arith.constant 0.353553385 : f32
    %125 = vector.broadcast %cst_38 : f32 to vector<8x8xf32>
    %126 = arith.mulf %124, %125 : vector<8x8xf32>
    %127 = vector.broadcast %117 : vector<1x8xf32> to vector<8x8xf32>
    %128 = arith.addf %126, %127 : vector<8x8xf32>
    %cst_39 = arith.constant dense<0xFF800000> : vector<8xf32>
    %129 = vector.multi_reduction <maximumf>, %128, %cst_39 [1] : vector<8x8xf32> to vector<8xf32>
    %130 = vector.shape_cast %129 : vector<8xf32> to vector<8x1xf32>
    %131 = vector.broadcast %130 : vector<8x1xf32> to vector<8x8xf32>
    %132 = arith.subf %128, %131 : vector<8x8xf32>
    %133 = math.exp %132 : vector<8x8xf32>
    %cst_40 = arith.constant dense<0.000000e+00> : vector<8xf32>
    %134 = vector.multi_reduction <add>, %133, %cst_40 [1] : vector<8x8xf32> to vector<8xf32>
    %135 = vector.shape_cast %134 : vector<8xf32> to vector<8x1xf32>
    %136 = tpu.reciprocal %135 {approx = true} : vector<8x1xf32> -> vector<8x1xf32>
    %137 = vector.broadcast %136 : vector<8x1xf32> to vector<8x8xf32>
    %138 = arith.mulf %133, %137 : vector<8x8xf32>
    %139 = arith.truncf %138 : vector<8x8xf32> to vector<8x8xbf16>
    %cst_41 = arith.constant dense<0.000000e+00> : vector<8x8xf32>
    %140 = tpu.matmul %139, %123, %cst_41 {dimension_numbers = #tpu.dot_dimension_numbers<[1], [0], [0], [1], [0, 0, 1, 1], [], []>} : vector<8x8xbf16>, vector<8x8xbf16>, vector<8x8xf32> -> vector<8x8xf32>
    %c8_42 = arith.constant 8 : index
    %c0_43 = arith.constant 0 : index
    %141 = vector.load %arg23[%c8_42, %c0_43] : memref<16x32xf32, #tpu.memory_space<vmem>>, vector<8x8xf32>
    tpu.vector_store %arg23[%c8_42, %c0_43], %140 {strides = array<i32>} : memref<16x32xf32, #tpu.memory_space<vmem>>, vector<8x8xf32>,
    %142 = vector.extract_strided_slice %12 {offsets = [8, 8], sizes = [8, 8], strides = [1, 1]} : vector<16x32xf32> to vector<8x8xf32>
    %143 = arith.truncf %142 : vector<8x8xf32> to vector<8x8xbf16>
    %144 = vector.extract_strided_slice %13 {offsets = [8, 8], sizes = [8, 8], strides = [1, 1]} : vector<16x32xf32> to vector<8x8xf32>
    %145 = arith.truncf %144 : vector<8x8xf32> to vector<8x8xbf16>
    %146 = vector.extract_strided_slice %14 {offsets = [8, 8], sizes = [8, 8], strides = [1, 1]} : vector<16x32xf32> to vector<8x8xf32>
    %147 = arith.truncf %146 : vector<8x8xf32> to vector<8x8xbf16>
    %cst_44 = arith.constant dense<0.000000e+00> : vector<8x8xf32>
    %148 = tpu.matmul %143, %145, %cst_44 {dimension_numbers = #tpu.dot_dimension_numbers<[1], [1], [0], [0], [0, 0, 1, 0], [], []>} : vector<8x8xbf16>, vector<8x8xbf16>, vector<8x8xf32> -> vector<8x8xf32>
    %cst_45 = arith.constant 0.353553385 : f32
    %149 = vector.broadcast %cst_45 : f32 to vector<8x8xf32>
    %150 = arith.mulf %148, %149 : vector<8x8xf32>
    %151 = vector.broadcast %117 : vector<1x8xf32> to vector<8x8xf32>
    %152 = arith.addf %150, %151 : vector<8x8xf32>
    %cst_46 = arith.constant dense<0xFF800000> : vector<8xf32>
    %153 = vector.multi_reduction <maximumf>, %152, %cst_46 [1] : vector<8x8xf32> to vector<8xf32>
    %154 = vector.shape_cast %153 : vector<8xf32> to vector<8x1xf32>
    %155 = vector.broadcast %154 : vector<8x1xf32> to vector<8x8xf32>
    %156 = arith.subf %152, %155 : vector<8x8xf32>
    %157 = math.exp %156 : vector<8x8xf32>
    %cst_47 = arith.constant dense<0.000000e+00> : vector<8xf32>
    %158 = vector.multi_reduction <add>, %157, %cst_47 [1] : vector<8x8xf32> to vector<8xf32>
    %159 = vector.shape_cast %158 : vector<8xf32> to vector<8x1xf32>
    %160 = tpu.reciprocal %159 {approx = true} : vector<8x1xf32> -> vector<8x1xf32>
    %161 = vector.broadcast %160 : vector<8x1xf32> to vector<8x8xf32>
    %162 = arith.mulf %157, %161 : vector<8x8xf32>
    %163 = arith.truncf %162 : vector<8x8xf32> to vector<8x8xbf16>
    %cst_48 = arith.constant dense<0.000000e+00> : vector<8x8xf32>
    %164 = tpu.matmul %163, %147, %cst_48 {dimension_numbers = #tpu.dot_dimension_numbers<[1], [0], [0], [1], [0, 0, 1, 1], [], []>} : vector<8x8xbf16>, vector<8x8xbf16>, vector<8x8xf32> -> vector<8x8xf32>
    %c8_49 = arith.constant 8 : index
    %c8_50 = arith.constant 8 : index
    %165 = vector.load %arg23[%c8_49, %c8_50] : memref<16x32xf32, #tpu.memory_space<vmem>>, vector<8x8xf32>
    tpu.vector_store %arg23[%c8_49, %c8_50], %164 {strides = array<i32>} : memref<16x32xf32, #tpu.memory_space<vmem>>, vector<8x8xf32>,
    %166 = vector.extract_strided_slice %12 {offsets = [8, 16], sizes = [8, 8], strides = [1, 1]} : vector<16x32xf32> to vector<8x8xf32>
    %167 = arith.truncf %166 : vector<8x8xf32> to vector<8x8xbf16>
    %168 = vector.extract_strided_slice %13 {offsets = [8, 16], sizes = [8, 8], strides = [1, 1]} : vector<16x32xf32> to vector<8x8xf32>
    %169 = arith.truncf %168 : vector<8x8xf32> to vector<8x8xbf16>
    %170 = vector.extract_strided_slice %14 {offsets = [8, 16], sizes = [8, 8], strides = [1, 1]} : vector<16x32xf32> to vector<8x8xf32>
    %171 = arith.truncf %170 : vector<8x8xf32> to vector<8x8xbf16>
    %cst_51 = arith.constant dense<0.000000e+00> : vector<8x8xf32>
    %172 = tpu.matmul %167, %169, %cst_51 {dimension_numbers = #tpu.dot_dimension_numbers<[1], [1], [0], [0], [0, 0, 1, 0], [], []>} : vector<8x8xbf16>, vector<8x8xbf16>, vector<8x8xf32> -> vector<8x8xf32>
    %cst_52 = arith.constant 0.353553385 : f32
    %173 = vector.broadcast %cst_52 : f32 to vector<8x8xf32>
    %174 = arith.mulf %172, %173 : vector<8x8xf32>
    %175 = vector.broadcast %117 : vector<1x8xf32> to vector<8x8xf32>
    %176 = arith.addf %174, %175 : vector<8x8xf32>
    %cst_53 = arith.constant dense<0xFF800000> : vector<8xf32>
    %177 = vector.multi_reduction <maximumf>, %176, %cst_53 [1] : vector<8x8xf32> to vector<8xf32>
    %178 = vector.shape_cast %177 : vector<8xf32> to vector<8x1xf32>
    %179 = vector.broadcast %178 : vector<8x1xf32> to vector<8x8xf32>
    %180 = arith.subf %176, %179 : vector<8x8xf32>
    %181 = math.exp %180 : vector<8x8xf32>
    %cst_54 = arith.constant dense<0.000000e+00> : vector<8xf32>
    %182 = vector.multi_reduction <add>, %181, %cst_54 [1] : vector<8x8xf32> to vector<8xf32>
    %183 = vector.shape_cast %182 : vector<8xf32> to vector<8x1xf32>
    %184 = tpu.reciprocal %183 {approx = true} : vector<8x1xf32> -> vector<8x1xf32>
    %185 = vector.broadcast %184 : vector<8x1xf32> to vector<8x8xf32>
    %186 = arith.mulf %181, %185 : vector<8x8xf32>
    %187 = arith.truncf %186 : vector<8x8xf32> to vector<8x8xbf16>
    %cst_55 = arith.constant dense<0.000000e+00> : vector<8x8xf32>
    %188 = tpu.matmul %187, %171, %cst_55 {dimension_numbers = #tpu.dot_dimension_numbers<[1], [0], [0], [1], [0, 0, 1, 1], [], []>} : vector<8x8xbf16>, vector<8x8xbf16>, vector<8x8xf32> -> vector<8x8xf32>
    %c8_56 = arith.constant 8 : index
    %c16_57 = arith.constant 16 : index
    %189 = vector.load %arg23[%c8_56, %c16_57] : memref<16x32xf32, #tpu.memory_space<vmem>>, vector<8x8xf32>
    tpu.vector_store %arg23[%c8_56, %c16_57], %188 {strides = array<i32>} : memref<16x32xf32, #tpu.memory_space<vmem>>, vector<8x8xf32>,
    %190 = vector.extract_strided_slice %12 {offsets = [8, 24], sizes = [8, 8], strides = [1, 1]} : vector<16x32xf32> to vector<8x8xf32>
    %191 = arith.truncf %190 : vector<8x8xf32> to vector<8x8xbf16>
    %192 = vector.extract_strided_slice %13 {offsets = [8, 24], sizes = [8, 8], strides = [1, 1]} : vector<16x32xf32> to vector<8x8xf32>
    %193 = arith.truncf %192 : vector<8x8xf32> to vector<8x8xbf16>
    %194 = vector.extract_strided_slice %14 {offsets = [8, 24], sizes = [8, 8], strides = [1, 1]} : vector<16x32xf32> to vector<8x8xf32>
    %195 = arith.truncf %194 : vector<8x8xf32> to vector<8x8xbf16>
    %cst_58 = arith.constant dense<0.000000e+00> : vector<8x8xf32>
    %196 = tpu.matmul %191, %193, %cst_58 {dimension_numbers = #tpu.dot_dimension_numbers<[1], [1], [0], [0], [0, 0, 1, 0], [], []>} : vector<8x8xbf16>, vector<8x8xbf16>, vector<8x8xf32> -> vector<8x8xf32>
    %cst_59 = arith.constant 0.353553385 : f32
    %197 = vector.broadcast %cst_59 : f32 to vector<8x8xf32>
    %198 = arith.mulf %196, %197 : vector<8x8xf32>
    %199 = vector.broadcast %117 : vector<1x8xf32> to vector<8x8xf32>
    %200 = arith.addf %198, %199 : vector<8x8xf32>
    %cst_60 = arith.constant dense<0xFF800000> : vector<8xf32>
    %201 = vector.multi_reduction <maximumf>, %200, %cst_60 [1] : vector<8x8xf32> to vector<8xf32>
    %202 = vector.shape_cast %201 : vector<8xf32> to vector<8x1xf32>
    %203 = vector.broadcast %202 : vector<8x1xf32> to vector<8x8xf32>
    %204 = arith.subf %200, %203 : vector<8x8xf32>
    %205 = math.exp %204 : vector<8x8xf32>
    %cst_61 = arith.constant dense<0.000000e+00> : vector<8xf32>
    %206 = vector.multi_reduction <add>, %205, %cst_61 [1] : vector<8x8xf32> to vector<8xf32>
    %207 = vector.shape_cast %206 : vector<8xf32> to vector<8x1xf32>
    %208 = tpu.reciprocal %207 {approx = true} : vector<8x1xf32> -> vector<8x1xf32>
    %209 = vector.broadcast %208 : vector<8x1xf32> to vector<8x8xf32>
    %210 = arith.mulf %205, %209 : vector<8x8xf32>
    %211 = arith.truncf %210 : vector<8x8xf32> to vector<8x8xbf16>
    %cst_62 = arith.constant dense<0.000000e+00> : vector<8x8xf32>
    %212 = tpu.matmul %211, %195, %cst_62 {dimension_numbers = #tpu.dot_dimension_numbers<[1], [0], [0], [1], [0, 0, 1, 1], [], []>} : vector<8x8xbf16>, vector<8x8xbf16>, vector<8x8xf32> -> vector<8x8xf32>
    %c8_63 = arith.constant 8 : index
    %c24_64 = arith.constant 24 : index
    %213 = vector.load %arg23[%c8_63, %c24_64] : memref<16x32xf32, #tpu.memory_space<vmem>>, vector<8x8xf32>
    tpu.vector_store %arg23[%c8_63, %c24_64], %212 {strides = array<i32>} : memref<16x32xf32, #tpu.memory_space<vmem>>, vector<8x8xf32>,
    %c0_65 = arith.constant 0 : index
    %c0_66 = arith.constant 0 : index
    %214 = vector.load %arg23[%c0_65, %c0_66] : memref<16x32xf32, #tpu.memory_space<vmem>>, vector<16x32xf32>
    %c0_67 = arith.constant 0 : index
    %c0_68 = arith.constant 0 : index
    %c0_69 = arith.constant 0 : index
    %215 = vector.load %arg7[%c0_67, %c0_68, %c0_69] : memref<1x32x32xbf16, #tpu.memory_space<vmem>>, vector<1x32x32xbf16>
    %216 = vector.shape_cast %215 : vector<1x32x32xbf16> to vector<32x32xbf16>
    %217 = arith.truncf %214 : vector<16x32xf32> to vector<16x32xbf16>
    %cst_70 = arith.constant dense<0.000000e+00> : vector<16x32xf32>
    %218 = tpu.matmul %217, %216, %cst_70 {dimension_numbers = #tpu.dot_dimension_numbers<[1], [0], [0], [1], [0, 0, 1, 1], [], []>} : vector<16x32xbf16>, vector<32x32xbf16>, vector<16x32xf32> -> vector<16x32xf32>
    %c0_71 = arith.constant 0 : index
    %c0_72 = arith.constant 0 : index
    %c0_73 = arith.constant 0 : index
    %219 = vector.load %arg8[%c0_71, %c0_72, %c0_73] : memref<1x1x32xf32, #tpu.memory_space<vmem>>, vector<1x1x32xf32>
    %220 = vector.shape_cast %219 : vector<1x1x32xf32> to vector<1x32xf32>
    %221 = vector.broadcast %220 : vector<1x32xf32> to vector<16x32xf32>
    %222 = arith.addf %218, %221 : vector<16x32xf32>
    %223 = arith.addf %222, %3 : vector<16x32xf32>
    %c0_74 = arith.constant 0 : index
    %c0_75 = arith.constant 0 : index
    %c0_76 = arith.constant 0 : index
    %224 = vector.load %arg9[%c0_74, %c0_75, %c0_76] : memref<1x1x32xf32, #tpu.memory_space<vmem>>, vector<1x1x32xf32>
    %225 = vector.shape_cast %224 : vector<1x1x32xf32> to vector<1x32xf32>
    %c0_77 = arith.constant 0 : index
    %c0_78 = arith.constant 0 : index
    %c0_79 = arith.constant 0 : index
    %226 = vector.load %arg10[%c0_77, %c0_78, %c0_79] : memref<1x1x32xf32, #tpu.memory_space<vmem>>, vector<1x1x32xf32>
    %227 = vector.shape_cast %226 : vector<1x1x32xf32> to vector<1x32xf32>
    %cst_80 = arith.constant dense<0.000000e+00> : vector<16xf32>
    %228 = vector.multi_reduction <add>, %223, %cst_80 [1] : vector<16x32xf32> to vector<16xf32>
    %229 = vector.shape_cast %228 : vector<16xf32> to vector<16x1xf32>
    %cst_81 = arith.constant 3.200000e+01 : f32
    %230 = vector.broadcast %cst_81 : f32 to vector<16x1xf32>
    %231 = arith.divf %229, %230 : vector<16x1xf32>
    %232 = vector.broadcast %231 : vector<16x1xf32> to vector<16x32xf32>
    %233 = arith.subf %223, %232 : vector<16x32xf32>
    %234 = arith.mulf %233, %233 : vector<16x32xf32>
    %cst_82 = arith.constant dense<0.000000e+00> : vector<16xf32>
    %235 = vector.multi_reduction <add>, %234, %cst_82 [1] : vector<16x32xf32> to vector<16xf32>
    %236 = vector.shape_cast %235 : vector<16xf32> to vector<16x1xf32>
    %cst_83 = arith.constant 3.200000e+01 : f32
    %237 = vector.broadcast %cst_83 : f32 to vector<16x1xf32>
    %238 = arith.divf %236, %237 : vector<16x1xf32>
    %cst_84 = arith.constant 9.99999974E-6 : f32
    %239 = vector.broadcast %cst_84 : f32 to vector<16x1xf32>
    %240 = arith.addf %238, %239 : vector<16x1xf32>
    %241 = math.rsqrt %240 : vector<16x1xf32>
    %242 = vector.broadcast %241 : vector<16x1xf32> to vector<16x32xf32>
    %243 = arith.mulf %233, %242 : vector<16x32xf32>
    %244 = vector.broadcast %225 : vector<1x32xf32> to vector<16x32xf32>
    %245 = arith.mulf %243, %244 : vector<16x32xf32>
    %246 = vector.broadcast %227 : vector<1x32xf32> to vector<16x32xf32>
    %247 = arith.addf %245, %246 : vector<16x32xf32>
    %c0_85 = arith.constant 0 : index
    %c0_86 = arith.constant 0 : index
    %c0_87 = arith.constant 0 : index
    %248 = vector.load %arg11[%c0_85, %c0_86, %c0_87] : memref<1x32x64xbf16, #tpu.memory_space<vmem>>, vector<1x32x64xbf16>
    %249 = vector.shape_cast %248 : vector<1x32x64xbf16> to vector<32x64xbf16>
    %250 = arith.truncf %247 : vector<16x32xf32> to vector<16x32xbf16>
    %cst_88 = arith.constant dense<0.000000e+00> : vector<16x64xf32>
    %251 = tpu.matmul %250, %249, %cst_88 {dimension_numbers = #tpu.dot_dimension_numbers<[1], [0], [0], [1], [0, 0, 1, 1], [], []>} : vector<16x32xbf16>, vector<32x64xbf16>, vector<16x64xf32> -> vector<16x64xf32>
    %c0_89 = arith.constant 0 : index
    %c0_90 = arith.constant 0 : index
    %c0_91 = arith.constant 0 : index
    %252 = vector.load %arg12[%c0_89, %c0_90, %c0_91] : memref<1x1x64xf32, #tpu.memory_space<vmem>>, vector<1x1x64xf32>
    %253 = vector.shape_cast %252 : vector<1x1x64xf32> to vector<1x64xf32>
    %254 = vector.broadcast %253 : vector<1x64xf32> to vector<16x64xf32>
    %255 = arith.addf %251, %254 : vector<16x64xf32>
    %cst_92 = arith.constant 5.000000e-01 : f32
    %256 = vector.broadcast %cst_92 : f32 to vector<16x64xf32>
    %257 = arith.mulf %256, %255 : vector<16x64xf32>
    %cst_93 = arith.constant 4.471500e-02 : f32
    %258 = vector.broadcast %cst_93 : f32 to vector<16x64xf32>
    %259 = arith.mulf %258, %255 : vector<16x64xf32>
    %260 = arith.mulf %259, %255 : vector<16x64xf32>
    %261 = arith.mulf %260, %255 : vector<16x64xf32>
    %262 = arith.addf %255, %261 : vector<16x64xf32>
    %cst_94 = arith.constant 0.797884583 : f32
    %263 = vector.broadcast %cst_94 : f32 to vector<16x64xf32>
    %264 = arith.mulf %263, %262 : vector<16x64xf32>
    %265 = math.tanh %264 : vector<16x64xf32>
    %cst_95 = arith.constant 1.000000e+00 : f32
    %266 = vector.broadcast %cst_95 : f32 to vector<16x64xf32>
    %267 = arith.addf %266, %265 : vector<16x64xf32>
    %268 = arith.mulf %257, %267 : vector<16x64xf32>
    %c0_96 = arith.constant 0 : index
    %c0_97 = arith.constant 0 : index
    %c0_98 = arith.constant 0 : index
    %269 = vector.load %arg13[%c0_96, %c0_97, %c0_98] : memref<1x64x32xbf16, #tpu.memory_space<vmem>>, vector<1x64x32xbf16>
    %270 = vector.shape_cast %269 : vector<1x64x32xbf16> to vector<64x32xbf16>
    %271 = arith.truncf %268 : vector<16x64xf32> to vector<16x64xbf16>
    %cst_99 = arith.constant dense<0.000000e+00> : vector<16x32xf32>
    %272 = tpu.matmul %271, %270, %cst_99 {dimension_numbers = #tpu.dot_dimension_numbers<[1], [0], [0], [1], [0, 0, 1, 1], [], []>} : vector<16x64xbf16>, vector<64x32xbf16>, vector<16x32xf32> -> vector<16x32xf32>
    %c0_100 = arith.constant 0 : index
    %c0_101 = arith.constant 0 : index
    %c0_102 = arith.constant 0 : index
    %273 = vector.load %arg14[%c0_100, %c0_101, %c0_102] : memref<1x1x32xf32, #tpu.memory_space<vmem>>, vector<1x1x32xf32>
    %274 = vector.shape_cast %273 : vector<1x1x32xf32> to vector<1x32xf32>
    %275 = vector.broadcast %274 : vector<1x32xf32> to vector<16x32xf32>
    %276 = arith.addf %272, %275 : vector<16x32xf32>
    %277 = arith.addf %276, %247 : vector<16x32xf32>
    %c0_103 = arith.constant 0 : index
    %c0_104 = arith.constant 0 : index
    %c0_105 = arith.constant 0 : index
    %278 = vector.load %arg15[%c0_103, %c0_104, %c0_105] : memref<1x1x32xf32, #tpu.memory_space<vmem>>, vector<1x1x32xf32>
    %279 = vector.shape_cast %278 : vector<1x1x32xf32> to vector<1x32xf32>
    %c0_106 = arith.constant 0 : index
    %c0_107 = arith.constant 0 : index
    %c0_108 = arith.constant 0 : index
    %280 = vector.load %arg16[%c0_106, %c0_107, %c0_108] : memref<1x1x32xf32, #tpu.memory_space<vmem>>, vector<1x1x32xf32>
    %281 = vector.shape_cast %280 : vector<1x1x32xf32> to vector<1x32xf32>
    %cst_109 = arith.constant dense<0.000000e+00> : vector<16xf32>
    %282 = vector.multi_reduction <add>, %277, %cst_109 [1] : vector<16x32xf32> to vector<16xf32>
    %283 = vector.shape_cast %282 : vector<16xf32> to vector<16x1xf32>
    %cst_110 = arith.constant 3.200000e+01 : f32
    %284 = vector.broadcast %cst_110 : f32 to vector<16x1xf32>
    %285 = arith.divf %283, %284 : vector<16x1xf32>
    %286 = vector.broadcast %285 : vector<16x1xf32> to vector<16x32xf32>
    %287 = arith.subf %277, %286 : vector<16x32xf32>
    %288 = arith.mulf %287, %287 : vector<16x32xf32>
    %cst_111 = arith.constant dense<0.000000e+00> : vector<16xf32>
    %289 = vector.multi_reduction <add>, %288, %cst_111 [1] : vector<16x32xf32> to vector<16xf32>
    %290 = vector.shape_cast %289 : vector<16xf32> to vector<16x1xf32>
    %cst_112 = arith.constant 3.200000e+01 : f32
    %291 = vector.broadcast %cst_112 : f32 to vector<16x1xf32>
    %292 = arith.divf %290, %291 : vector<16x1xf32>
    %cst_113 = arith.constant 9.99999974E-6 : f32
    %293 = vector.broadcast %cst_113 : f32 to vector<16x1xf32>
    %294 = arith.addf %292, %293 : vector<16x1xf32>
    %295 = math.rsqrt %294 : vector<16x1xf32>
    %296 = vector.broadcast %295 : vector<16x1xf32> to vector<16x32xf32>
    %297 = arith.mulf %287, %296 : vector<16x32xf32>
    %298 = vector.broadcast %279 : vector<1x32xf32> to vector<16x32xf32>
    %299 = arith.mulf %297, %298 : vector<16x32xf32>
    %300 = vector.broadcast %281 : vector<1x32xf32> to vector<16x32xf32>
    %301 = arith.addf %299, %300 : vector<16x32xf32>
    %c0_114 = arith.constant 0 : index
    %c0_115 = arith.constant 0 : index
    %302 = vector.load %arg22[%c0_114, %c0_115] : memref<16x32xf32, #tpu.memory_space<vmem>>, vector<16x32xf32>
    tpu.vector_store %arg22[%c0_114, %c0_115], %301 {strides = array<i32>} : memref<16x32xf32, #tpu.memory_space<vmem>>, vector<16x32xf32>,
    %c1_i32 = arith.constant 1 : i32
    %303 = arith.cmpi eq, %arg0, %c1_i32 : i32
    %304 = arith.extui %303 : i1 to i32
    %c0_i32_116 = arith.constant 0 : i32
    %305 = arith.cmpi ne, %304, %c0_i32_116 : i32
    scf.if %305 {
      %306 = vector.extract_strided_slice %301 {offsets = [0, 0], sizes = [1, 32], strides = [1, 1]} : vector<16x32xf32> to vector<1x32xf32>
      %c0_117 = arith.constant 0 : index
      %c0_118 = arith.constant 0 : index
      %307 = vector.load %arg17[%c0_117, %c0_118] : memref<32x32xbf16, #tpu.memory_space<vmem>>, vector<32x32xbf16>
      %308 = arith.truncf %306 : vector<1x32xf32> to vector<1x32xbf16>
      %cst_119 = arith.constant dense<0.000000e+00> : vector<1x32xf32>
      %309 = tpu.matmul %308, %307, %cst_119 {dimension_numbers = #tpu.dot_dimension_numbers<[1], [0], [0], [1], [0, 0, 1, 1], [], []>} : vector<1x32xbf16>, vector<32x32xbf16>, vector<1x32xf32> -> vector<1x32xf32>
      %c0_120 = arith.constant 0 : index
      %c0_121 = arith.constant 0 : index
      %310 = vector.load %arg18[%c0_120, %c0_121] : memref<1x32xf32, #tpu.memory_space<vmem>>, vector<1x32xf32>
      %311 = arith.addf %309, %310 : vector<1x32xf32>
      %312 = math.tanh %311 : vector<1x32xf32>
      %c0_122 = arith.constant 0 : index
      %c0_123 = arith.constant 0 : index
      %313 = vector.load %arg19[%c0_122, %c0_123] : memref<32x128xbf16, #tpu.memory_space<vmem>>, vector<32x128xbf16>
      %314 = arith.truncf %312 : vector<1x32xf32> to vector<1x32xbf16>
      %cst_124 = arith.constant dense<0.000000e+00> : vector<1x128xf32>
      %315 = tpu.matmul %314, %313, %cst_124 {dimension_numbers = #tpu.dot_dimension_numbers<[1], [0], [0], [1], [0, 0, 1, 1], [], []>} : vector<1x32xbf16>, vector<32x128xbf16>, vector<1x128xf32> -> vector<1x128xf32>
      %c0_125 = arith.constant 0 : index
      %c0_126 = arith.constant 0 : index
      %316 = vector.load %arg20[%c0_125, %c0_126] : memref<1x128xf32, #tpu.memory_space<vmem>>, vector<1x128xf32>
      %317 = arith.addf %315, %316 : vector<1x128xf32>
      %c0_127 = arith.constant 0 : index
      %c0_128 = arith.constant 0 : index
      %318 = vector.load %arg21[%c0_127, %c0_128] : memref<2x128xf32, #tpu.memory_space<vmem>>, vector<1x128xf32>
      tpu.vector_store %arg21[%c0_127, %c0_128], %317 {strides = array<i32>} : memref<2x128xf32, #tpu.memory_space<vmem>>, vector<1x128xf32>,
      %319 = vector.extract_strided_slice %301 {offsets = [8, 0], sizes = [1, 32], strides = [1, 1]} : vector<16x32xf32> to vector<1x32xf32>
      %c0_129 = arith.constant 0 : index
      %c0_130 = arith.constant 0 : index
      %320 = vector.load %arg17[%c0_129, %c0_130] : memref<32x32xbf16, #tpu.memory_space<vmem>>, vector<32x32xbf16>
      %321 = arith.truncf %319 : vector<1x32xf32> to vector<1x32xbf16>
      %cst_131 = arith.constant dense<0.000000e+00> : vector<1x32xf32>
      %322 = tpu.matmul %321, %320, %cst_131 {dimension_numbers = #tpu.dot_dimension_numbers<[1], [0], [0], [1], [0, 0, 1, 1], [], []>} : vector<1x32xbf16>, vector<32x32xbf16>, vector<1x32xf32> -> vector<1x32xf32>
      %c0_132 = arith.constant 0 : index
      %c0_133 = arith.constant 0 : index
      %323 = vector.load %arg18[%c0_132, %c0_133] : memref<1x32xf32, #tpu.memory_space<vmem>>, vector<1x32xf32>
      %324 = arith.addf %322, %323 : vector<1x32xf32>
      %325 = math.tanh %324 : vector<1x32xf32>
      %c0_134 = arith.constant 0 : index
      %c0_135 = arith.constant 0 : index
      %326 = vector.load %arg19[%c0_134, %c0_135] : memref<32x128xbf16, #tpu.memory_space<vmem>>, vector<32x128xbf16>
      %327 = arith.truncf %325 : vector<1x32xf32> to vector<1x32xbf16>
      %cst_136 = arith.constant dense<0.000000e+00> : vector<1x128xf32>
      %328 = tpu.matmul %327, %326, %cst_136 {dimension_numbers = #tpu.dot_dimension_numbers<[1], [0], [0], [1], [0, 0, 1, 1], [], []>} : vector<1x32xbf16>, vector<32x128xbf16>, vector<1x128xf32> -> vector<1x128xf32>
      %c0_137 = arith.constant 0 : index
      %c0_138 = arith.constant 0 : index
      %329 = vector.load %arg20[%c0_137, %c0_138] : memref<1x128xf32, #tpu.memory_space<vmem>>, vector<1x128xf32>
      %330 = arith.addf %328, %329 : vector<1x128xf32>
      %c1 = arith.constant 1 : index
      %c0_139 = arith.constant 0 : index
      %331 = vector.load %arg21[%c1, %c0_139] : memref<2x128xf32, #tpu.memory_space<vmem>>, vector<1x128xf32>
      tpu.vector_store %arg21[%c1, %c0_139], %330 {strides = array<i32>} : memref<2x128xf32, #tpu.memory_space<vmem>>, vector<1x128xf32>,
    } else {
    }
    return
  }
  func.func @transform_0(%arg0: i32) -> (i32, i32) {
    %c0_i32 = arith.constant 0 : i32
    %c0_i32_0 = arith.constant 0 : i32
    %c0_i32_1 = arith.constant 0 : i32
    return %c0_i32, %c0_i32_0 : i32, i32
  }
  func.func @transform_1(%arg0: i32) -> (i32, i32) {
    %c0_i32 = arith.constant 0 : i32
    %c0_i32_0 = arith.constant 0 : i32
    %c0_i32_1 = arith.constant 0 : i32
    return %c0_i32, %c0_i32_0 : i32, i32
  }
  func.func @transform_2(%arg0: i32) -> (i32, i32) {
    %c0_i32 = arith.constant 0 : i32
    %c0_i32_0 = arith.constant 0 : i32
    %c0_i32_1 = arith.constant 0 : i32
    return %c0_i32, %c0_i32_0 : i32, i32
  }
  func.func @transform_3(%arg0: i32) -> (i32, i32) {
    %c0_i32 = arith.constant 0 : i32
    %c0_i32_0 = arith.constant 0 : i32
    %c0_i32_1 = arith.constant 0 : i32
    return %c0_i32, %c0_i32_0 : i32, i32
  }
  func.func @transform_4(%arg0: i32) -> (i32, i32, i32) {
    %c0_i32 = arith.constant 0 : i32
    %c0_i32_0 = arith.constant 0 : i32
    %c0_i32_1 = arith.constant 0 : i32
    return %arg0, %c0_i32, %c0_i32_0 : i32, i32, i32
  }
  func.func @transform_5(%arg0: i32) -> (i32, i32, i32) {
    %c0_i32 = arith.constant 0 : i32
    %c0_i32_0 = arith.constant 0 : i32
    %c0_i32_1 = arith.constant 0 : i32
    return %arg0, %c0_i32, %c0_i32_0 : i32, i32, i32
  }
  func.func @transform_6(%arg0: i32) -> (i32, i32, i32) {
    %c0_i32 = arith.constant 0 : i32
    %c0_i32_0 = arith.constant 0 : i32
    %c0_i32_1 = arith.constant 0 : i32
    return %arg0, %c0_i32, %c0_i32_0 : i32, i32, i32
  }
  func.func @transform_7(%arg0: i32) -> (i32, i32, i32) {
    %c0_i32 = arith.constant 0 : i32
    %c0_i32_0 = arith.constant 0 : i32
    %c0_i32_1 = arith.constant 0 : i32
    return %arg0, %c0_i32, %c0_i32_0 : i32, i32, i32
  }
  func.func @transform_8(%arg0: i32) -> (i32, i32, i32) {
    %c0_i32 = arith.constant 0 : i32
    %c0_i32_0 = arith.constant 0 : i32
    %c0_i32_1 = arith.constant 0 : i32
    return %arg0, %c0_i32, %c0_i32_0 : i32, i32, i32
  }
  func.func @transform_9(%arg0: i32) -> (i32, i32, i32) {
    %c0_i32 = arith.constant 0 : i32
    %c0_i32_0 = arith.constant 0 : i32
    %c0_i32_1 = arith.constant 0 : i32
    return %arg0, %c0_i32, %c0_i32_0 : i32, i32, i32
  }
  func.func @transform_10(%arg0: i32) -> (i32, i32, i32) {
    %c0_i32 = arith.constant 0 : i32
    %c0_i32_0 = arith.constant 0 : i32
    %c0_i32_1 = arith.constant 0 : i32
    return %arg0, %c0_i32, %c0_i32_0 : i32, i32, i32
  }
  func.func @transform_11(%arg0: i32) -> (i32, i32, i32) {
    %c0_i32 = arith.constant 0 : i32
    %c0_i32_0 = arith.constant 0 : i32
    %c0_i32_1 = arith.constant 0 : i32
    return %arg0, %c0_i32, %c0_i32_0 : i32, i32, i32
  }
  func.func @transform_12(%arg0: i32) -> (i32, i32, i32) {
    %c0_i32 = arith.constant 0 : i32
    %c0_i32_0 = arith.constant 0 : i32
    %c0_i32_1 = arith.constant 0 : i32
    return %arg0, %c0_i32, %c0_i32_0 : i32, i32, i32
  }
  func.func @transform_13(%arg0: i32) -> (i32, i32, i32) {
    %c0_i32 = arith.constant 0 : i32
    %c0_i32_0 = arith.constant 0 : i32
    %c0_i32_1 = arith.constant 0 : i32
    return %arg0, %c0_i32, %c0_i32_0 : i32, i32, i32
  }
  func.func @transform_14(%arg0: i32) -> (i32, i32, i32) {
    %c0_i32 = arith.constant 0 : i32
    %c0_i32_0 = arith.constant 0 : i32
    %c0_i32_1 = arith.constant 0 : i32
    return %arg0, %c0_i32, %c0_i32_0 : i32, i32, i32
  }
  func.func @transform_15(%arg0: i32) -> (i32, i32, i32) {
    %c0_i32 = arith.constant 0 : i32
    %c0_i32_0 = arith.constant 0 : i32
    %c0_i32_1 = arith.constant 0 : i32
    return %arg0, %c0_i32, %c0_i32_0 : i32, i32, i32
  }
  func.func @transform_16(%arg0: i32) -> (i32, i32) {
    %c0_i32 = arith.constant 0 : i32
    %c0_i32_0 = arith.constant 0 : i32
    %c0_i32_1 = arith.constant 0 : i32
    return %c0_i32, %c0_i32_0 : i32, i32
  }
  func.func @transform_17(%arg0: i32) -> (i32, i32) {
    %c0_i32 = arith.constant 0 : i32
    %c0_i32_0 = arith.constant 0 : i32
    %c0_i32_1 = arith.constant 0 : i32
    return %c0_i32, %c0_i32_0 : i32, i32
  }
  func.func @transform_18(%arg0: i32) -> (i32, i32) {
    %c0_i32 = arith.constant 0 : i32
    %c0_i32_0 = arith.constant 0 : i32
    %c0_i32_1 = arith.constant 0 : i32
    return %c0_i32, %c0_i32_0 : i32, i32
  }
  func.func @transform_19(%arg0: i32) -> (i32, i32) {
    %c0_i32 = arith.constant 0 : i32
    %c0_i32_0 = arith.constant 0 : i32
    %c0_i32_1 = arith.constant 0 : i32
    return %c0_i32, %c0_i32_0 : i32, i32
  }
  func.func @transform_20(%arg0: i32) -> (i32, i32) {
    %c0_i32 = arith.constant 0 : i32
    %c0_i32_0 = arith.constant 0 : i32
    %c0_i32_1 = arith.constant 0 : i32
    return %c0_i32, %c0_i32_0 : i32, i32
  }
}

</mosaic_0001>

<llo_original>
// kernel: my_bertweet_forward.1
$region0: #{my_bertweet_forward.1}
  #allocation0 [shape = 'u32[]', space=smem, size = 0x4, offset = 0x4, fixed_abs, tag = 'smem constant byte address 0x4 - core index']
  #allocation1 [shape = 'u32[144,128]{1,0:T(1,128)}', space=vmem, size = 0x12000, scoped, tag = 'internal scratch']
  #allocation2 [shape = 'f32[16,32]{1,0:T(8,128)}', space=vmem, size = 0x2000, scoped, tag = 'scratch operand']
  #allocation3 [shape = 'f32[16,32]{1,0:T(8,128)}', space=vmem, size = 0x2000, scoped, tag = 'scratch operand']
  %s0 = inlined_call_operand.vmem [shape: f32[2,8], index: 0, kind: input, shape index: {}]
  %s1 = inlined_call_operand.vmem [shape: f32[16,32], index: 1, kind: input, shape index: {}]
  %s2 = inlined_call_operand.vmem [shape: f32[1,32], index: 2, kind: input, shape index: {}]
  %s3 = inlined_call_operand.vmem [shape: f32[1,32], index: 3, kind: input, shape index: {}]
  %s4 = inlined_call_operand.vmem [shape: bf16[2,32,96], index: 4, kind: input, shape index: {}]
  %s5 = inlined_call_operand.vmem [shape: f32[2,1,96], index: 5, kind: input, shape index: {}]
  %s6 = inlined_call_operand.vmem [shape: bf16[2,32,32], index: 6, kind: input, shape index: {}]
  %s7 = inlined_call_operand.vmem [shape: f32[2,1,32], index: 7, kind: input, shape index: {}]
  %s8 = inlined_call_operand.vmem [shape: f32[2,1,32], index: 8, kind: input, shape index: {}]
  %s9 = inlined_call_operand.vmem [shape: f32[2,1,32], index: 9, kind: input, shape index: {}]
  %s10 = inlined_call_operand.vmem [shape: bf16[2,32,64], index: 10, kind: input, shape index: {}]
  %s11 = inlined_call_operand.vmem [shape: f32[2,1,64], index: 11, kind: input, shape index: {}]
  %s12 = inlined_call_operand.vmem [shape: bf16[2,64,32], index: 12, kind: input, shape index: {}]
  %s13 = inlined_call_operand.vmem [shape: f32[2,1,32], index: 13, kind: input, shape index: {}]
  %s14 = inlined_call_operand.vmem [shape: f32[2,1,32], index: 14, kind: input, shape index: {}]
  %s15 = inlined_call_operand.vmem [shape: f32[2,1,32], index: 15, kind: input, shape index: {}]
  %s16 = inlined_call_operand.vmem [shape: bf16[32,32], index: 16, kind: input, shape index: {}]
  %s17 = inlined_call_operand.vmem [shape: f32[1,32], index: 17, kind: input, shape index: {}]
  %s18 = inlined_call_operand.vmem [shape: bf16[32,128], index: 18, kind: input, shape index: {}]
  %s19 = inlined_call_operand.vmem [shape: f32[1,128], index: 19, kind: input, shape index: {}]
  %s20 = inlined_call_operand.hbm [shape: f32[2,128], index: 20, kind: output, shape index: {}]
  %s21 = sld [smem:[#allocation0]]
  $region121: #{my_bertweet_forward.1} parent=0
    _
  %s23 = ssub.s32 1, %s21
  %s24 = scalar_select 0, %s23, %s21
  $region1: #{my_bertweet_forward.1} parent=0
    #allocation4 [shape = 'u8[1024]{0}', space=vmem, size = 0x400, scoped, tag = 'output window, operand 0, single buffered']
    #allocation5 [shape = 's32[2]{0}', space=sflag, size = 0x8, scoped, tag = 'scoped memory for my_bertweet_forward.1']
    %25 = vsyncpa [#allocation5], 0
    loop: start=0, step=1, limit=4
    $region2: #{my_bertweet_forward.1} parent=1 // loop_pre_header
      _
    $region3: #{my_bertweet_forward.1} parent=1 // loop_header
      %s27 = sphi 0, %s31
      %p28 = scmp.ge.s32.totalorder %s27, 4
      %s35 = sphi 0, %s35
      %s37 = sphi 0, %s35
      %s38 = sphi 0, %s37
      %s52 = sphi 0, %s38
      %s56 = sphi 0, %s56
      %s58 = sphi 0, %s56
      %s59 = sphi 0, %s58
      %s73 = sphi 0, %s59
      %s77 = sphi 0, %s77
      %s79 = sphi 0, %s77
      %s80 = sphi 0, %s79
      %s94 = sphi 0, %s80
      %s98 = sphi 0, %s98
      %s100 = sphi 0, %s98
      %s101 = sphi 0, %s100
      %s115 = sphi 0, %s101
      %s121 = sphi 0, %s123
      %s124 = sphi 0, %s121
      %s125 = sphi 0, %s124
      %s141 = sphi 0, %s125
      %s147 = sphi 0, %s149
      %s150 = sphi 0, %s147
      %s151 = sphi 0, %s150
      %s167 = sphi 0, %s151
      %s173 = sphi 0, %s175
      %s176 = sphi 0, %s173
      %s177 = sphi 0, %s176
      %s193 = sphi 0, %s177
      %s199 = sphi 0, %s201
      %s202 = sphi 0, %s199
      %s203 = sphi 0, %s202
      %s219 = sphi 0, %s203
      %s225 = sphi 0, %s227
      %s228 = sphi 0, %s225
      %s229 = sphi 0, %s228
      %s245 = sphi 0, %s229
      %s251 = sphi 0, %s253
      %s254 = sphi 0, %s251
      %s255 = sphi 0, %s254
      %s271 = sphi 0, %s255
      %s277 = sphi 0, %s279
      %s280 = sphi 0, %s277
      %s281 = sphi 0, %s280
      %s297 = sphi 0, %s281
      %s303 = sphi 0, %s305
      %s306 = sphi 0, %s303
      %s307 = sphi 0, %s306
      %s323 = sphi 0, %s307
      %s329 = sphi 0, %s331
      %s332 = sphi 0, %s329
      %s333 = sphi 0, %s332
      %s349 = sphi 0, %s333
      %s355 = sphi 0, %s357
      %s358 = sphi 0, %s355
      %s359 = sphi 0, %s358
      %s375 = sphi 0, %s359
      %s381 = sphi 0, %s383
      %s384 = sphi 0, %s381
      %s385 = sphi 0, %s384
      %s401 = sphi 0, %s385
      %s407 = sphi 0, %s409
      %s410 = sphi 0, %s407
      %s411 = sphi 0, %s410
      %s427 = sphi 0, %s411
      %s431 = sphi 0, %s431
      %s433 = sphi 0, %s431
      %s434 = sphi 0, %s433
      %s448 = sphi 0, %s434
      %s452 = sphi 0, %s452
      %s454 = sphi 0, %s452
      %s455 = sphi 0, %s454
      %s469 = sphi 0, %s455
      %s473 = sphi 0, %s473
      %s475 = sphi 0, %s473
      %s476 = sphi 0, %s475
      %s490 = sphi 0, %s476
      %s494 = sphi 0, %s494
      %s496 = sphi 0, %s494
      %s497 = sphi 0, %s496
      %s511 = sphi 0, %s497
      %s515 = sphi 0, %s515
      %s517 = sphi 0, %s515
      %s518 = sphi 0, %s517
      %s532 = sphi 0, %s518
    $region4: #{my_bertweet_forward.1} parent=1 // loop_header_branch
      %30 = sbr.rel (%p28) target = $region8
    $region5: #{my_bertweet_forward.1} parent=1 // loop_body
      %s32 = ssub.s32 %s27, 1
      %s33 = ssub.s32 %s27, 2
      %s34 = sadd.s32 %s27, 1
      %s36 = sadd.s32 %s35, 1
      %p39 = scmp.eq.s32.totalorder %s27, 1
      %p40 = scmp.ne.s32.totalorder %s35, %s37
      %p41 = scmp.eq.s32.totalorder %s27, 0
      %p42 = por %p40, %p41
      %p43 = scmp.ne.s32.totalorder %s35, %s37
      %p44 = scmp.eq.s32.totalorder %s32, 1
      %p45 = por %p43, %p44
      %p46 = scmp.ne.s32.totalorder %s37, %s38
      %p47 = scmp.eq.s32.totalorder %s32, 0
      %p48 = por %p46, %p47
      %p49 = scmp.ne.s32.totalorder %s37, %s38
      %p50 = scmp.eq.s32.totalorder %s33, 1
      %p51 = por %p49, %p50
      %p53 = scmp.ne.s32.totalorder %s38, %s52
      %p54 = scmp.eq.s32.totalorder %s33, 0
      %p55 = por %p53, %p54
      %s57 = sadd.s32 %s56, 1
      %p60 = scmp.eq.s32.totalorder %s27, 1
      %p61 = scmp.ne.s32.totalorder %s56, %s58
      %p62 = scmp.eq.s32.totalorder %s27, 0
      %p63 = por %p61, %p62
      %p64 = scmp.ne.s32.totalorder %s56, %s58
      %p65 = scmp.eq.s32.totalorder %s32, 1
      %p66 = por %p64, %p65
      %p67 = scmp.ne.s32.totalorder %s58, %s59
      %p68 = scmp.eq.s32.totalorder %s32, 0
      %p69 = por %p67, %p68
      %p70 = scmp.ne.s32.totalorder %s58, %s59
      %p71 = scmp.eq.s32.totalorder %s33, 1
      %p72 = por %p70, %p71
      %p74 = scmp.ne.s32.totalorder %s59, %s73
      %p75 = scmp.eq.s32.totalorder %s33, 0
      %p76 = por %p74, %p75
      %s78 = sadd.s32 %s77, 1
      %p81 = scmp.eq.s32.totalorder %s27, 1
      %p82 = scmp.ne.s32.totalorder %s77, %s79
      %p83 = scmp.eq.s32.totalorder %s27, 0
      %p84 = por %p82, %p83
      %p85 = scmp.ne.s32.totalorder %s77, %s79
      %p86 = scmp.eq.s32.totalorder %s32, 1
      %p87 = por %p85, %p86
      %p88 = scmp.ne.s32.totalorder %s79, %s80
      %p89 = scmp.eq.s32.totalorder %s32, 0
      %p90 = por %p88, %p89
      %p91 = scmp.ne.s32.totalorder %s79, %s80
      %p92 = scmp.eq.s32.totalorder %s33, 1
      %p93 = por %p91, %p92
      %p95 = scmp.ne.s32.totalorder %s80, %s94
      %p96 = scmp.eq.s32.totalorder %s33, 0
      %p97 = por %p95, %p96
      %s99 = sadd.s32 %s98, 1
      %p102 = scmp.eq.s32.totalorder %s27, 1
      %p103 = scmp.ne.s32.totalorder %s98, %s100
      %p104 = scmp.eq.s32.totalorder %s27, 0
      %p105 = por %p103, %p104
      %p106 = scmp.ne.s32.totalorder %s98, %s100
      %p107 = scmp.eq.s32.totalorder %s32, 1
      %p108 = por %p106, %p107
      %p109 = scmp.ne.s32.totalorder %s100, %s101
      %p110 = scmp.eq.s32.totalorder %s32, 0
      %p111 = por %p109, %p110
      %p112 = scmp.ne.s32.totalorder %s100, %s101
      %p113 = scmp.eq.s32.totalorder %s33, 1
      %p114 = por %p112, %p113
      %p116 = scmp.ne.s32.totalorder %s101, %s115
      %p117 = scmp.eq.s32.totalorder %s33, 0
      %p118 = por %p116, %p117
      %s119 = ssub.s32 %s27, %s34
      %p120 = scmp.eq.s32.totalorder %s119, 0
      %s122 = sadd.s32 %s121, 1
      %s123 = scalar_select %p120, %s121, %s122
      %p126 = pneg %p120
      %p127 = scmp.eq.s32.totalorder %s27, 1
      %p128 = por %p126, %p127
      %p129 = scmp.ne.s32.totalorder %s121, %s124
      %p130 = scmp.eq.s32.totalorder %s27, 0
      %p131 = por %p129, %p130
      %p132 = scmp.ne.s32.totalorder %s121, %s124
      %p133 = scmp.eq.s32.totalorder %s32, 1
      %p134 = por %p132, %p133
      %p135 = scmp.ne.s32.totalorder %s124, %s125
      %p136 = scmp.eq.s32.totalorder %s32, 0
      %p137 = por %p135, %p136
      %p138 = scmp.ne.s32.totalorder %s124, %s125
      %p139 = scmp.eq.s32.totalorder %s33, 1
      %p140 = por %p138, %p139
      %p142 = scmp.ne.s32.totalorder %s125, %s141
      %p143 = scmp.eq.s32.totalorder %s33, 0
      %p144 = por %p142, %p143
      %s145 = ssub.s32 %s27, %s34
      %p146 = scmp.eq.s32.totalorder %s145, 0
      %s148 = sadd.s32 %s147, 1
      %s149 = scalar_select %p146, %s147, %s148
      %p152 = pneg %p146
      %p153 = scmp.eq.s32.totalorder %s27, 1
      %p154 = por %p152, %p153
      %p155 = scmp.ne.s32.totalorder %s147, %s150
      %p156 = scmp.eq.s32.totalorder %s27, 0
      %p157 = por %p155, %p156
      %p158 = scmp.ne.s32.totalorder %s147, %s150
      %p159 = scmp.eq.s32.totalorder %s32, 1
      %p160 = por %p158, %p159
      %p161 = scmp.ne.s32.totalorder %s150, %s151
      %p162 = scmp.eq.s32.totalorder %s32, 0
      %p163 = por %p161, %p162
      %p164 = scmp.ne.s32.totalorder %s150, %s151
      %p165 = scmp.eq.s32.totalorder %s33, 1
      %p166 = por %p164, %p165
      %p168 = scmp.ne.s32.totalorder %s151, %s167
      %p169 = scmp.eq.s32.totalorder %s33, 0
      %p170 = por %p168, %p169
      %s171 = ssub.s32 %s27, %s34
      %p172 = scmp.eq.s32.totalorder %s171, 0
      %s174 = sadd.s32 %s173, 1
      %s175 = scalar_select %p172, %s173, %s174
      %p178 = pneg %p172
      %p179 = scmp.eq.s32.totalorder %s27, 1
      %p180 = por %p178, %p179
      %p181 = scmp.ne.s32.totalorder %s173, %s176
      %p182 = scmp.eq.s32.totalorder %s27, 0
      %p183 = por %p181, %p182
      %p184 = scmp.ne.s32.totalorder %s173, %s176
      %p185 = scmp.eq.s32.totalorder %s32, 1
      %p186 = por %p184, %p185
      %p187 = scmp.ne.s32.totalorder %s176, %s177
      %p188 = scmp.eq.s32.totalorder %s32, 0
      %p189 = por %p187, %p188
      %p190 = scmp.ne.s32.totalorder %s176, %s177
      %p191 = scmp.eq.s32.totalorder %s33, 1
      %p192 = por %p190, %p191
      %p194 = scmp.ne.s32.totalorder %s177, %s193
      %p195 = scmp.eq.s32.totalorder %s33, 0
      %p196 = por %p194, %p195
      %s197 = ssub.s32 %s27, %s34
      %p198 = scmp.eq.s32.totalorder %s197, 0
      %s200 = sadd.s32 %s199, 1
      %s201 = scalar_select %p198, %s199, %s200
      %p204 = pneg %p198
      %p205 = scmp.eq.s32.totalorder %s27, 1
      %p206 = por %p204, %p205
      %p207 = scmp.ne.s32.totalorder %s199, %s202
      %p208 = scmp.eq.s32.totalorder %s27, 0
      %p209 = por %p207, %p208
      %p210 = scmp.ne.s32.totalorder %s199, %s202
      %p211 = scmp.eq.s32.totalorder %s32, 1
      %p212 = por %p210, %p211
      %p213 = scmp.ne.s32.totalorder %s202, %s203
      %p214 = scmp.eq.s32.totalorder %s32, 0
      %p215 = por %p213, %p214
      %p216 = scmp.ne.s32.totalorder %s202, %s203
      %p217 = scmp.eq.s32.totalorder %s33, 1
      %p218 = por %p216, %p217
      %p220 = scmp.ne.s32.totalorder %s203, %s219
      %p221 = scmp.eq.s32.totalorder %s33, 0
      %p222 = por %p220, %p221
      %s223 = ssub.s32 %s27, %s34
      %p224 = scmp.eq.s32.totalorder %s223, 0
      %s226 = sadd.s32 %s225, 1
      %s227 = scalar_select %p224, %s225, %s226
      %p230 = pneg %p224
      %p231 = scmp.eq.s32.totalorder %s27, 1
      %p232 = por %p230, %p231
      %p233 = scmp.ne.s32.totalorder %s225, %s228
      %p234 = scmp.eq.s32.totalorder %s27, 0
      %p235 = por %p233, %p234
      %p236 = scmp.ne.s32.totalorder %s225, %s228
      %p237 = scmp.eq.s32.totalorder %s32, 1
      %p238 = por %p236, %p237
      %p239 = scmp.ne.s32.totalorder %s228, %s229
      %p240 = scmp.eq.s32.totalorder %s32, 0
      %p241 = por %p239, %p240
      %p242 = scmp.ne.s32.totalorder %s228, %s229
      %p243 = scmp.eq.s32.totalorder %s33, 1
      %p244 = por %p242, %p243
      %p246 = scmp.ne.s32.totalorder %s229, %s245
      %p247 = scmp.eq.s32.totalorder %s33, 0
      %p248 = por %p246, %p247
      %s249 = ssub.s32 %s27, %s34
      %p250 = scmp.eq.s32.totalorder %s249, 0
      %s252 = sadd.s32 %s251, 1
      %s253 = scalar_select %p250, %s251, %s252
      %p256 = pneg %p250
      %p257 = scmp.eq.s32.totalorder %s27, 1
      %p258 = por %p256, %p257
      %p259 = scmp.ne.s32.totalorder %s251, %s254
      %p260 = scmp.eq.s32.totalorder %s27, 0
      %p261 = por %p259, %p260
      %p262 = scmp.ne.s32.totalorder %s251, %s254
      %p263 = scmp.eq.s32.totalorder %s32, 1
      %p264 = por %p262, %p263
      %p265 = scmp.ne.s32.totalorder %s254, %s255
      %p266 = scmp.eq.s32.totalorder %s32, 0
      %p267 = por %p265, %p266
      %p268 = scmp.ne.s32.totalorder %s254, %s255
      %p269 = scmp.eq.s32.totalorder %s33, 1
      %p270 = por %p268, %p269
      %p272 = scmp.ne.s32.totalorder %s255, %s271
      %p273 = scmp.eq.s32.totalorder %s33, 0
      %p274 = por %p272, %p273
      %s275 = ssub.s32 %s27, %s34
      %p276 = scmp.eq.s32.totalorder %s275, 0
      %s278 = sadd.s32 %s277, 1
      %s279 = scalar_select %p276, %s277, %s278
      %p282 = pneg %p276
      %p283 = scmp.eq.s32.totalorder %s27, 1
      %p284 = por %p282, %p283
      %p285 = scmp.ne.s32.totalorder %s277, %s280
      %p286 = scmp.eq.s32.totalorder %s27, 0
      %p287 = por %p285, %p286
      %p288 = scmp.ne.s32.totalorder %s277, %s280
      %p289 = scmp.eq.s32.totalorder %s32, 1
      %p290 = por %p288, %p289
      %p291 = scmp.ne.s32.totalorder %s280, %s281
      %p292 = scmp.eq.s32.totalorder %s32, 0
      %p293 = por %p291, %p292
      %p294 = scmp.ne.s32.totalorder %s280, %s281
      %p295 = scmp.eq.s32.totalorder %s33, 1
      %p296 = por %p294, %p295
      %p298 = scmp.ne.s32.totalorder %s281, %s297
      %p299 = scmp.eq.s32.totalorder %s33, 0
      %p300 = por %p298, %p299
      %s301 = ssub.s32 %s27, %s34
      %p302 = scmp.eq.s32.totalorder %s301, 0
      %s304 = sadd.s32 %s303, 1
      %s305 = scalar_select %p302, %s303, %s304
      %p308 = pneg %p302
      %p309 = scmp.eq.s32.totalorder %s27, 1
      %p310 = por %p308, %p309
      %p311 = scmp.ne.s32.totalorder %s303, %s306
      %p312 = scmp.eq.s32.totalorder %s27, 0
      %p313 = por %p311, %p312
      %p314 = scmp.ne.s32.totalorder %s303, %s306
      %p315 = scmp.eq.s32.totalorder %s32, 1
      %p316 = por %p314, %p315
      %p317 = scmp.ne.s32.totalorder %s306, %s307
      %p318 = scmp.eq.s32.totalorder %s32, 0
      %p319 = por %p317, %p318
      %p320 = scmp.ne.s32.totalorder %s306, %s307
      %p321 = scmp.eq.s32.totalorder %s33, 1
      %p322 = por %p320, %p321
      %p324 = scmp.ne.s32.totalorder %s307, %s323
      %p325 = scmp.eq.s32.totalorder %s33, 0
      %p326 = por %p324, %p325
      %s327 = ssub.s32 %s27, %s34
      %p328 = scmp.eq.s32.totalorder %s327, 0
      %s330 = sadd.s32 %s329, 1
      %s331 = scalar_select %p328, %s329, %s330
      %p334 = pneg %p328
      %p335 = scmp.eq.s32.totalorder %s27, 1
      %p336 = por %p334, %p335
      %p337 = scmp.ne.s32.totalorder %s329, %s332
      %p338 = scmp.eq.s32.totalorder %s27, 0
      %p339 = por %p337, %p338
      %p340 = scmp.ne.s32.totalorder %s329, %s332
      %p341 = scmp.eq.s32.totalorder %s32, 1
      %p342 = por %p340, %p341
      %p343 = scmp.ne.s32.totalorder %s332, %s333
      %p344 = scmp.eq.s32.totalorder %s32, 0
      %p345 = por %p343, %p344
      %p346 = scmp.ne.s32.totalorder %s332, %s333
      %p347 = scmp.eq.s32.totalorder %s33, 1
      %p348 = por %p346, %p347
      %p350 = scmp.ne.s32.totalorder %s333, %s349
      %p351 = scmp.eq.s32.totalorder %s33, 0
      %p352 = por %p350, %p351
      %s353 = ssub.s32 %s27, %s34
      %p354 = scmp.eq.s32.totalorder %s353, 0
      %s356 = sadd.s32 %s355, 1
      %s357 = scalar_select %p354, %s355, %s356
      %p360 = pneg %p354
      %p361 = scmp.eq.s32.totalorder %s27, 1
      %p362 = por %p360, %p361
      %p363 = scmp.ne.s32.totalorder %s355, %s358
      %p364 = scmp.eq.s32.totalorder %s27, 0
      %p365 = por %p363, %p364
      %p366 = scmp.ne.s32.totalorder %s355, %s358
      %p367 = scmp.eq.s32.totalorder %s32, 1
      %p368 = por %p366, %p367
      %p369 = scmp.ne.s32.totalorder %s358, %s359
      %p370 = scmp.eq.s32.totalorder %s32, 0
      %p371 = por %p369, %p370
      %p372 = scmp.ne.s32.totalorder %s358, %s359
      %p373 = scmp.eq.s32.totalorder %s33, 1
      %p374 = por %p372, %p373
      %p376 = scmp.ne.s32.totalorder %s359, %s375
      %p377 = scmp.eq.s32.totalorder %s33, 0
      %p378 = por %p376, %p377
      %s379 = ssub.s32 %s27, %s34
      %p380 = scmp.eq.s32.totalorder %s379, 0
      %s382 = sadd.s32 %s381, 1
      %s383 = scalar_select %p380, %s381, %s382
      %p386 = pneg %p380
      %p387 = scmp.eq.s32.totalorder %s27, 1
      %p388 = por %p386, %p387
      %p389 = scmp.ne.s32.totalorder %s381, %s384
      %p390 = scmp.eq.s32.totalorder %s27, 0
      %p391 = por %p389, %p390
      %p392 = scmp.ne.s32.totalorder %s381, %s384
      %p393 = scmp.eq.s32.totalorder %s32, 1
      %p394 = por %p392, %p393
      %p395 = scmp.ne.s32.totalorder %s384, %s385
      %p396 = scmp.eq.s32.totalorder %s32, 0
      %p397 = por %p395, %p396
      %p398 = scmp.ne.s32.totalorder %s384, %s385
      %p399 = scmp.eq.s32.totalorder %s33, 1
      %p400 = por %p398, %p399
      %p402 = scmp.ne.s32.totalorder %s385, %s401
      %p403 = scmp.eq.s32.totalorder %s33, 0
      %p404 = por %p402, %p403
      %s405 = ssub.s32 %s27, %s34
      %p406 = scmp.eq.s32.totalorder %s405, 0
      %s408 = sadd.s32 %s407, 1
      %s409 = scalar_select %p406, %s407, %s408
      %p412 = pneg %p406
      %p413 = scmp.eq.s32.totalorder %s27, 1
      %p414 = por %p412, %p413
      %p415 = scmp.ne.s32.totalorder %s407, %s410
      %p416 = scmp.eq.s32.totalorder %s27, 0
      %p417 = por %p415, %p416
      %p418 = scmp.ne.s32.totalorder %s407, %s410
      %p419 = scmp.eq.s32.totalorder %s32, 1
      %p420 = por %p418, %p419
      %p421 = scmp.ne.s32.totalorder %s410, %s411
      %p422 = scmp.eq.s32.totalorder %s32, 0
      %p423 = por %p421, %p422
      %p424 = scmp.ne.s32.totalorder %s410, %s411
      %p425 = scmp.eq.s32.totalorder %s33, 1
      %p426 = por %p424, %p425
      %p428 = scmp.ne.s32.totalorder %s411, %s427
      %p429 = scmp.eq.s32.totalorder %s33, 0
      %p430 = por %p428, %p429
      %s432 = sadd.s32 %s431, 1
      %p435 = scmp.eq.s32.totalorder %s27, 1
      %p436 = scmp.ne.s32.totalorder %s431, %s433
      %p437 = scmp.eq.s32.totalorder %s27, 0
      %p438 = por %p436, %p437
      %p439 = scmp.ne.s32.totalorder %s431, %s433
      %p440 = scmp.eq.s32.totalorder %s32, 1
      %p441 = por %p439, %p440
      %p442 = scmp.ne.s32.totalorder %s433, %s434
      %p443 = scmp.eq.s32.totalorder %s32, 0
      %p444 = por %p442, %p443
      %p445 = scmp.ne.s32.totalorder %s433, %s434
      %p446 = scmp.eq.s32.totalorder %s33, 1
      %p447 = por %p445, %p446
      %p449 = scmp.ne.s32.totalorder %s434, %s448
      %p450 = scmp.eq.s32.totalorder %s33, 0
      %p451 = por %p449, %p450
      %s453 = sadd.s32 %s452, 1
      %p456 = scmp.eq.s32.totalorder %s27, 1
      %p457 = scmp.ne.s32.totalorder %s452, %s454
      %p458 = scmp.eq.s32.totalorder %s27, 0
      %p459 = por %p457, %p458
      %p460 = scmp.ne.s32.totalorder %s452, %s454
      %p461 = scmp.eq.s32.totalorder %s32, 1
      %p462 = por %p460, %p461
      %p463 = scmp.ne.s32.totalorder %s454, %s455
      %p464 = scmp.eq.s32.totalorder %s32, 0
      %p465 = por %p463, %p464
      %p466 = scmp.ne.s32.totalorder %s454, %s455
      %p467 = scmp.eq.s32.totalorder %s33, 1
      %p468 = por %p466, %p467
      %p470 = scmp.ne.s32.totalorder %s455, %s469
      %p471 = scmp.eq.s32.totalorder %s33, 0
      %p472 = por %p470, %p471
      %s474 = sadd.s32 %s473, 1
      %p477 = scmp.eq.s32.totalorder %s27, 1
      %p478 = scmp.ne.s32.totalorder %s473, %s475
      %p479 = scmp.eq.s32.totalorder %s27, 0
      %p480 = por %p478, %p479
      %p481 = scmp.ne.s32.totalorder %s473, %s475
      %p482 = scmp.eq.s32.totalorder %s32, 1
      %p483 = por %p481, %p482
      %p484 = scmp.ne.s32.totalorder %s475, %s476
      %p485 = scmp.eq.s32.totalorder %s32, 0
      %p486 = por %p484, %p485
      %p487 = scmp.ne.s32.totalorder %s475, %s476
      %p488 = scmp.eq.s32.totalorder %s33, 1
      %p489 = por %p487, %p488
      %p491 = scmp.ne.s32.totalorder %s476, %s490
      %p492 = scmp.eq.s32.totalorder %s33, 0
      %p493 = por %p491, %p492
      %s495 = sadd.s32 %s494, 1
      %p498 = scmp.eq.s32.totalorder %s27, 1
      %p499 = scmp.ne.s32.totalorder %s494, %s496
      %p500 = scmp.eq.s32.totalorder %s27, 0
      %p501 = por %p499, %p500
      %p502 = scmp.ne.s32.totalorder %s494, %s496
      %p503 = scmp.eq.s32.totalorder %s32, 1
      %p504 = por %p502, %p503
      %p505 = scmp.ne.s32.totalorder %s496, %s497
      %p506 = scmp.eq.s32.totalorder %s32, 0
      %p507 = por %p505, %p506
      %p508 = scmp.ne.s32.totalorder %s496, %s497
      %p509 = scmp.eq.s32.totalorder %s33, 1
      %p510 = por %p508, %p509
      %p512 = scmp.ne.s32.totalorder %s497, %s511
      %p513 = scmp.eq.s32.totalorder %s33, 0
      %p514 = por %p512, %p513
      %s516 = sadd.s32 %s515, 1
      %p519 = scmp.eq.s32.totalorder %s27, 1
      %p520 = scmp.ne.s32.totalorder %s515, %s517
      %p521 = scmp.eq.s32.totalorder %s27, 0
      %p522 = por %p520, %p521
      %p523 = scmp.ne.s32.totalorder %s515, %s517
      %p524 = scmp.eq.s32.totalorder %s32, 1
      %p525 = por %p523, %p524
      %p526 = scmp.ne.s32.totalorder %s517, %s518
      %p527 = scmp.eq.s32.totalorder %s32, 0
      %p528 = por %p526, %p527
      %p529 = scmp.ne.s32.totalorder %s517, %s518
      %p530 = scmp.eq.s32.totalorder %s33, 1
      %p531 = por %p529, %p530
      %p533 = scmp.ne.s32.totalorder %s518, %s532
      %p534 = scmp.eq.s32.totalorder %s33, 0
      %p535 = por %p533, %p534
      %p536 = scmp.le.s32.totalorder 1, %s27
      %p537 = scmp.lt.s32.totalorder %s27, 3
      %p538 = pnand %p536, %p537
      %p539 = pneg %p538
      // Predicated region
      $region9: #{my_bertweet_forward.1} parent=5 // pred_check
        _
      $region10: #{my_bertweet_forward.1} parent=5 // pred_check_branch
        %541 = sbr.rel (%p538) target = $region12
      $region11: #{my_bertweet_forward.1} parent=5 // pred_region
        %s542 = ssub.s32 %s27, 1
        // Predicated region
        $region13: #{my_bertweet_forward.1} parent=11 // pred_check
          %p543 = pneg %p48
        $region14: #{my_bertweet_forward.1} parent=11 // pred_check_branch
          %545 = sbr.rel (%p543) target = $region16
        $region15: #{my_bertweet_forward.1} parent=11 // pred_region
          _
        $region16: #{my_bertweet_forward.1} parent=11 // pred_fallthru
          _
        // Predicated region
        $region17: #{my_bertweet_forward.1} parent=11 // pred_check
          %p546 = pneg %p69
        $region18: #{my_bertweet_forward.1} parent=11 // pred_check_branch
          %548 = sbr.rel (%p546) target = $region20
        $region19: #{my_bertweet_forward.1} parent=11 // pred_region
          _
        $region20: #{my_bertweet_forward.1} parent=11 // pred_fallthru
          _
        // Predicated region
        $region21: #{my_bertweet_forward.1} parent=11 // pred_check
          %p549 = pneg %p90
        $region22: #{my_bertweet_forward.1} parent=11 // pred_check_branch
          %551 = sbr.rel (%p549) target = $region24
        $region23: #{my_bertweet_forward.1} parent=11 // pred_region
          _
        $region24: #{my_bertweet_forward.1} parent=11 // pred_fallthru
          _
        // Predicated region
        $region25: #{my_bertweet_forward.1} parent=11 // pred_check
          %p552 = pneg %p111
        $region26: #{my_bertweet_forward.1} parent=11 // pred_check_branch
          %554 = sbr.rel (%p552) target = $region28
        $region27: #{my_bertweet_forward.1} parent=11 // pred_region
          _
        $region28: #{my_bertweet_forward.1} parent=11 // pred_fallthru
          _
        // Predicated region
        $region29: #{my_bertweet_forward.1} parent=11 // pred_check
          %p555 = pneg %p444
        $region30: #{my_bertweet_forward.1} parent=11 // pred_check_branch
          %557 = sbr.rel (%p555) target = $region32
        $region31: #{my_bertweet_forward.1} parent=11 // pred_region
          _
        $region32: #{my_bertweet_forward.1} parent=11 // pred_fallthru
          _
        // Predicated region
        $region33: #{my_bertweet_forward.1} parent=11 // pred_check
          %p558 = pneg %p465
        $region34: #{my_bertweet_forward.1} parent=11 // pred_check_branch
          %560 = sbr.rel (%p558) target = $region36
        $region35: #{my_bertweet_forward.1} parent=11 // pred_region
          _
        $region36: #{my_bertweet_forward.1} parent=11 // pred_fallthru
          _
        // Predicated region
        $region37: #{my_bertweet_forward.1} parent=11 // pred_check
          %p561 = pneg %p486
        $region38: #{my_bertweet_forward.1} parent=11 // pred_check_branch
          %563 = sbr.rel (%p561) target = $region40
        $region39: #{my_bertweet_forward.1} parent=11 // pred_region
          _
        $region40: #{my_bertweet_forward.1} parent=11 // pred_fallthru
          _
        // Predicated region
        $region41: #{my_bertweet_forward.1} parent=11 // pred_check
          %p564 = pneg %p507
        $region42: #{my_bertweet_forward.1} parent=11 // pred_check_branch
          %566 = sbr.rel (%p564) target = $region44
        $region43: #{my_bertweet_forward.1} parent=11 // pred_region
          _
        $region44: #{my_bertweet_forward.1} parent=11 // pred_fallthru
          _
      $region12: #{my_bertweet_forward.1} parent=5 // pred_fallthru
        _
      %p567 = scmp.lt.s32.totalorder %s27, 2
      // Predicated region
      $region45: #{my_bertweet_forward.1} parent=5 // pred_check
        %p568 = pneg %p567
      $region46: #{my_bertweet_forward.1} parent=5 // pred_check_branch
        %570 = sbr.rel (%p568) target = $region48
      $region47: #{my_bertweet_forward.1} parent=5 // pred_region
        // Predicated region
        $region49: #{my_bertweet_forward.1} parent=47 // pred_check
          %p571 = pneg %p131
        $region50: #{my_bertweet_forward.1} parent=47 // pred_check_branch
          %573 = sbr.rel (%p571) target = $region52
        $region51: #{my_bertweet_forward.1} parent=47 // pred_region
          %p574 = scmp.lt.s32.totalorder %s27, 1
          %s575 = scalar_select %p574, %s27, 1
          %s576 = smul.addr %s575, 4
          %s577 = smul.addr %s576, 4
          %s578 = scalar_lea.vmem %s4, %s577
        $region52: #{my_bertweet_forward.1} parent=47 // pred_fallthru
          _
        // Predicated region
        $region53: #{my_bertweet_forward.1} parent=47 // pred_check
          %p579 = pneg %p157
        $region54: #{my_bertweet_forward.1} parent=47 // pred_check_branch
          %581 = sbr.rel (%p579) target = $region56
        $region55: #{my_bertweet_forward.1} parent=47 // pred_region
          %p582 = scmp.lt.s32.totalorder %s27, 1
          %s583 = scalar_select %p582, %s27, 1
          %s584 = scalar_lea.vmem %s5, %s583
        $region56: #{my_bertweet_forward.1} parent=47 // pred_fallthru
          _
        // Predicated region
        $region57: #{my_bertweet_forward.1} parent=47 // pred_check
          %p585 = pneg %p183
        $region58: #{my_bertweet_forward.1} parent=47 // pred_check_branch
          %587 = sbr.rel (%p585) target = $region60
        $region59: #{my_bertweet_forward.1} parent=47 // pred_region
          %p588 = scmp.lt.s32.totalorder %s27, 1
          %s589 = scalar_select %p588, %s27, 1
          %s590 = smul.addr %s589, 4
          %s591 = smul.addr %s590, 4
          %s592 = scalar_lea.vmem %s6, %s591
        $region60: #{my_bertweet_forward.1} parent=47 // pred_fallthru
          _
        // Predicated region
        $region61: #{my_bertweet_forward.1} parent=47 // pred_check
          %p593 = pneg %p209
        $region62: #{my_bertweet_forward.1} parent=47 // pred_check_branch
          %595 = sbr.rel (%p593) target = $region64
        $region63: #{my_bertweet_forward.1} parent=47 // pred_region
          %p596 = scmp.lt.s32.totalorder %s27, 1
          %s597 = scalar_select %p596, %s27, 1
          %s598 = scalar_lea.vmem %s7, %s597
        $region64: #{my_bertweet_forward.1} parent=47 // pred_fallthru
          _
        // Predicated region
        $region65: #{my_bertweet_forward.1} parent=47 // pred_check
          %p599 = pneg %p235
        $region66: #{my_bertweet_forward.1} parent=47 // pred_check_branch
          %601 = sbr.rel (%p599) target = $region68
        $region67: #{my_bertweet_forward.1} parent=47 // pred_region
          %p602 = scmp.lt.s32.totalorder %s27, 1
          %s603 = scalar_select %p602, %s27, 1
          %s604 = scalar_lea.vmem %s8, %s603
        $region68: #{my_bertweet_forward.1} parent=47 // pred_fallthru
          _
        // Predicated region
        $region69: #{my_bertweet_forward.1} parent=47 // pred_check
          %p605 = pneg %p261
        $region70: #{my_bertweet_forward.1} parent=47 // pred_check_branch
          %607 = sbr.rel (%p605) target = $region72
        $region71: #{my_bertweet_forward.1} parent=47 // pred_region
          %p608 = scmp.lt.s32.totalorder %s27, 1
          %s609 = scalar_select %p608, %s27, 1
          %s610 = scalar_lea.vmem %s9, %s609
        $region72: #{my_bertweet_forward.1} parent=47 // pred_fallthru
          _
        // Predicated region
        $region73: #{my_bertweet_forward.1} parent=47 // pred_check
          %p611 = pneg %p287
        $region74: #{my_bertweet_forward.1} parent=47 // pred_check_branch
          %613 = sbr.rel (%p611) target = $region76
        $region75: #{my_bertweet_forward.1} parent=47 // pred_region
          %p614 = scmp.lt.s32.totalorder %s27, 1
          %s615 = scalar_select %p614, %s27, 1
          %s616 = smul.addr %s615, 4
          %s617 = smul.addr %s616, 4
          %s618 = scalar_lea.vmem %s10, %s617
        $region76: #{my_bertweet_forward.1} parent=47 // pred_fallthru
          _
        // Predicated region
        $region77: #{my_bertweet_forward.1} parent=47 // pred_check
          %p619 = pneg %p313
        $region78: #{my_bertweet_forward.1} parent=47 // pred_check_branch
          %621 = sbr.rel (%p619) target = $region80
        $region79: #{my_bertweet_forward.1} parent=47 // pred_region
          %p622 = scmp.lt.s32.totalorder %s27, 1
          %s623 = scalar_select %p622, %s27, 1
          %s624 = scalar_lea.vmem %s11, %s623
        $region80: #{my_bertweet_forward.1} parent=47 // pred_fallthru
          _
        // Predicated region
        $region81: #{my_bertweet_forward.1} parent=47 // pred_check
          %p625 = pneg %p339
        $region82: #{my_bertweet_forward.1} parent=47 // pred_check_branch
          %627 = sbr.rel (%p625) target = $region84
        $region83: #{my_bertweet_forward.1} parent=47 // pred_region
          %p628 = scmp.lt.s32.totalorder %s27, 1
          %s629 = scalar_select %p628, %s27, 1
          %s630 = smul.addr %s629, 8
          %s631 = smul.addr %s630, 4
          %s632 = scalar_lea.vmem %s12, %s631
        $region84: #{my_bertweet_forward.1} parent=47 // pred_fallthru
          _
        // Predicated region
        $region85: #{my_bertweet_forward.1} parent=47 // pred_check
          %p633 = pneg %p365
        $region86: #{my_bertweet_forward.1} parent=47 // pred_check_branch
          %635 = sbr.rel (%p633) target = $region88
        $region87: #{my_bertweet_forward.1} parent=47 // pred_region
          %p636 = scmp.lt.s32.totalorder %s27, 1
          %s637 = scalar_select %p636, %s27, 1
          %s638 = scalar_lea.vmem %s13, %s637
        $region88: #{my_bertweet_forward.1} parent=47 // pred_fallthru
          _
        // Predicated region
        $region89: #{my_bertweet_forward.1} parent=47 // pred_check
          %p639 = pneg %p391
        $region90: #{my_bertweet_forward.1} parent=47 // pred_check_branch
          %641 = sbr.rel (%p639) target = $region92
        $region91: #{my_bertweet_forward.1} parent=47 // pred_region
          %p642 = scmp.lt.s32.totalorder %s27, 1
          %s643 = scalar_select %p642, %s27, 1
          %s644 = scalar_lea.vmem %s14, %s643
        $region92: #{my_bertweet_forward.1} parent=47 // pred_fallthru
          _
        // Predicated region
        $region93: #{my_bertweet_forward.1} parent=47 // pred_check
          %p645 = pneg %p417
        $region94: #{my_bertweet_forward.1} parent=47 // pred_check_branch
          %647 = sbr.rel (%p645) target = $region96
        $region95: #{my_bertweet_forward.1} parent=47 // pred_region
          %p648 = scmp.lt.s32.totalorder %s27, 1
          %s649 = scalar_select %p648, %s27, 1
          %s650 = scalar_lea.vmem %s15, %s649
        $region96: #{my_bertweet_forward.1} parent=47 // pred_fallthru
          _
      $region48: #{my_bertweet_forward.1} parent=5 // pred_fallthru
        _
      %p651 = scmp.le.s32.totalorder 1, %s27
      %p652 = scmp.lt.s32.totalorder %s27, 3
      %p653 = pnand %p651, %p652
      %p654 = pneg %p653
      // Predicated region
      $region97: #{my_bertweet_forward.1} parent=5 // pred_check
        _
      $region98: #{my_bertweet_forward.1} parent=5 // pred_check_branch
        %656 = sbr.rel (%p653) target = $region100
      $region99: #{my_bertweet_forward.1} parent=5 // pred_region
        %s657 = ssub.s32 %s27, 1
        %p658 = pneg %p48
        %p659 = pneg %p45
        %p660 = pneg %p69
        %p661 = pneg %p66
        %p662 = pneg %p90
        %p663 = pneg %p87
        %p664 = pneg %p111
        %p665 = pneg %p108
        %p666 = scmp.lt.s32.totalorder %s32, 1
        %s667 = scalar_select %p666, %s32, 1
        %s668 = smul.addr %s667, 4
        %s669 = smul.addr %s668, 4
        %s670 = scalar_lea.vmem %s4, %s669
        %p671 = pneg %p137
        %p672 = pneg %p134
        %p673 = scmp.lt.s32.totalorder %s32, 1
        %s674 = scalar_select %p673, %s32, 1
        %s675 = scalar_lea.vmem %s5, %s674
        %p676 = pneg %p163
        %p677 = pneg %p160
        %p678 = scmp.lt.s32.totalorder %s32, 1
        %s679 = scalar_select %p678, %s32, 1
        %s680 = smul.addr %s679, 4
        %s681 = smul.addr %s680, 4
        %s682 = scalar_lea.vmem %s6, %s681
        %p683 = pneg %p189
        %p684 = pneg %p186
        %p685 = scmp.lt.s32.totalorder %s32, 1
        %s686 = scalar_select %p685, %s32, 1
        %s687 = scalar_lea.vmem %s7, %s686
        %p688 = pneg %p215
        %p689 = pneg %p212
        %p690 = scmp.lt.s32.totalorder %s32, 1
        %s691 = scalar_select %p690, %s32, 1
        %s692 = scalar_lea.vmem %s8, %s691
        %p693 = pneg %p241
        %p694 = pneg %p238
        %p695 = scmp.lt.s32.totalorder %s32, 1
        %s696 = scalar_select %p695, %s32, 1
        %s697 = scalar_lea.vmem %s9, %s696
        %p698 = pneg %p267
        %p699 = pneg %p264
        %p700 = scmp.lt.s32.totalorder %s32, 1
        %s701 = scalar_select %p700, %s32, 1
        %s702 = smul.addr %s701, 4
        %s703 = smul.addr %s702, 4
        %s704 = scalar_lea.vmem %s10, %s703
        %p705 = pneg %p293
        %p706 = pneg %p290
        %p707 = scmp.lt.s32.totalorder %s32, 1
        %s708 = scalar_select %p707, %s32, 1
        %s709 = scalar_lea.vmem %s11, %s708
        %p710 = pneg %p319
        %p711 = pneg %p316
        %p712 = scmp.lt.s32.totalorder %s32, 1
        %s713 = scalar_select %p712, %s32, 1
        %s714 = smul.addr %s713, 8
        %s715 = smul.addr %s714, 4
        %s716 = scalar_lea.vmem %s12, %s715
        %p717 = pneg %p345
        %p718 = pneg %p342
        %p719 = scmp.lt.s32.totalorder %s32, 1
        %s720 = scalar_select %p719, %s32, 1
        %s721 = scalar_lea.vmem %s13, %s720
        %p722 = pneg %p371
        %p723 = pneg %p368
        %p724 = scmp.lt.s32.totalorder %s32, 1
        %s725 = scalar_select %p724, %s32, 1
        %s726 = scalar_lea.vmem %s14, %s725
        %p727 = pneg %p397
        %p728 = pneg %p394
        %p729 = scmp.lt.s32.totalorder %s32, 1
        %s730 = scalar_select %p729, %s32, 1
        %s731 = scalar_lea.vmem %s15, %s730
        %p732 = pneg %p423
        %p733 = pneg %p420
        %p734 = pneg %p444
        %p735 = pneg %p441
        %p736 = pneg %p465
        %p737 = pneg %p462
        %p738 = pneg %p486
        %p739 = pneg %p483
        %p740 = pneg %p507
        %p741 = pneg %p504
        %p742 = pneg %p528
        %p743 = pneg %p525
        %p744 = scmp.lt.s32.totalorder %s32, 1
        %s745 = scalar_select %p744, %s32, 1
        %s746 = smul.addr %s745, 4
        %s747 = smul.addr %s746, 4
        %s748 = scalar_lea.vmem %s4, %s747
        %p749 = scmp.lt.s32.totalorder %s32, 1
        %s750 = scalar_select %p749, %s32, 1
        %s751 = scalar_lea.vmem %s5, %s750
        %p752 = scmp.lt.s32.totalorder %s32, 1
        %s753 = scalar_select %p752, %s32, 1
        %s754 = smul.addr %s753, 4
        %s755 = smul.addr %s754, 4
        %s756 = scalar_lea.vmem %s6, %s755
        %p757 = scmp.lt.s32.totalorder %s32, 1
        %s758 = scalar_select %p757, %s32, 1
        %s759 = scalar_lea.vmem %s7, %s758
        %p760 = scmp.lt.s32.totalorder %s32, 1
        %s761 = scalar_select %p760, %s32, 1
        %s762 = scalar_lea.vmem %s8, %s761
        %p763 = scmp.lt.s32.totalorder %s32, 1
        %s764 = scalar_select %p763, %s32, 1
        %s765 = scalar_lea.vmem %s9, %s764
        %p766 = scmp.lt.s32.totalorder %s32, 1
        %s767 = scalar_select %p766, %s32, 1
        %s768 = smul.addr %s767, 4
        %s769 = smul.addr %s768, 4
        %s770 = scalar_lea.vmem %s10, %s769
        %p771 = scmp.lt.s32.totalorder %s32, 1
        %s772 = scalar_select %p771, %s32, 1
        %s773 = scalar_lea.vmem %s11, %s772
        %p774 = scmp.lt.s32.totalorder %s32, 1
        %s775 = scalar_select %p774, %s32, 1
        %s776 = smul.addr %s775, 8
        %s777 = smul.addr %s776, 4
        %s778 = scalar_lea.vmem %s12, %s777
        %p779 = scmp.lt.s32.totalorder %s32, 1
        %s780 = scalar_select %p779, %s32, 1
        %s781 = scalar_lea.vmem %s13, %s780
        %p782 = scmp.lt.s32.totalorder %s32, 1
        %s783 = scalar_select %p782, %s32, 1
        %s784 = scalar_lea.vmem %s14, %s783
        %p785 = scmp.lt.s32.totalorder %s32, 1
        %s786 = scalar_select %p785, %s32, 1
        %s787 = scalar_lea.vmem %s15, %s786
        %p789 = scmp.eq.s32.totalorder %s32, 0
        // Predicated region
        $region101: #{my_bertweet_forward.1} parent=99 // pred_check
          %p790 = pneg %p789
        $region102: #{my_bertweet_forward.1} parent=99 // pred_check_branch
          %792 = sbr.rel (%p790) target = $region104
        $region103: #{my_bertweet_forward.1} parent=99 // pred_region
          %v793 = vld [vmem:[%s1] sm:$0xff]
          %v794 = vld [vmem:[%s1 + $0x8] sm:$0xff]
          %v795 = vld [vmem:[%s2] sm:$0x1]
          %v796 = vld [vmem:[%s3] sm:$0x1]
          %vm797 = vcmask 261120
          %v798 = vsel %vm797, %v793, 0.0
          %799 = vadd.xlane.f32.xlu0 %v798
          %v800 = vpop.xlane.xlu0 %799
          %v801 = vsel %vm797, %v794, 0.0
          %802 = vadd.xlane.f32.xlu0 %v801
          %v803 = vpop.xlane.xlu0 %802
          %v804 = vrcp.pop 32.0
          %v805 = vmul.f32 %v800, %v804
          %v806 = vmul.f32 %v803, %v804
          %v807 = vsub.f32 %v793, %v805
          %v808 = vsub.f32 %v794, %v806
          %v809 = vmul.f32 %v807, %v807
          %v810 = vmul.f32 %v808, %v808
          %v811 = vsel %vm797, %v809, 0.0
          %812 = vadd.xlane.f32.xlu0 %v811
          %v813 = vpop.xlane.xlu0 %812
          %v814 = vsel %vm797, %v810, 0.0
          %815 = vadd.xlane.f32.xlu0 %v814
          %v816 = vpop.xlane.xlu0 %815
          %v817 = vmul.f32 %v813, %v804
          %v818 = vmul.f32 %v816, %v804
          %v819 = vadd.f32 %v817, 1e-05
          %v820 = vadd.f32 %v818, 1e-05
          %v821 = vrsqrt.pop %v819
          %v822 = vrsqrt.pop %v820
          %v823 = vmul.f32 %v807, %v821
          %v824 = vmul.f32 %v808, %v822
          %v826 = vlaneseq
          %v827 = vshrl.u32 %v826, 7
          %v828 = vsub.s32 0, %v827
          %v829 = vrot.slane %v795, %v828
          %v831 = vmul.f32 %v823, %v829
          %v832 = vmul.f32 %v824, %v829
          %v834 = vlaneseq
          %v835 = vshrl.u32 %v834, 7
          %v836 = vsub.s32 0, %v835
          %v837 = vrot.slane %v796, %v836
          %v839 = vadd.f32 %v831, %v837
          %v840 = vadd.f32 %v832, %v837
          %841 = vst.msk [vmem:[#allocation2] sm:$0xff] %vm797, %v839
          %842 = vst.msk [vmem:[#allocation2 + $0x8] sm:$0xff] %vm797, %v840
        $region104: #{my_bertweet_forward.1} parent=99 // pred_fallthru
          _
        %v843 = vld [vmem:[#allocation2] sm:$0xff]
        %v844 = vld [vmem:[#allocation2 + $0x8] sm:$0xff]
        %v845 = vld [vmem:[%s748] sm:$0xf]
        %v846 = vld [vmem:[%s748 + $0x4] sm:$0xf]
        %v847 = vld [vmem:[%s748 + $0x8] sm:$0xf]
        %v848 = vld [vmem:[%s748 + $0xc] sm:$0xf]
        %v849 = vpack.c.bf16 %v844, %v843
        %v850 = vld [vmem:[%s751] sm:$0x1]
        %v852 = vlaneseq
        %v853 = vshrl.u32 %v852, 7
        %v854 = vsub.s32 0, %v853
        %v855 = vrot.slane %v850, %v854
        %v861 = vunpack.c.l.b16 %v845
        %v862 = vunpack.c.l.b16 %v846
        %v863 = vunpack.c.l.b16 %v847
        %v864 = vunpack.c.l.b16 %v848
        %v865 = vpack.c.b16 %v862, %v861
        %v866 = vpack.c.b16 %v864, %v863
        %vm869 = vcmask 261120
        %v871 = vsel %vm869, %v849, 0
        %873 = vmatprep.subr.bf16.mxu0 0
        %874 = vmatpush1.bf16.msra.mxu0 0
        %875 = vmatprep.subr.bf16.mxu0 0
        %876 = vmatpush1.bf16.msra.mxu0 0
        %877 = vmatprep.subr.bf16.mxu0 0
        %878 = vmatpush1.bf16.msra.mxu0 0
        %879 = vmatprep.subr.bf16.mxu0 0
        %880 = vmatpush1.bf16.msra.mxu0 0
        %881 = vmatprep.subr.bf16.mxu0 0
        %882 = vmatpush1.bf16.msra.mxu0 0
        %883 = vmatprep.subr.bf16.mxu0 0
        %884 = vmatpush1.bf16.msra.mxu0 0
        %885 = vmatprep.subr.bf16.mxu0 0
        %886 = vmatpush1.bf16.msra.mxu0 %v866
        %887 = vmatprep.subr.bf16.mxu0 0
        %888 = vmatpush1.bf16.msra.mxu0 %v865
        %889 = vmatprep.subr.bf16.mxu0 0
        %890 = vmatpush2.bf16.msra.mxu0 0
        %891 = vmatprep.subr.bf16.mxu0 0
        %892 = vmatpush2.bf16.msra.mxu0 0
        %893 = vmatprep.subr.bf16.mxu0 0
        %894 = vmatpush2.bf16.msra.mxu0 0
        %895 = vmatprep.subr.bf16.mxu0 0
        %896 = vmatpush2.bf16.msra.mxu0 0
        %897 = vmatprep.subr.bf16.mxu0 0
        %898 = vmatpush2.bf16.msra.mxu0 0
        %899 = vmatprep.subr.bf16.mxu0 0
        %900 = vmatpush2.bf16.msra.mxu0 0
        %901 = vmatprep.subr.bf16.mxu0 0
        %902 = vmatpush2.bf16.msra.mxu0 0
        %903 = vmatprep.subr.bf16.mxu0 0
        %904 = vmatpush2.bf16.msra.mxu0 0
        %905 = vmatprep.mubr.bf16.mxu0 0
        %906 = vmatmul.mubr.bf16.gmra.mxu0 %v871
        %v907 = vpop.f32.mrf.mxu0
        %v908 = vadd.f32 %v855, %v907
        %v909 = vpop.f32.mrf.mxu0
        %v910 = vpop.f32.mrf.mxu0
        %v911 = vadd.f32 %v855, %v910
        %v912 = vpop.f32.mrf.mxu0
        %913 = vdwg.mxu0
        %v914 = vld [vmem:[%s0] sm:$0x3]
        %v915 = vsub.f32 1.0, %v914
        %v916 = vmul.f32 %v915, -1e+09
        %v917 = vpack.c.bf16 %v908, %v908
        %919 = vrot.lane.b32.xlu0 %v917, 96
        %v920 = vpop.permute.xlu0 %919
        %vm921 = vcmask 64512
        %v923 = vsel %vm921, %v917, 0
        %v926 = vsel %vm921, %v920, 0
        %928 = vmatprep.subr.bf16.mxu0 0
        %929 = vmatpush1.bf16.xpose.msra.mxu0 0
        %930 = vmatprep.subr.bf16.mxu0 0
        %931 = vmatpush1.bf16.xpose.msra.mxu0 0
        %932 = vmatprep.subr.bf16.mxu0 0
        %933 = vmatpush1.bf16.xpose.msra.mxu0 0
        %934 = vmatprep.subr.bf16.mxu0 0
        %935 = vmatpush1.bf16.xpose.msra.mxu0 0
        %936 = vmatprep.subr.bf16.mxu0 0
        %937 = vmatpush1.bf16.xpose.msra.mxu0 0
        %938 = vmatprep.subr.bf16.mxu0 0
        %939 = vmatpush1.bf16.xpose.msra.mxu0 0
        %940 = vmatprep.subr.bf16.mxu0 0
        %941 = vmatpush1.bf16.xpose.msra.mxu0 0
        %942 = vmatprep.subr.bf16.mxu0 0
        %943 = vmatpush1.bf16.xpose.msra.mxu0 %v926
        %944 = vmatprep.subr.bf16.mxu0 0
        %945 = vmatpush2.bf16.xpose.msra.mxu0 0
        %946 = vmatprep.subr.bf16.mxu0 0
        %947 = vmatpush2.bf16.xpose.msra.mxu0 0
        %948 = vmatprep.subr.bf16.mxu0 0
        %949 = vmatpush2.bf16.xpose.msra.mxu0 0
        %950 = vmatprep.subr.bf16.mxu0 0
        %951 = vmatpush2.bf16.xpose.msra.mxu0 0
        %952 = vmatprep.subr.bf16.mxu0 0
        %953 = vmatpush2.bf16.xpose.msra.mxu0 0
        %954 = vmatprep.subr.bf16.mxu0 0
        %955 = vmatpush2.bf16.xpose.msra.mxu0 0
        %956 = vmatprep.subr.bf16.mxu0 0
        %957 = vmatpush2.bf16.xpose.msra.mxu0 0
        %958 = vmatprep.subr.bf16.mxu0 0
        %959 = vmatpush2.bf16.xpose.msra.mxu0 0
        %960 = vmatprep.mubr.bf16.mxu0 0
        %961 = vmatmul.mubr.bf16.gmra.mxu0 %v923
        %v962 = vpop.f32.mrf.mxu0
        %v963 = vadd.f32 0.0, %v962
        %v964 = vpop.f32.mrf.mxu0
        %v965 = vpop.f32.mrf.mxu0
        %v966 = vpop.f32.mrf.mxu0
        %967 = vdwg.mxu0
        %v968 = vmul.f32 %v963, 0.35355338
        %v969 = vlaneseq
        %v970 = vshrl.u32 %v969, 7
        %v971 = vsub.s32 0, %v970
        %v972 = vrot.slane %v916, %v971
        %v973 = vadd.f32 %v968, %v972
        %v974 = vsel %vm921, %v973, -inf
        %975 = vmax.xlane.f32.xlu0 %v974
        %v976 = vpop.xlane.xlu0 %975
        %v977 = vsub.f32 %v973, %v976
        %v978 = vmul.f32 %v977, 1.442695
        %v979 = vpow.pop %v978
        %v980 = vsel %vm921, %v979, 0.0
        %981 = vadd.xlane.f32.xlu0 %v980
        %v982 = vpop.xlane.xlu0 %981
        %v983 = vrcp.pop %v982
        %v984 = vmul.f32 %v979, %v983
        %v985 = vpack.c.bf16 %v984, %v984
        %986 = vrot.lane.b32.xlu0 %v917, 64
        %v987 = vpop.permute.xlu0 %986
        %v989 = vsel %vm921, %v985, 0
        %vm991 = vcmask 1043456
        %v993 = vsel %vm991, %v987, 0
        %995 = vmatprep.subr.bf16.mxu0 0
        %996 = vmatpush1.bf16.msra.mxu0 0
        %997 = vmatprep.subr.bf16.mxu0 0
        %998 = vmatpush1.bf16.msra.mxu0 0
        %999 = vmatprep.subr.bf16.mxu0 0
        %1000 = vmatpush1.bf16.msra.mxu0 0
        %1001 = vmatprep.subr.bf16.mxu0 0
        %1002 = vmatpush1.bf16.msra.mxu0 0
        %1003 = vmatprep.subr.bf16.mxu0 0
        %1004 = vmatpush1.bf16.msra.mxu0 0
        %1005 = vmatprep.subr.bf16.mxu0 0
        %1006 = vmatpush1.bf16.msra.mxu0 0
        %1007 = vmatprep.subr.bf16.mxu0 0
        %1008 = vmatpush1.bf16.msra.mxu0 0
        %1009 = vmatprep.subr.bf16.mxu0 0
        %1010 = vmatpush1.bf16.msra.mxu0 %v993
        %1011 = vmatprep.subr.bf16.mxu0 0
        %1012 = vmatpush2.bf16.msra.mxu0 0
        %1013 = vmatprep.subr.bf16.mxu0 0
        %1014 = vmatpush2.bf16.msra.mxu0 0
        %1015 = vmatprep.subr.bf16.mxu0 0
        %1016 = vmatpush2.bf16.msra.mxu0 0
        %1017 = vmatprep.subr.bf16.mxu0 0
        %1018 = vmatpush2.bf16.msra.mxu0 0
        %1019 = vmatprep.subr.bf16.mxu0 0
        %1020 = vmatpush2.bf16.msra.mxu0 0
        %1021 = vmatprep.subr.bf16.mxu0 0
        %1022 = vmatpush2.bf16.msra.mxu0 0
        %1023 = vmatprep.subr.bf16.mxu0 0
        %1024 = vmatpush2.bf16.msra.mxu0 0
        %1025 = vmatprep.subr.bf16.mxu0 0
        %1026 = vmatpush2.bf16.msra.mxu0 0
        %1027 = vmatprep.mubr.bf16.mxu0 0
        %1028 = vmatmul.mubr.bf16.gmra.mxu0 %v989
        %v1029 = vpop.f32.mrf.mxu0
        %v1030 = vadd.f32 0.0, %v1029
        %v1031 = vpop.f32.mrf.mxu0
        %v1032 = vpop.f32.mrf.mxu0
        %v1033 = vpop.f32.mrf.mxu0
        %1034 = vdwg.mxu0
        %1035 = vst.msk [vmem:[#allocation3] sm:$0xff] %vm921, %v1030
        %1036 = vrot.lane.b32.xlu0 %v917, 120
        %v1037 = vpop.permute.xlu0 %1036
        %1038 = vrot.lane.b32.xlu0 %v917, 88
        %v1039 = vpop.permute.xlu0 %1038
        %v1041 = vsel %vm921, %v1037, 0
        %v1044 = vsel %vm921, %v1039, 0
        %1046 = vmatprep.subr.bf16.mxu0 0
        %1047 = vmatpush1.bf16.xpose.msra.mxu0 0
        %1048 = vmatprep.subr.bf16.mxu0 0
        %1049 = vmatpush1.bf16.xpose.msra.mxu0 0
        %1050 = vmatprep.subr.bf16.mxu0 0
        %1051 = vmatpush1.bf16.xpose.msra.mxu0 0
        %1052 = vmatprep.subr.bf16.mxu0 0
        %1053 = vmatpush1.bf16.xpose.msra.mxu0 0
        %1054 = vmatprep.subr.bf16.mxu0 0
        %1055 = vmatpush1.bf16.xpose.msra.mxu0 0
        %1056 = vmatprep.subr.bf16.mxu0 0
        %1057 = vmatpush1.bf16.xpose.msra.mxu0 0
        %1058 = vmatprep.subr.bf16.mxu0 0
        %1059 = vmatpush1.bf16.xpose.msra.mxu0 0
        %1060 = vmatprep.subr.bf16.mxu0 0
        %1061 = vmatpush1.bf16.xpose.msra.mxu0 %v1044
        %1062 = vmatprep.subr.bf16.mxu0 0
        %1063 = vmatpush2.bf16.xpose.msra.mxu0 0
        %1064 = vmatprep.subr.bf16.mxu0 0
        %1065 = vmatpush2.bf16.xpose.msra.mxu0 0
        %1066 = vmatprep.subr.bf16.mxu0 0
        %1067 = vmatpush2.bf16.xpose.msra.mxu0 0
        %1068 = vmatprep.subr.bf16.mxu0 0
        %1069 = vmatpush2.bf16.xpose.msra.mxu0 0
        %1070 = vmatprep.subr.bf16.mxu0 0
        %1071 = vmatpush2.bf16.xpose.msra.mxu0 0
        %1072 = vmatprep.subr.bf16.mxu0 0
        %1073 = vmatpush2.bf16.xpose.msra.mxu0 0
        %1074 = vmatprep.subr.bf16.mxu0 0
        %1075 = vmatpush2.bf16.xpose.msra.mxu0 0
        %1076 = vmatprep.subr.bf16.mxu0 0
        %1077 = vmatpush2.bf16.xpose.msra.mxu0 0
        %1078 = vmatprep.mubr.bf16.mxu0 0
        %1079 = vmatmul.mubr.bf16.gmra.mxu0 %v1041
        %v1080 = vpop.f32.mrf.mxu0
        %v1081 = vadd.f32 0.0, %v1080
        %v1082 = vpop.f32.mrf.mxu0
        %v1083 = vpop.f32.mrf.mxu0
        %v1084 = vpop.f32.mrf.mxu0
        %1085 = vdwg.mxu0
        %v1086 = vmul.f32 %v1081, 0.35355338
        %v1087 = vadd.f32 %v1086, %v972
        %v1088 = vsel %vm921, %v1087, -inf
        %1089 = vmax.xlane.f32.xlu0 %v1088
        %v1090 = vpop.xlane.xlu0 %1089
        %v1091 = vsub.f32 %v1087, %v1090
        %v1092 = vmul.f32 %v1091, 1.442695
        %v1093 = vpow.pop %v1092
        %v1094 = vsel %vm921, %v1093, 0.0
        %1095 = vadd.xlane.f32.xlu0 %v1094
        %v1096 = vpop.xlane.xlu0 %1095
        %v1097 = vrcp.pop %v1096
        %v1098 = vmul.f32 %v1093, %v1097
        %v1099 = vpack.c.bf16 %v1098, %v1098
        %1100 = vrot.lane.b32.xlu0 %v917, 56
        %v1101 = vpop.permute.xlu0 %1100
        %v1103 = vsel %vm921, %v1099, 0
        %v1106 = vsel %vm991, %v1101, 0
        %1108 = vmatprep.subr.bf16.mxu0 0
        %1109 = vmatpush1.bf16.msra.mxu0 0
        %1110 = vmatprep.subr.bf16.mxu0 0
        %1111 = vmatpush1.bf16.msra.mxu0 0
        %1112 = vmatprep.subr.bf16.mxu0 0
        %1113 = vmatpush1.bf16.msra.mxu0 0
        %1114 = vmatprep.subr.bf16.mxu0 0
        %1115 = vmatpush1.bf16.msra.mxu0 0
        %1116 = vmatprep.subr.bf16.mxu0 0
        %1117 = vmatpush1.bf16.msra.mxu0 0
        %1118 = vmatprep.subr.bf16.mxu0 0
        %1119 = vmatpush1.bf16.msra.mxu0 0
        %1120 = vmatprep.subr.bf16.mxu0 0
        %1121 = vmatpush1.bf16.msra.mxu0 0
        %1122 = vmatprep.subr.bf16.mxu0 0
        %1123 = vmatpush1.bf16.msra.mxu0 %v1106
        %1124 = vmatprep.subr.bf16.mxu0 0
        %1125 = vmatpush2.bf16.msra.mxu0 0
        %1126 = vmatprep.subr.bf16.mxu0 0
        %1127 = vmatpush2.bf16.msra.mxu0 0
        %1128 = vmatprep.subr.bf16.mxu0 0
        %1129 = vmatpush2.bf16.msra.mxu0 0
        %1130 = vmatprep.subr.bf16.mxu0 0
        %1131 = vmatpush2.bf16.msra.mxu0 0
        %1132 = vmatprep.subr.bf16.mxu0 0
        %1133 = vmatpush2.bf16.msra.mxu0 0
        %1134 = vmatprep.subr.bf16.mxu0 0
        %1135 = vmatpush2.bf16.msra.mxu0 0
        %1136 = vmatprep.subr.bf16.mxu0 0
        %1137 = vmatpush2.bf16.msra.mxu0 0
        %1138 = vmatprep.subr.bf16.mxu0 0
        %1139 = vmatpush2.bf16.msra.mxu0 0
        %1140 = vmatprep.mubr.bf16.mxu0 0
        %1141 = vmatmul.mubr.bf16.gmra.mxu0 %v1103
        %v1142 = vpop.f32.mrf.mxu0
        %v1143 = vadd.f32 0.0, %v1142
        %v1144 = vpop.f32.mrf.mxu0
        %v1145 = vpop.f32.mrf.mxu0
        %v1146 = vpop.f32.mrf.mxu0
        %1147 = vdwg.mxu0
        %1149 = vrot.lane.b32.xlu0 %v1143, 8
        %v1150 = vpop.permute.xlu0 %1149
        %vm1152 = vcmask 130112
        %1153 = vst.msk [vmem:[#allocation3] sm:$0xff] %vm1152, %v1150
        %1154 = vrot.lane.b32.xlu0 %v917, 112
        %v1155 = vpop.permute.xlu0 %1154
        %1156 = vrot.lane.b32.xlu0 %v917, 80
        %v1157 = vpop.permute.xlu0 %1156
        %v1159 = vsel %vm921, %v1155, 0
        %v1162 = vsel %vm921, %v1157, 0
        %1164 = vmatprep.subr.bf16.mxu0 0
        %1165 = vmatpush1.bf16.xpose.msra.mxu0 0
        %1166 = vmatprep.subr.bf16.mxu0 0
        %1167 = vmatpush1.bf16.xpose.msra.mxu0 0
        %1168 = vmatprep.subr.bf16.mxu0 0
        %1169 = vmatpush1.bf16.xpose.msra.mxu0 0
        %1170 = vmatprep.subr.bf16.mxu0 0
        %1171 = vmatpush1.bf16.xpose.msra.mxu0 0
        %1172 = vmatprep.subr.bf16.mxu0 0
        %1173 = vmatpush1.bf16.xpose.msra.mxu0 0
        %1174 = vmatprep.subr.bf16.mxu0 0
        %1175 = vmatpush1.bf16.xpose.msra.mxu0 0
        %1176 = vmatprep.subr.bf16.mxu0 0
        %1177 = vmatpush1.bf16.xpose.msra.mxu0 0
        %1178 = vmatprep.subr.bf16.mxu0 0
        %1179 = vmatpush1.bf16.xpose.msra.mxu0 %v1162
        %1180 = vmatprep.subr.bf16.mxu0 0
        %1181 = vmatpush2.bf16.xpose.msra.mxu0 0
        %1182 = vmatprep.subr.bf16.mxu0 0
        %1183 = vmatpush2.bf16.xpose.msra.mxu0 0
        %1184 = vmatprep.subr.bf16.mxu0 0
        %1185 = vmatpush2.bf16.xpose.msra.mxu0 0
        %1186 = vmatprep.subr.bf16.mxu0 0
        %1187 = vmatpush2.bf16.xpose.msra.mxu0 0
        %1188 = vmatprep.subr.bf16.mxu0 0
        %1189 = vmatpush2.bf16.xpose.msra.mxu0 0
        %1190 = vmatprep.subr.bf16.mxu0 0
        %1191 = vmatpush2.bf16.xpose.msra.mxu0 0
        %1192 = vmatprep.subr.bf16.mxu0 0
        %1193 = vmatpush2.bf16.xpose.msra.mxu0 0
        %1194 = vmatprep.subr.bf16.mxu0 0
        %1195 = vmatpush2.bf16.xpose.msra.mxu0 0
        %1196 = vmatprep.mubr.bf16.mxu0 0
        %1197 = vmatmul.mubr.bf16.gmra.mxu0 %v1159
        %v1198 = vpop.f32.mrf.mxu0
        %v1199 = vadd.f32 0.0, %v1198
        %v1200 = vpop.f32.mrf.mxu0
        %v1201 = vpop.f32.mrf.mxu0
        %v1202 = vpop.f32.mrf.mxu0
        %1203 = vdwg.mxu0
        %v1204 = vmul.f32 %v1199, 0.35355338
        %v1205 = vadd.f32 %v1204, %v972
        %v1206 = vsel %vm921, %v1205, -inf
        %1207 = vmax.xlane.f32.xlu0 %v1206
        %v1208 = vpop.xlane.xlu0 %1207
        %v1209 = vsub.f32 %v1205, %v1208
        %v1210 = vmul.f32 %v1209, 1.442695
        %v1211 = vpow.pop %v1210
        %v1212 = vsel %vm921, %v1211, 0.0
        %1213 = vadd.xlane.f32.xlu0 %v1212
        %v1214 = vpop.xlane.xlu0 %1213
        %v1215 = vrcp.pop %v1214
        %v1216 = vmul.f32 %v1211, %v1215
        %v1217 = vpack.c.bf16 %v1216, %v1216
        %1218 = vrot.lane.b32.xlu0 %v917, 48
        %v1219 = vpop.permute.xlu0 %1218
        %v1221 = vsel %vm921, %v1217, 0
        %v1224 = vsel %vm991, %v1219, 0
        %1226 = vmatprep.subr.bf16.mxu0 0
        %1227 = vmatpush1.bf16.msra.mxu0 0
        %1228 = vmatprep.subr.bf16.mxu0 0
        %1229 = vmatpush1.bf16.msra.mxu0 0
        %1230 = vmatprep.subr.bf16.mxu0 0
        %1231 = vmatpush1.bf16.msra.mxu0 0
        %1232 = vmatprep.subr.bf16.mxu0 0
        %1233 = vmatpush1.bf16.msra.mxu0 0
        %1234 = vmatprep.subr.bf16.mxu0 0
        %1235 = vmatpush1.bf16.msra.mxu0 0
        %1236 = vmatprep.subr.bf16.mxu0 0
        %1237 = vmatpush1.bf16.msra.mxu0 0
        %1238 = vmatprep.subr.bf16.mxu0 0
        %1239 = vmatpush1.bf16.msra.mxu0 0
        %1240 = vmatprep.subr.bf16.mxu0 0
        %1241 = vmatpush1.bf16.msra.mxu0 %v1224
        %1242 = vmatprep.subr.bf16.mxu0 0
        %1243 = vmatpush2.bf16.msra.mxu0 0
        %1244 = vmatprep.subr.bf16.mxu0 0
        %1245 = vmatpush2.bf16.msra.mxu0 0
        %1246 = vmatprep.subr.bf16.mxu0 0
        %1247 = vmatpush2.bf16.msra.mxu0 0
        %1248 = vmatprep.subr.bf16.mxu0 0
        %1249 = vmatpush2.bf16.msra.mxu0 0
        %1250 = vmatprep.subr.bf16.mxu0 0
        %1251 = vmatpush2.bf16.msra.mxu0 0
        %1252 = vmatprep.subr.bf16.mxu0 0
        %1253 = vmatpush2.bf16.msra.mxu0 0
        %1254 = vmatprep.subr.bf16.mxu0 0
        %1255 = vmatpush2.bf16.msra.mxu0 0
        %1256 = vmatprep.subr.bf16.mxu0 0
        %1257 = vmatpush2.bf16.msra.mxu0 0
        %1258 = vmatprep.mubr.bf16.mxu0 0
        %1259 = vmatmul.mubr.bf16.gmra.mxu0 %v1221
        %v1260 = vpop.f32.mrf.mxu0
        %v1261 = vadd.f32 0.0, %v1260
        %v1262 = vpop.f32.mrf.mxu0
        %v1263 = vpop.f32.mrf.mxu0
        %v1264 = vpop.f32.mrf.mxu0
        %1265 = vdwg.mxu0
        %1267 = vrot.lane.b32.xlu0 %v1261, 16
        %v1268 = vpop.permute.xlu0 %1267
        %vm1270 = vcmask 195712
        %1271 = vst.msk [vmem:[#allocation3] sm:$0xff] %vm1270, %v1268
        %1272 = vrot.lane.b32.xlu0 %v917, 104
        %v1273 = vpop.permute.xlu0 %1272
        %1274 = vrot.lane.b32.xlu0 %v917, 72
        %v1275 = vpop.permute.xlu0 %1274
        %v1277 = vsel %vm921, %v1273, 0
        %v1280 = vsel %vm921, %v1275, 0
        %1282 = vmatprep.subr.bf16.mxu0 0
        %1283 = vmatpush1.bf16.xpose.msra.mxu0 0
        %1284 = vmatprep.subr.bf16.mxu0 0
        %1285 = vmatpush1.bf16.xpose.msra.mxu0 0
        %1286 = vmatprep.subr.bf16.mxu0 0
        %1287 = vmatpush1.bf16.xpose.msra.mxu0 0
        %1288 = vmatprep.subr.bf16.mxu0 0
        %1289 = vmatpush1.bf16.xpose.msra.mxu0 0
        %1290 = vmatprep.subr.bf16.mxu0 0
        %1291 = vmatpush1.bf16.xpose.msra.mxu0 0
        %1292 = vmatprep.subr.bf16.mxu0 0
        %1293 = vmatpush1.bf16.xpose.msra.mxu0 0
        %1294 = vmatprep.subr.bf16.mxu0 0
        %1295 = vmatpush1.bf16.xpose.msra.mxu0 0
        %1296 = vmatprep.subr.bf16.mxu0 0
        %1297 = vmatpush1.bf16.xpose.msra.mxu0 %v1280
        %1298 = vmatprep.subr.bf16.mxu0 0
        %1299 = vmatpush2.bf16.xpose.msra.mxu0 0
        %1300 = vmatprep.subr.bf16.mxu0 0
        %1301 = vmatpush2.bf16.xpose.msra.mxu0 0
        %1302 = vmatprep.subr.bf16.mxu0 0
        %1303 = vmatpush2.bf16.xpose.msra.mxu0 0
        %1304 = vmatprep.subr.bf16.mxu0 0
        %1305 = vmatpush2.bf16.xpose.msra.mxu0 0
        %1306 = vmatprep.subr.bf16.mxu0 0
        %1307 = vmatpush2.bf16.xpose.msra.mxu0 0
        %1308 = vmatprep.subr.bf16.mxu0 0
        %1309 = vmatpush2.bf16.xpose.msra.mxu0 0
        %1310 = vmatprep.subr.bf16.mxu0 0
        %1311 = vmatpush2.bf16.xpose.msra.mxu0 0
        %1312 = vmatprep.subr.bf16.mxu0 0
        %1313 = vmatpush2.bf16.xpose.msra.mxu0 0
        %1314 = vmatprep.mubr.bf16.mxu0 0
        %1315 = vmatmul.mubr.bf16.gmra.mxu0 %v1277
        %v1316 = vpop.f32.mrf.mxu0
        %v1317 = vadd.f32 0.0, %v1316
        %v1318 = vpop.f32.mrf.mxu0
        %v1319 = vpop.f32.mrf.mxu0
        %v1320 = vpop.f32.mrf.mxu0
        %1321 = vdwg.mxu0
        %v1322 = vmul.f32 %v1317, 0.35355338
        %v1323 = vadd.f32 %v1322, %v972
        %v1324 = vsel %vm921, %v1323, -inf
        %1325 = vmax.xlane.f32.xlu0 %v1324
        %v1326 = vpop.xlane.xlu0 %1325
        %v1327 = vsub.f32 %v1323, %v1326
        %v1328 = vmul.f32 %v1327, 1.442695
        %v1329 = vpow.pop %v1328
        %v1330 = vsel %vm921, %v1329, 0.0
        %1331 = vadd.xlane.f32.xlu0 %v1330
        %v1332 = vpop.xlane.xlu0 %1331
        %v1333 = vrcp.pop %v1332
        %v1334 = vmul.f32 %v1329, %v1333
        %v1335 = vpack.c.bf16 %v1334, %v1334
        %1336 = vrot.lane.b32.xlu0 %v917, 40
        %v1337 = vpop.permute.xlu0 %1336
        %v1339 = vsel %vm921, %v1335, 0
        %v1342 = vsel %vm991, %v1337, 0
        %1344 = vmatprep.subr.bf16.mxu0 0
        %1345 = vmatpush1.bf16.msra.mxu0 0
        %1346 = vmatprep.subr.bf16.mxu0 0
        %1347 = vmatpush1.bf16.msra.mxu0 0
        %1348 = vmatprep.subr.bf16.mxu0 0
        %1349 = vmatpush1.bf16.msra.mxu0 0
        %1350 = vmatprep.subr.bf16.mxu0 0
        %1351 = vmatpush1.bf16.msra.mxu0 0
        %1352 = vmatprep.subr.bf16.mxu0 0
        %1353 = vmatpush1.bf16.msra.mxu0 0
        %1354 = vmatprep.subr.bf16.mxu0 0
        %1355 = vmatpush1.bf16.msra.mxu0 0
        %1356 = vmatprep.subr.bf16.mxu0 0
        %1357 = vmatpush1.bf16.msra.mxu0 0
        %1358 = vmatprep.subr.bf16.mxu0 0
        %1359 = vmatpush1.bf16.msra.mxu0 %v1342
        %1360 = vmatprep.subr.bf16.mxu0 0
        %1361 = vmatpush2.bf16.msra.mxu0 0
        %1362 = vmatprep.subr.bf16.mxu0 0
        %1363 = vmatpush2.bf16.msra.mxu0 0
        %1364 = vmatprep.subr.bf16.mxu0 0
        %1365 = vmatpush2.bf16.msra.mxu0 0
        %1366 = vmatprep.subr.bf16.mxu0 0
        %1367 = vmatpush2.bf16.msra.mxu0 0
        %1368 = vmatprep.subr.bf16.mxu0 0
        %1369 = vmatpush2.bf16.msra.mxu0 0
        %1370 = vmatprep.subr.bf16.mxu0 0
        %1371 = vmatpush2.bf16.msra.mxu0 0
        %1372 = vmatprep.subr.bf16.mxu0 0
        %1373 = vmatpush2.bf16.msra.mxu0 0
        %1374 = vmatprep.subr.bf16.mxu0 0
        %1375 = vmatpush2.bf16.msra.mxu0 0
        %1376 = vmatprep.mubr.bf16.mxu0 0
        %1377 = vmatmul.mubr.bf16.gmra.mxu0 %v1339
        %v1378 = vpop.f32.mrf.mxu0
        %v1379 = vadd.f32 0.0, %v1378
        %v1380 = vpop.f32.mrf.mxu0
        %v1381 = vpop.f32.mrf.mxu0
        %v1382 = vpop.f32.mrf.mxu0
        %1383 = vdwg.mxu0
        %1385 = vrot.lane.b32.xlu0 %v1379, 24
        %v1386 = vpop.permute.xlu0 %1385
        %vm1388 = vcmask 261312
        %1389 = vst.msk [vmem:[#allocation3] sm:$0xff] %vm1388, %v1386
        %v1390 = vpack.c.bf16 %v911, %v911
        %1392 = vrot.lane.b32.xlu0 %v1390, 96
        %v1393 = vpop.permute.xlu0 %1392
        %v1395 = vsel %vm921, %v1390, 0
        %v1398 = vsel %vm921, %v1393, 0
        %1400 = vmatprep.subr.bf16.mxu0 0
        %1401 = vmatpush1.bf16.xpose.msra.mxu0 0
        %1402 = vmatprep.subr.bf16.mxu0 0
        %1403 = vmatpush1.bf16.xpose.msra.mxu0 0
        %1404 = vmatprep.subr.bf16.mxu0 0
        %1405 = vmatpush1.bf16.xpose.msra.mxu0 0
        %1406 = vmatprep.subr.bf16.mxu0 0
        %1407 = vmatpush1.bf16.xpose.msra.mxu0 0
        %1408 = vmatprep.subr.bf16.mxu0 0
        %1409 = vmatpush1.bf16.xpose.msra.mxu0 0
        %1410 = vmatprep.subr.bf16.mxu0 0
        %1411 = vmatpush1.bf16.xpose.msra.mxu0 0
        %1412 = vmatprep.subr.bf16.mxu0 0
        %1413 = vmatpush1.bf16.xpose.msra.mxu0 0
        %1414 = vmatprep.subr.bf16.mxu0 0
        %1415 = vmatpush1.bf16.xpose.msra.mxu0 %v1398
        %1416 = vmatprep.subr.bf16.mxu0 0
        %1417 = vmatpush2.bf16.xpose.msra.mxu0 0
        %1418 = vmatprep.subr.bf16.mxu0 0
        %1419 = vmatpush2.bf16.xpose.msra.mxu0 0
        %1420 = vmatprep.subr.bf16.mxu0 0
        %1421 = vmatpush2.bf16.xpose.msra.mxu0 0
        %1422 = vmatprep.subr.bf16.mxu0 0
        %1423 = vmatpush2.bf16.xpose.msra.mxu0 0
        %1424 = vmatprep.subr.bf16.mxu0 0
        %1425 = vmatpush2.bf16.xpose.msra.mxu0 0
        %1426 = vmatprep.subr.bf16.mxu0 0
        %1427 = vmatpush2.bf16.xpose.msra.mxu0 0
        %1428 = vmatprep.subr.bf16.mxu0 0
        %1429 = vmatpush2.bf16.xpose.msra.mxu0 0
        %1430 = vmatprep.subr.bf16.mxu0 0
        %1431 = vmatpush2.bf16.xpose.msra.mxu0 0
        %1432 = vmatprep.mubr.bf16.mxu0 0
        %1433 = vmatmul.mubr.bf16.gmra.mxu0 %v1395
        %v1434 = vpop.f32.mrf.mxu0
        %v1435 = vadd.f32 0.0, %v1434
        %v1436 = vpop.f32.mrf.mxu0
        %v1437 = vpop.f32.mrf.mxu0
        %v1438 = vpop.f32.mrf.mxu0
        %1439 = vdwg.mxu0
        %v1440 = vmul.f32 %v1435, 0.35355338
        %v1441 = vlaneseq
        %v1442 = vshrl.u32 %v1441, 7
        %v1443 = vsub.s32 1, %v1442
        %v1444 = vrot.slane %v916, %v1443
        %v1445 = vadd.f32 %v1440, %v1444
        %v1446 = vsel %vm921, %v1445, -inf
        %1447 = vmax.xlane.f32.xlu0 %v1446
        %v1448 = vpop.xlane.xlu0 %1447
        %v1449 = vsub.f32 %v1445, %v1448
        %v1450 = vmul.f32 %v1449, 1.442695
        %v1451 = vpow.pop %v1450
        %v1452 = vsel %vm921, %v1451, 0.0
        %1453 = vadd.xlane.f32.xlu0 %v1452
        %v1454 = vpop.xlane.xlu0 %1453
        %v1455 = vrcp.pop %v1454
        %v1456 = vmul.f32 %v1451, %v1455
        %v1457 = vpack.c.bf16 %v1456, %v1456
        %1458 = vrot.lane.b32.xlu0 %v1390, 64
        %v1459 = vpop.permute.xlu0 %1458
        %v1461 = vsel %vm921, %v1457, 0
        %v1464 = vsel %vm991, %v1459, 0
        %1466 = vmatprep.subr.bf16.mxu0 0
        %1467 = vmatpush1.bf16.msra.mxu0 0
        %1468 = vmatprep.subr.bf16.mxu0 0
        %1469 = vmatpush1.bf16.msra.mxu0 0
        %1470 = vmatprep.subr.bf16.mxu0 0
        %1471 = vmatpush1.bf16.msra.mxu0 0
        %1472 = vmatprep.subr.bf16.mxu0 0
        %1473 = vmatpush1.bf16.msra.mxu0 0
        %1474 = vmatprep.subr.bf16.mxu0 0
        %1475 = vmatpush1.bf16.msra.mxu0 0
        %1476 = vmatprep.subr.bf16.mxu0 0
        %1477 = vmatpush1.bf16.msra.mxu0 0
        %1478 = vmatprep.subr.bf16.mxu0 0
        %1479 = vmatpush1.bf16.msra.mxu0 0
        %1480 = vmatprep.subr.bf16.mxu0 0
        %1481 = vmatpush1.bf16.msra.mxu0 %v1464
        %1482 = vmatprep.subr.bf16.mxu0 0
        %1483 = vmatpush2.bf16.msra.mxu0 0
        %1484 = vmatprep.subr.bf16.mxu0 0
        %1485 = vmatpush2.bf16.msra.mxu0 0
        %1486 = vmatprep.subr.bf16.mxu0 0
        %1487 = vmatpush2.bf16.msra.mxu0 0
        %1488 = vmatprep.subr.bf16.mxu0 0
        %1489 = vmatpush2.bf16.msra.mxu0 0
        %1490 = vmatprep.subr.bf16.mxu0 0
        %1491 = vmatpush2.bf16.msra.mxu0 0
        %1492 = vmatprep.subr.bf16.mxu0 0
        %1493 = vmatpush2.bf16.msra.mxu0 0
        %1494 = vmatprep.subr.bf16.mxu0 0
        %1495 = vmatpush2.bf16.msra.mxu0 0
        %1496 = vmatprep.subr.bf16.mxu0 0
        %1497 = vmatpush2.bf16.msra.mxu0 0
        %1498 = vmatprep.mubr.bf16.mxu0 0
        %1499 = vmatmul.mubr.bf16.gmra.mxu0 %v1461
        %v1500 = vpop.f32.mrf.mxu0
        %v1501 = vadd.f32 0.0, %v1500
        %v1502 = vpop.f32.mrf.mxu0
        %v1503 = vpop.f32.mrf.mxu0
        %v1504 = vpop.f32.mrf.mxu0
        %1505 = vdwg.mxu0
        %1506 = vst.msk [vmem:[#allocation3 + $0x8] sm:$0xff] %vm921, %v1501
        %1507 = vrot.lane.b32.xlu0 %v1390, 120
        %v1508 = vpop.permute.xlu0 %1507
        %1509 = vrot.lane.b32.xlu0 %v1390, 88
        %v1510 = vpop.permute.xlu0 %1509
        %v1512 = vsel %vm921, %v1508, 0
        %v1515 = vsel %vm921, %v1510, 0
        %1517 = vmatprep.subr.bf16.mxu0 0
        %1518 = vmatpush1.bf16.xpose.msra.mxu0 0
        %1519 = vmatprep.subr.bf16.mxu0 0
        %1520 = vmatpush1.bf16.xpose.msra.mxu0 0
        %1521 = vmatprep.subr.bf16.mxu0 0
        %1522 = vmatpush1.bf16.xpose.msra.mxu0 0
        %1523 = vmatprep.subr.bf16.mxu0 0
        %1524 = vmatpush1.bf16.xpose.msra.mxu0 0
        %1525 = vmatprep.subr.bf16.mxu0 0
        %1526 = vmatpush1.bf16.xpose.msra.mxu0 0
        %1527 = vmatprep.subr.bf16.mxu0 0
        %1528 = vmatpush1.bf16.xpose.msra.mxu0 0
        %1529 = vmatprep.subr.bf16.mxu0 0
        %1530 = vmatpush1.bf16.xpose.msra.mxu0 0
        %1531 = vmatprep.subr.bf16.mxu0 0
        %1532 = vmatpush1.bf16.xpose.msra.mxu0 %v1515
        %1533 = vmatprep.subr.bf16.mxu0 0
        %1534 = vmatpush2.bf16.xpose.msra.mxu0 0
        %1535 = vmatprep.subr.bf16.mxu0 0
        %1536 = vmatpush2.bf16.xpose.msra.mxu0 0
        %1537 = vmatprep.subr.bf16.mxu0 0
        %1538 = vmatpush2.bf16.xpose.msra.mxu0 0
        %1539 = vmatprep.subr.bf16.mxu0 0
        %1540 = vmatpush2.bf16.xpose.msra.mxu0 0
        %1541 = vmatprep.subr.bf16.mxu0 0
        %1542 = vmatpush2.bf16.xpose.msra.mxu0 0
        %1543 = vmatprep.subr.bf16.mxu0 0
        %1544 = vmatpush2.bf16.xpose.msra.mxu0 0
        %1545 = vmatprep.subr.bf16.mxu0 0
        %1546 = vmatpush2.bf16.xpose.msra.mxu0 0
        %1547 = vmatprep.subr.bf16.mxu0 0
        %1548 = vmatpush2.bf16.xpose.msra.mxu0 0
        %1549 = vmatprep.mubr.bf16.mxu0 0
        %1550 = vmatmul.mubr.bf16.gmra.mxu0 %v1512
        %v1551 = vpop.f32.mrf.mxu0
        %v1552 = vadd.f32 0.0, %v1551
        %v1553 = vpop.f32.mrf.mxu0
        %v1554 = vpop.f32.mrf.mxu0
        %v1555 = vpop.f32.mrf.mxu0
        %1556 = vdwg.mxu0
        %v1557 = vmul.f32 %v1552, 0.35355338
        %v1558 = vadd.f32 %v1557, %v1444
        %v1559 = vsel %vm921, %v1558, -inf
        %1560 = vmax.xlane.f32.xlu0 %v1559
        %v1561 = vpop.xlane.xlu0 %1560
        %v1562 = vsub.f32 %v1558, %v1561
        %v1563 = vmul.f32 %v1562, 1.442695
        %v1564 = vpow.pop %v1563
        %v1565 = vsel %vm921, %v1564, 0.0
        %1566 = vadd.xlane.f32.xlu0 %v1565
        %v1567 = vpop.xlane.xlu0 %1566
        %v1568 = vrcp.pop %v1567
        %v1569 = vmul.f32 %v1564, %v1568
        %v1570 = vpack.c.bf16 %v1569, %v1569
        %1571 = vrot.lane.b32.xlu0 %v1390, 56
        %v1572 = vpop.permute.xlu0 %1571
        %v1574 = vsel %vm921, %v1570, 0
        %v1577 = vsel %vm991, %v1572, 0
        %1579 = vmatprep.subr.bf16.mxu0 0
        %1580 = vmatpush1.bf16.msra.mxu0 0
        %1581 = vmatprep.subr.bf16.mxu0 0
        %1582 = vmatpush1.bf16.msra.mxu0 0
        %1583 = vmatprep.subr.bf16.mxu0 0
        %1584 = vmatpush1.bf16.msra.mxu0 0
        %1585 = vmatprep.subr.bf16.mxu0 0
        %1586 = vmatpush1.bf16.msra.mxu0 0
        %1587 = vmatprep.subr.bf16.mxu0 0
        %1588 = vmatpush1.bf16.msra.mxu0 0
        %1589 = vmatprep.subr.bf16.mxu0 0
        %1590 = vmatpush1.bf16.msra.mxu0 0
        %1591 = vmatprep.subr.bf16.mxu0 0
        %1592 = vmatpush1.bf16.msra.mxu0 0
        %1593 = vmatprep.subr.bf16.mxu0 0
        %1594 = vmatpush1.bf16.msra.mxu0 %v1577
        %1595 = vmatprep.subr.bf16.mxu0 0
        %1596 = vmatpush2.bf16.msra.mxu0 0
        %1597 = vmatprep.subr.bf16.mxu0 0
        %1598 = vmatpush2.bf16.msra.mxu0 0
        %1599 = vmatprep.subr.bf16.mxu0 0
        %1600 = vmatpush2.bf16.msra.mxu0 0
        %1601 = vmatprep.subr.bf16.mxu0 0
        %1602 = vmatpush2.bf16.msra.mxu0 0
        %1603 = vmatprep.subr.bf16.mxu0 0
        %1604 = vmatpush2.bf16.msra.mxu0 0
        %1605 = vmatprep.subr.bf16.mxu0 0
        %1606 = vmatpush2.bf16.msra.mxu0 0
        %1607 = vmatprep.subr.bf16.mxu0 0
        %1608 = vmatpush2.bf16.msra.mxu0 0
        %1609 = vmatprep.subr.bf16.mxu0 0
        %1610 = vmatpush2.bf16.msra.mxu0 0
        %1611 = vmatprep.mubr.bf16.mxu0 0
        %1612 = vmatmul.mubr.bf16.gmra.mxu0 %v1574
        %v1613 = vpop.f32.mrf.mxu0
        %v1614 = vadd.f32 0.0, %v1613
        %v1615 = vpop.f32.mrf.mxu0
        %v1616 = vpop.f32.mrf.mxu0
        %v1617 = vpop.f32.mrf.mxu0
        %1618 = vdwg.mxu0
        %1620 = vrot.lane.b32.xlu0 %v1614, 8
        %v1621 = vpop.permute.xlu0 %1620
        %1623 = vst.msk [vmem:[#allocation3 + $0x8] sm:$0xff] %vm1152, %v1621
        %1624 = vrot.lane.b32.xlu0 %v1390, 112
        %v1625 = vpop.permute.xlu0 %1624
        %1626 = vrot.lane.b32.xlu0 %v1390, 80
        %v1627 = vpop.permute.xlu0 %1626
        %v1629 = vsel %vm921, %v1625, 0
        %v1632 = vsel %vm921, %v1627, 0
        %1634 = vmatprep.subr.bf16.mxu0 0
        %1635 = vmatpush1.bf16.xpose.msra.mxu0 0
        %1636 = vmatprep.subr.bf16.mxu0 0
        %1637 = vmatpush1.bf16.xpose.msra.mxu0 0
        %1638 = vmatprep.subr.bf16.mxu0 0
        %1639 = vmatpush1.bf16.xpose.msra.mxu0 0
        %1640 = vmatprep.subr.bf16.mxu0 0
        %1641 = vmatpush1.bf16.xpose.msra.mxu0 0
        %1642 = vmatprep.subr.bf16.mxu0 0
        %1643 = vmatpush1.bf16.xpose.msra.mxu0 0
        %1644 = vmatprep.subr.bf16.mxu0 0
        %1645 = vmatpush1.bf16.xpose.msra.mxu0 0
        %1646 = vmatprep.subr.bf16.mxu0 0
        %1647 = vmatpush1.bf16.xpose.msra.mxu0 0
        %1648 = vmatprep.subr.bf16.mxu0 0
        %1649 = vmatpush1.bf16.xpose.msra.mxu0 %v1632
        %1650 = vmatprep.subr.bf16.mxu0 0
        %1651 = vmatpush2.bf16.xpose.msra.mxu0 0
        %1652 = vmatprep.subr.bf16.mxu0 0
        %1653 = vmatpush2.bf16.xpose.msra.mxu0 0
        %1654 = vmatprep.subr.bf16.mxu0 0
        %1655 = vmatpush2.bf16.xpose.msra.mxu0 0
        %1656 = vmatprep.subr.bf16.mxu0 0
        %1657 = vmatpush2.bf16.xpose.msra.mxu0 0
        %1658 = vmatprep.subr.bf16.mxu0 0
        %1659 = vmatpush2.bf16.xpose.msra.mxu0 0
        %1660 = vmatprep.subr.bf16.mxu0 0
        %1661 = vmatpush2.bf16.xpose.msra.mxu0 0
        %1662 = vmatprep.subr.bf16.mxu0 0
        %1663 = vmatpush2.bf16.xpose.msra.mxu0 0
        %1664 = vmatprep.subr.bf16.mxu0 0
        %1665 = vmatpush2.bf16.xpose.msra.mxu0 0
        %1666 = vmatprep.mubr.bf16.mxu0 0
        %1667 = vmatmul.mubr.bf16.gmra.mxu0 %v1629
        %v1668 = vpop.f32.mrf.mxu0
        %v1669 = vadd.f32 0.0, %v1668
        %v1670 = vpop.f32.mrf.mxu0
        %v1671 = vpop.f32.mrf.mxu0
        %v1672 = vpop.f32.mrf.mxu0
        %1673 = vdwg.mxu0
        %v1674 = vmul.f32 %v1669, 0.35355338
        %v1675 = vadd.f32 %v1674, %v1444
        %v1676 = vsel %vm921, %v1675, -inf
        %1677 = vmax.xlane.f32.xlu0 %v1676
        %v1678 = vpop.xlane.xlu0 %1677
        %v1679 = vsub.f32 %v1675, %v1678
        %v1680 = vmul.f32 %v1679, 1.442695
        %v1681 = vpow.pop %v1680
        %v1682 = vsel %vm921, %v1681, 0.0
        %1683 = vadd.xlane.f32.xlu0 %v1682
        %v1684 = vpop.xlane.xlu0 %1683
        %v1685 = vrcp.pop %v1684
        %v1686 = vmul.f32 %v1681, %v1685
        %v1687 = vpack.c.bf16 %v1686, %v1686
        %1688 = vrot.lane.b32.xlu0 %v1390, 48
        %v1689 = vpop.permute.xlu0 %1688
        %v1691 = vsel %vm921, %v1687, 0
        %v1694 = vsel %vm991, %v1689, 0
        %1696 = vmatprep.subr.bf16.mxu0 0
        %1697 = vmatpush1.bf16.msra.mxu0 0
        %1698 = vmatprep.subr.bf16.mxu0 0
        %1699 = vmatpush1.bf16.msra.mxu0 0
        %1700 = vmatprep.subr.bf16.mxu0 0
        %1701 = vmatpush1.bf16.msra.mxu0 0
        %1702 = vmatprep.subr.bf16.mxu0 0
        %1703 = vmatpush1.bf16.msra.mxu0 0
        %1704 = vmatprep.subr.bf16.mxu0 0
        %1705 = vmatpush1.bf16.msra.mxu0 0
        %1706 = vmatprep.subr.bf16.mxu0 0
        %1707 = vmatpush1.bf16.msra.mxu0 0
        %1708 = vmatprep.subr.bf16.mxu0 0
        %1709 = vmatpush1.bf16.msra.mxu0 0
        %1710 = vmatprep.subr.bf16.mxu0 0
        %1711 = vmatpush1.bf16.msra.mxu0 %v1694
        %1712 = vmatprep.subr.bf16.mxu0 0
        %1713 = vmatpush2.bf16.msra.mxu0 0
        %1714 = vmatprep.subr.bf16.mxu0 0
        %1715 = vmatpush2.bf16.msra.mxu0 0
        %1716 = vmatprep.subr.bf16.mxu0 0
        %1717 = vmatpush2.bf16.msra.mxu0 0
        %1718 = vmatprep.subr.bf16.mxu0 0
        %1719 = vmatpush2.bf16.msra.mxu0 0
        %1720 = vmatprep.subr.bf16.mxu0 0
        %1721 = vmatpush2.bf16.msra.mxu0 0
        %1722 = vmatprep.subr.bf16.mxu0 0
        %1723 = vmatpush2.bf16.msra.mxu0 0
        %1724 = vmatprep.subr.bf16.mxu0 0
        %1725 = vmatpush2.bf16.msra.mxu0 0
        %1726 = vmatprep.subr.bf16.mxu0 0
        %1727 = vmatpush2.bf16.msra.mxu0 0
        %1728 = vmatprep.mubr.bf16.mxu0 0
        %1729 = vmatmul.mubr.bf16.gmra.mxu0 %v1691
        %v1730 = vpop.f32.mrf.mxu0
        %v1731 = vadd.f32 0.0, %v1730
        %v1732 = vpop.f32.mrf.mxu0
        %v1733 = vpop.f32.mrf.mxu0
        %v1734 = vpop.f32.mrf.mxu0
        %1735 = vdwg.mxu0
        %1737 = vrot.lane.b32.xlu0 %v1731, 16
        %v1738 = vpop.permute.xlu0 %1737
        %1740 = vst.msk [vmem:[#allocation3 + $0x8] sm:$0xff] %vm1270, %v1738
        %1741 = vrot.lane.b32.xlu0 %v1390, 104
        %v1742 = vpop.permute.xlu0 %1741
        %1743 = vrot.lane.b32.xlu0 %v1390, 72
        %v1744 = vpop.permute.xlu0 %1743
        %v1746 = vsel %vm921, %v1742, 0
        %v1749 = vsel %vm921, %v1744, 0
        %1751 = vmatprep.subr.bf16.mxu0 0
        %1752 = vmatpush1.bf16.xpose.msra.mxu0 0
        %1753 = vmatprep.subr.bf16.mxu0 0
        %1754 = vmatpush1.bf16.xpose.msra.mxu0 0
        %1755 = vmatprep.subr.bf16.mxu0 0
        %1756 = vmatpush1.bf16.xpose.msra.mxu0 0
        %1757 = vmatprep.subr.bf16.mxu0 0
        %1758 = vmatpush1.bf16.xpose.msra.mxu0 0
        %1759 = vmatprep.subr.bf16.mxu0 0
        %1760 = vmatpush1.bf16.xpose.msra.mxu0 0
        %1761 = vmatprep.subr.bf16.mxu0 0
        %1762 = vmatpush1.bf16.xpose.msra.mxu0 0
        %1763 = vmatprep.subr.bf16.mxu0 0
        %1764 = vmatpush1.bf16.xpose.msra.mxu0 0
        %1765 = vmatprep.subr.bf16.mxu0 0
        %1766 = vmatpush1.bf16.xpose.msra.mxu0 %v1749
        %1767 = vmatprep.subr.bf16.mxu0 0
        %1768 = vmatpush2.bf16.xpose.msra.mxu0 0
        %1769 = vmatprep.subr.bf16.mxu0 0
        %1770 = vmatpush2.bf16.xpose.msra.mxu0 0
        %1771 = vmatprep.subr.bf16.mxu0 0
        %1772 = vmatpush2.bf16.xpose.msra.mxu0 0
        %1773 = vmatprep.subr.bf16.mxu0 0
        %1774 = vmatpush2.bf16.xpose.msra.mxu0 0
        %1775 = vmatprep.subr.bf16.mxu0 0
        %1776 = vmatpush2.bf16.xpose.msra.mxu0 0
        %1777 = vmatprep.subr.bf16.mxu0 0
        %1778 = vmatpush2.bf16.xpose.msra.mxu0 0
        %1779 = vmatprep.subr.bf16.mxu0 0
        %1780 = vmatpush2.bf16.xpose.msra.mxu0 0
        %1781 = vmatprep.subr.bf16.mxu0 0
        %1782 = vmatpush2.bf16.xpose.msra.mxu0 0
        %1783 = vmatprep.mubr.bf16.mxu0 0
        %1784 = vmatmul.mubr.bf16.gmra.mxu0 %v1746
        %v1785 = vpop.f32.mrf.mxu0
        %v1786 = vadd.f32 0.0, %v1785
        %v1787 = vpop.f32.mrf.mxu0
        %v1788 = vpop.f32.mrf.mxu0
        %v1789 = vpop.f32.mrf.mxu0
        %1790 = vdwg.mxu0
        %v1791 = vmul.f32 %v1786, 0.35355338
        %v1792 = vadd.f32 %v1791, %v1444
        %v1793 = vsel %vm921, %v1792, -inf
        %1794 = vmax.xlane.f32.xlu0 %v1793
        %v1795 = vpop.xlane.xlu0 %1794
        %v1796 = vsub.f32 %v1792, %v1795
        %v1797 = vmul.f32 %v1796, 1.442695
        %v1798 = vpow.pop %v1797
        %v1799 = vsel %vm921, %v1798, 0.0
        %1800 = vadd.xlane.f32.xlu0 %v1799
        %v1801 = vpop.xlane.xlu0 %1800
        %v1802 = vrcp.pop %v1801
        %v1803 = vmul.f32 %v1798, %v1802
        %v1804 = vpack.c.bf16 %v1803, %v1803
        %1805 = vrot.lane.b32.xlu0 %v1390, 40
        %v1806 = vpop.permute.xlu0 %1805
        %v1808 = vsel %vm921, %v1804, 0
        %v1811 = vsel %vm991, %v1806, 0
        %1813 = vmatprep.subr.bf16.mxu0 0
        %1814 = vmatpush1.bf16.msra.mxu0 0
        %1815 = vmatprep.subr.bf16.mxu0 0
        %1816 = vmatpush1.bf16.msra.mxu0 0
        %1817 = vmatprep.subr.bf16.mxu0 0
        %1818 = vmatpush1.bf16.msra.mxu0 0
        %1819 = vmatprep.subr.bf16.mxu0 0
        %1820 = vmatpush1.bf16.msra.mxu0 0
        %1821 = vmatprep.subr.bf16.mxu0 0
        %1822 = vmatpush1.bf16.msra.mxu0 0
        %1823 = vmatprep.subr.bf16.mxu0 0
        %1824 = vmatpush1.bf16.msra.mxu0 0
        %1825 = vmatprep.subr.bf16.mxu0 0
        %1826 = vmatpush1.bf16.msra.mxu0 0
        %1827 = vmatprep.subr.bf16.mxu0 0
        %1828 = vmatpush1.bf16.msra.mxu0 %v1811
        %1829 = vmatprep.subr.bf16.mxu0 0
        %1830 = vmatpush2.bf16.msra.mxu0 0
        %1831 = vmatprep.subr.bf16.mxu0 0
        %1832 = vmatpush2.bf16.msra.mxu0 0
        %1833 = vmatprep.subr.bf16.mxu0 0
        %1834 = vmatpush2.bf16.msra.mxu0 0
        %1835 = vmatprep.subr.bf16.mxu0 0
        %1836 = vmatpush2.bf16.msra.mxu0 0
        %1837 = vmatprep.subr.bf16.mxu0 0
        %1838 = vmatpush2.bf16.msra.mxu0 0
        %1839 = vmatprep.subr.bf16.mxu0 0
        %1840 = vmatpush2.bf16.msra.mxu0 0
        %1841 = vmatprep.subr.bf16.mxu0 0
        %1842 = vmatpush2.bf16.msra.mxu0 0
        %1843 = vmatprep.subr.bf16.mxu0 0
        %1844 = vmatpush2.bf16.msra.mxu0 0
        %1845 = vmatprep.mubr.bf16.mxu0 0
        %1846 = vmatmul.mubr.bf16.gmra.mxu0 %v1808
        %v1847 = vpop.f32.mrf.mxu0
        %v1848 = vadd.f32 0.0, %v1847
        %v1849 = vpop.f32.mrf.mxu0
        %v1850 = vpop.f32.mrf.mxu0
        %v1851 = vpop.f32.mrf.mxu0
        %1852 = vdwg.mxu0
        %1854 = vrot.lane.b32.xlu0 %v1848, 24
        %v1855 = vpop.permute.xlu0 %1854
        %1857 = vst.msk [vmem:[#allocation3 + $0x8] sm:$0xff] %vm1388, %v1855
        %v1858 = vld [vmem:[#allocation3] sm:$0xff]
        %v1859 = vld [vmem:[#allocation3 + $0x8] sm:$0xff]
        %v1860 = vld [vmem:[%s756] sm:$0xf]
        %v1861 = vld [vmem:[%s756 + $0x4] sm:$0xf]
        %v1862 = vld [vmem:[%s756 + $0x8] sm:$0xf]
        %v1863 = vld [vmem:[%s756 + $0xc] sm:$0xf]
        %v1864 = vpack.c.bf16 %v1859, %v1858
        %v1865 = vld [vmem:[%s759] sm:$0x1]
        %v1867 = vlaneseq
        %v1868 = vshrl.u32 %v1867, 7
        %v1869 = vsub.s32 0, %v1868
        %v1870 = vrot.slane %v1865, %v1869
        %v1876 = vunpack.c.l.b16 %v1860
        %v1877 = vunpack.c.l.b16 %v1861
        %v1878 = vunpack.c.l.b16 %v1862
        %v1879 = vunpack.c.l.b16 %v1863
        %v1880 = vpack.c.b16 %v1877, %v1876
        %v1881 = vpack.c.b16 %v1879, %v1878
        %v1885 = vsel %vm869, %v1864, 0
        %1887 = vmatprep.subr.bf16.mxu0 0
        %1888 = vmatpush1.bf16.msra.mxu0 0
        %1889 = vmatprep.subr.bf16.mxu0 0
        %1890 = vmatpush1.bf16.msra.mxu0 0
        %1891 = vmatprep.subr.bf16.mxu0 0
        %1892 = vmatpush1.bf16.msra.mxu0 0
        %1893 = vmatprep.subr.bf16.mxu0 0
        %1894 = vmatpush1.bf16.msra.mxu0 0
        %1895 = vmatprep.subr.bf16.mxu0 0
        %1896 = vmatpush1.bf16.msra.mxu0 0
        %1897 = vmatprep.subr.bf16.mxu0 0
        %1898 = vmatpush1.bf16.msra.mxu0 0
        %1899 = vmatprep.subr.bf16.mxu0 0
        %1900 = vmatpush1.bf16.msra.mxu0 %v1881
        %1901 = vmatprep.subr.bf16.mxu0 0
        %1902 = vmatpush1.bf16.msra.mxu0 %v1880
        %1903 = vmatprep.subr.bf16.mxu0 0
        %1904 = vmatpush2.bf16.msra.mxu0 0
        %1905 = vmatprep.subr.bf16.mxu0 0
        %1906 = vmatpush2.bf16.msra.mxu0 0
        %1907 = vmatprep.subr.bf16.mxu0 0
        %1908 = vmatpush2.bf16.msra.mxu0 0
        %1909 = vmatprep.subr.bf16.mxu0 0
        %1910 = vmatpush2.bf16.msra.mxu0 0
        %1911 = vmatprep.subr.bf16.mxu0 0
        %1912 = vmatpush2.bf16.msra.mxu0 0
        %1913 = vmatprep.subr.bf16.mxu0 0
        %1914 = vmatpush2.bf16.msra.mxu0 0
        %1915 = vmatprep.subr.bf16.mxu0 0
        %1916 = vmatpush2.bf16.msra.mxu0 0
        %1917 = vmatprep.subr.bf16.mxu0 0
        %1918 = vmatpush2.bf16.msra.mxu0 0
        %1919 = vmatprep.mubr.bf16.mxu0 0
        %1920 = vmatmul.mubr.bf16.gmra.mxu0 %v1885
        %v1921 = vpop.f32.mrf.mxu0
        %v1922 = vadd.f32 %v1870, %v1921
        %v1923 = vpop.f32.mrf.mxu0
        %v1924 = vpop.f32.mrf.mxu0
        %v1925 = vadd.f32 %v1870, %v1924
        %v1926 = vpop.f32.mrf.mxu0
        %1927 = vdwg.mxu0
        %v1928 = vadd.f32 %v1922, %v843
        %v1929 = vadd.f32 %v1925, %v844
        %v1930 = vld [vmem:[%s762] sm:$0x1]
        %v1931 = vld [vmem:[%s765] sm:$0x1]
        %v1932 = vsel %vm869, %v1928, 0.0
        %1933 = vadd.xlane.f32.xlu0 %v1932
        %v1934 = vpop.xlane.xlu0 %1933
        %v1935 = vsel %vm869, %v1929, 0.0
        %1936 = vadd.xlane.f32.xlu0 %v1935
        %v1937 = vpop.xlane.xlu0 %1936
        %v1938 = vrcp.pop 32.0
        %v1939 = vmul.f32 %v1934, %v1938
        %v1940 = vmul.f32 %v1937, %v1938
        %v1941 = vsub.f32 %v1928, %v1939
        %v1942 = vsub.f32 %v1929, %v1940
        %v1943 = vmul.f32 %v1941, %v1941
        %v1944 = vmul.f32 %v1942, %v1942
        %v1945 = vsel %vm869, %v1943, 0.0
        %1946 = vadd.xlane.f32.xlu0 %v1945
        %v1947 = vpop.xlane.xlu0 %1946
        %v1948 = vsel %vm869, %v1944, 0.0
        %1949 = vadd.xlane.f32.xlu0 %v1948
        %v1950 = vpop.xlane.xlu0 %1949
        %v1951 = vmul.f32 %v1947, %v1938
        %v1952 = vmul.f32 %v1950, %v1938
        %v1953 = vadd.f32 %v1951, 1e-05
        %v1954 = vadd.f32 %v1952, 1e-05
        %v1955 = vrsqrt.pop %v1953
        %v1956 = vrsqrt.pop %v1954
        %v1957 = vmul.f32 %v1941, %v1955
        %v1958 = vmul.f32 %v1942, %v1956
        %v1960 = vlaneseq
        %v1961 = vshrl.u32 %v1960, 7
        %v1962 = vsub.s32 0, %v1961
        %v1963 = vrot.slane %v1930, %v1962
        %v1965 = vmul.f32 %v1957, %v1963
        %v1966 = vmul.f32 %v1958, %v1963
        %v1968 = vlaneseq
        %v1969 = vshrl.u32 %v1968, 7
        %v1970 = vsub.s32 0, %v1969
        %v1971 = vrot.slane %v1931, %v1970
        %v1973 = vadd.f32 %v1965, %v1971
        %v1974 = vadd.f32 %v1966, %v1971
        %v1975 = vld [vmem:[%s770] sm:$0xf]
        %v1976 = vld [vmem:[%s770 + $0x4] sm:$0xf]
        %v1977 = vld [vmem:[%s770 + $0x8] sm:$0xf]
        %v1978 = vld [vmem:[%s770 + $0xc] sm:$0xf]
        %v1979 = vpack.c.bf16 %v1974, %v1973
        %v1980 = vld [vmem:[%s773] sm:$0x1]
        %v1982 = vlaneseq
        %v1983 = vshrl.u32 %v1982, 7
        %v1984 = vsub.s32 0, %v1983
        %v1985 = vrot.slane %v1980, %v1984
        %v1991 = vunpack.c.l.b16 %v1975
        %v1992 = vunpack.c.l.b16 %v1976
        %v1993 = vunpack.c.l.b16 %v1977
        %v1994 = vunpack.c.l.b16 %v1978
        %v1995 = vpack.c.b16 %v1992, %v1991
        %v1996 = vpack.c.b16 %v1994, %v1993
        %v2000 = vsel %vm869, %v1979, 0
        %2002 = vmatprep.subr.bf16.mxu0 0
        %2003 = vmatpush1.bf16.msra.mxu0 0
        %2004 = vmatprep.subr.bf16.mxu0 0
        %2005 = vmatpush1.bf16.msra.mxu0 0
        %2006 = vmatprep.subr.bf16.mxu0 0
        %2007 = vmatpush1.bf16.msra.mxu0 0
        %2008 = vmatprep.subr.bf16.mxu0 0
        %2009 = vmatpush1.bf16.msra.mxu0 0
        %2010 = vmatprep.subr.bf16.mxu0 0
        %2011 = vmatpush1.bf16.msra.mxu0 0
        %2012 = vmatprep.subr.bf16.mxu0 0
        %2013 = vmatpush1.bf16.msra.mxu0 0
        %2014 = vmatprep.subr.bf16.mxu0 0
        %2015 = vmatpush1.bf16.msra.mxu0 %v1996
        %2016 = vmatprep.subr.bf16.mxu0 0
        %2017 = vmatpush1.bf16.msra.mxu0 %v1995
        %2018 = vmatprep.subr.bf16.mxu0 0
        %2019 = vmatpush2.bf16.msra.mxu0 0
        %2020 = vmatprep.subr.bf16.mxu0 0
        %2021 = vmatpush2.bf16.msra.mxu0 0
        %2022 = vmatprep.subr.bf16.mxu0 0
        %2023 = vmatpush2.bf16.msra.mxu0 0
        %2024 = vmatprep.subr.bf16.mxu0 0
        %2025 = vmatpush2.bf16.msra.mxu0 0
        %2026 = vmatprep.subr.bf16.mxu0 0
        %2027 = vmatpush2.bf16.msra.mxu0 0
        %2028 = vmatprep.subr.bf16.mxu0 0
        %2029 = vmatpush2.bf16.msra.mxu0 0
        %2030 = vmatprep.subr.bf16.mxu0 0
        %2031 = vmatpush2.bf16.msra.mxu0 0
        %2032 = vmatprep.subr.bf16.mxu0 0
        %2033 = vmatpush2.bf16.msra.mxu0 0
        %2034 = vmatprep.mubr.bf16.mxu0 0
        %2035 = vmatmul.mubr.bf16.gmra.mxu0 %v2000
        %v2036 = vpop.f32.mrf.mxu0
        %v2037 = vadd.f32 %v1985, %v2036
        %v2038 = vpop.f32.mrf.mxu0
        %v2039 = vpop.f32.mrf.mxu0
        %v2040 = vadd.f32 %v1985, %v2039
        %v2041 = vpop.f32.mrf.mxu0
        %2042 = vdwg.mxu0
        %v2043 = vmul.f32 %v2037, 0.5
        %v2044 = vmul.f32 %v2040, 0.5
        %v2045 = vmul.f32 %v2037, 0.044715
        %v2046 = vmul.f32 %v2040, 0.044715
        %v2047 = vmul.f32 %v2045, %v2037
        %v2048 = vmul.f32 %v2046, %v2040
        %v2049 = vmul.f32 %v2047, %v2037
        %v2050 = vmul.f32 %v2048, %v2040
        %v2051 = vadd.f32 %v2037, %v2049
        %v2052 = vadd.f32 %v2040, %v2050
        %v2053 = vmul.f32 %v2051, 0.7978846
        %v2054 = vmul.f32 %v2052, 0.7978846
        %v2055 = vtanh.pop %v2053
        %v2056 = vtanh.pop %v2054
        %v2057 = vadd.f32 %v2055, 1.0
        %v2058 = vadd.f32 %v2056, 1.0
        %v2059 = vmul.f32 %v2043, %v2057
        %v2060 = vmul.f32 %v2044, %v2058
        %v2061 = vld [vmem:[%s778] sm:$0xf]
        %v2062 = vld [vmem:[%s778 + $0x4] sm:$0xf]
        %v2063 = vld [vmem:[%s778 + $0x8] sm:$0xf]
        %v2064 = vld [vmem:[%s778 + $0xc] sm:$0xf]
        %v2065 = vld [vmem:[%s778 + $0x10] sm:$0xf]
        %v2066 = vld [vmem:[%s778 + $0x14] sm:$0xf]
        %v2067 = vld [vmem:[%s778 + $0x18] sm:$0xf]
        %v2068 = vld [vmem:[%s778 + $0x1c] sm:$0xf]
        %v2069 = vpack.c.bf16 %v2060, %v2059
        %v2070 = vld [vmem:[%s781] sm:$0x1]
        %v2072 = vlaneseq
        %v2073 = vshrl.u32 %v2072, 7
        %v2074 = vsub.s32 0, %v2073
        %v2075 = vrot.slane %v2070, %v2074
        %v2085 = vunpack.c.l.b16 %v2061
        %v2086 = vunpack.c.l.b16 %v2062
        %v2087 = vunpack.c.l.b16 %v2063
        %v2088 = vunpack.c.l.b16 %v2064
        %v2089 = vunpack.c.l.b16 %v2065
        %v2090 = vunpack.c.l.b16 %v2066
        %v2091 = vunpack.c.l.b16 %v2067
        %v2092 = vunpack.c.l.b16 %v2068
        %v2093 = vpack.c.b16 %v2086, %v2085
        %v2094 = vpack.c.b16 %v2088, %v2087
        %v2095 = vpack.c.b16 %v2090, %v2089
        %v2096 = vpack.c.b16 %v2092, %v2091
        %vm2101 = vcmask 523264
        %v2103 = vsel %vm2101, %v2069, 0
        %2105 = vmatprep.subr.bf16.mxu0 0
        %2106 = vmatpush1.bf16.msra.mxu0 0
        %2107 = vmatprep.subr.bf16.mxu0 0
        %2108 = vmatpush1.bf16.msra.mxu0 0
        %2109 = vmatprep.subr.bf16.mxu0 0
        %2110 = vmatpush1.bf16.msra.mxu0 0
        %2111 = vmatprep.subr.bf16.mxu0 0
        %2112 = vmatpush1.bf16.msra.mxu0 0
        %2113 = vmatprep.subr.bf16.mxu0 0
        %2114 = vmatpush1.bf16.msra.mxu0 %v2096
        %2115 = vmatprep.subr.bf16.mxu0 0
        %2116 = vmatpush1.bf16.msra.mxu0 %v2095
        %2117 = vmatprep.subr.bf16.mxu0 0
        %2118 = vmatpush1.bf16.msra.mxu0 %v2094
        %2119 = vmatprep.subr.bf16.mxu0 0
        %2120 = vmatpush1.bf16.msra.mxu0 %v2093
        %2121 = vmatprep.subr.bf16.mxu0 0
        %2122 = vmatpush2.bf16.msra.mxu0 0
        %2123 = vmatprep.subr.bf16.mxu0 0
        %2124 = vmatpush2.bf16.msra.mxu0 0
        %2125 = vmatprep.subr.bf16.mxu0 0
        %2126 = vmatpush2.bf16.msra.mxu0 0
        %2127 = vmatprep.subr.bf16.mxu0 0
        %2128 = vmatpush2.bf16.msra.mxu0 0
        %2129 = vmatprep.subr.bf16.mxu0 0
        %2130 = vmatpush2.bf16.msra.mxu0 0
        %2131 = vmatprep.subr.bf16.mxu0 0
        %2132 = vmatpush2.bf16.msra.mxu0 0
        %2133 = vmatprep.subr.bf16.mxu0 0
        %2134 = vmatpush2.bf16.msra.mxu0 0
        %2135 = vmatprep.subr.bf16.mxu0 0
        %2136 = vmatpush2.bf16.msra.mxu0 0
        %2137 = vmatprep.mubr.bf16.mxu0 0
        %2138 = vmatmul.mubr.bf16.gmra.mxu0 %v2103
        %v2139 = vpop.f32.mrf.mxu0
        %v2140 = vadd.f32 %v2075, %v2139
        %v2141 = vpop.f32.mrf.mxu0
        %v2142 = vpop.f32.mrf.mxu0
        %v2143 = vadd.f32 %v2075, %v2142
        %v2144 = vpop.f32.mrf.mxu0
        %2145 = vdwg.mxu0
        %v2146 = vadd.f32 %v2140, %v1973
        %v2147 = vadd.f32 %v2143, %v1974
        %v2148 = vld [vmem:[%s784] sm:$0x1]
        %v2149 = vld [vmem:[%s787] sm:$0x1]
        %v2150 = vsel %vm869, %v2146, 0.0
        %2151 = vadd.xlane.f32.xlu0 %v2150
        %v2152 = vpop.xlane.xlu0 %2151
        %v2153 = vsel %vm869, %v2147, 0.0
        %2154 = vadd.xlane.f32.xlu0 %v2153
        %v2155 = vpop.xlane.xlu0 %2154
        %v2156 = vmul.f32 %v2152, %v1938
        %v2157 = vmul.f32 %v2155, %v1938
        %v2158 = vsub.f32 %v2146, %v2156
        %v2159 = vsub.f32 %v2147, %v2157
        %v2160 = vmul.f32 %v2158, %v2158
        %v2161 = vmul.f32 %v2159, %v2159
        %v2162 = vsel %vm869, %v2160, 0.0
        %2163 = vadd.xlane.f32.xlu0 %v2162
        %v2164 = vpop.xlane.xlu0 %2163
        %v2165 = vsel %vm869, %v2161, 0.0
        %2166 = vadd.xlane.f32.xlu0 %v2165
        %v2167 = vpop.xlane.xlu0 %2166
        %v2168 = vmul.f32 %v2164, %v1938
        %v2169 = vmul.f32 %v2167, %v1938
        %v2170 = vadd.f32 %v2168, 1e-05
        %v2171 = vadd.f32 %v2169, 1e-05
        %v2172 = vrsqrt.pop %v2170
        %v2173 = vrsqrt.pop %v2171
        %v2174 = vmul.f32 %v2158, %v2172
        %v2175 = vmul.f32 %v2159, %v2173
        %v2177 = vlaneseq
        %v2178 = vshrl.u32 %v2177, 7
        %v2179 = vsub.s32 0, %v2178
        %v2180 = vrot.slane %v2148, %v2179
        %v2182 = vmul.f32 %v2174, %v2180
        %v2183 = vmul.f32 %v2175, %v2180
        %v2185 = vlaneseq
        %v2186 = vshrl.u32 %v2185, 7
        %v2187 = vsub.s32 0, %v2186
        %v2188 = vrot.slane %v2149, %v2187
        %v2190 = vadd.f32 %v2182, %v2188
        %v2191 = vadd.f32 %v2183, %v2188
        %2192 = vst.msk [vmem:[#allocation2] sm:$0xff] %vm869, %v2190
        %2193 = vst.msk [vmem:[#allocation2 + $0x8] sm:$0xff] %vm869, %v2191
        %p2194 = scmp.eq.s32.totalorder %s32, 1
        // Predicated region
        $region105: #{my_bertweet_forward.1} parent=99 // pred_check
          %p2195 = pneg %p2194
        $region106: #{my_bertweet_forward.1} parent=99 // pred_check_branch
          %2197 = sbr.rel (%p2195) target = $region108
        $region107: #{my_bertweet_forward.1} parent=99 // pred_region
          %v2198 = vld [vmem:[%s16] sm:$0xf]
          %v2199 = vld [vmem:[%s16 + $0x4] sm:$0xf]
          %v2200 = vld [vmem:[%s16 + $0x8] sm:$0xf]
          %v2201 = vld [vmem:[%s16 + $0xc] sm:$0xf]
          %v2202 = vpack.c.bf16 %v2190, %v2190
          %v2203 = vld [vmem:[%s17] sm:$0x1]
          %v2208 = vunpack.c.l.b16 %v2198
          %v2209 = vunpack.c.l.b16 %v2199
          %v2210 = vunpack.c.l.b16 %v2200
          %v2211 = vunpack.c.l.b16 %v2201
          %v2212 = vpack.c.b16 %v2209, %v2208
          %v2213 = vpack.c.b16 %v2211, %v2210
          %v2217 = vsel %vm869, %v2202, 0
          %2219 = vmatprep.subr.bf16.mxu0 0
          %2220 = vmatpush1.bf16.msra.mxu0 0
          %2221 = vmatprep.subr.bf16.mxu0 0
          %2222 = vmatpush1.bf16.msra.mxu0 0
          %2223 = vmatprep.subr.bf16.mxu0 0
          %2224 = vmatpush1.bf16.msra.mxu0 0
          %2225 = vmatprep.subr.bf16.mxu0 0
          %2226 = vmatpush1.bf16.msra.mxu0 0
          %2227 = vmatprep.subr.bf16.mxu0 0
          %2228 = vmatpush1.bf16.msra.mxu0 0
          %2229 = vmatprep.subr.bf16.mxu0 0
          %2230 = vmatpush1.bf16.msra.mxu0 0
          %2231 = vmatprep.subr.bf16.mxu0 0
          %2232 = vmatpush1.bf16.msra.mxu0 %v2213
          %2233 = vmatprep.subr.bf16.mxu0 0
          %2234 = vmatpush1.bf16.msra.mxu0 %v2212
          %2235 = vmatprep.subr.bf16.mxu0 0
          %2236 = vmatpush2.bf16.msra.mxu0 0
          %2237 = vmatprep.subr.bf16.mxu0 0
          %2238 = vmatpush2.bf16.msra.mxu0 0
          %2239 = vmatprep.subr.bf16.mxu0 0
          %2240 = vmatpush2.bf16.msra.mxu0 0
          %2241 = vmatprep.subr.bf16.mxu0 0
          %2242 = vmatpush2.bf16.msra.mxu0 0
          %2243 = vmatprep.subr.bf16.mxu0 0
          %2244 = vmatpush2.bf16.msra.mxu0 0
          %2245 = vmatprep.subr.bf16.mxu0 0
          %2246 = vmatpush2.bf16.msra.mxu0 0
          %2247 = vmatprep.subr.bf16.mxu0 0
          %2248 = vmatpush2.bf16.msra.mxu0 0
          %2249 = vmatprep.subr.bf16.mxu0 0
          %2250 = vmatpush2.bf16.msra.mxu0 0
          %2251 = vmatprep.mubr.bf16.mxu0 0
          %2252 = vmatmul.mubr.bf16.gmra.mxu0 %v2217
          %v2253 = vpop.f32.mrf.mxu0
          %v2254 = vadd.f32 %v2203, %v2253
          %v2255 = vpop.f32.mrf.mxu0
          %v2256 = vpop.f32.mrf.mxu0
          %v2257 = vpop.f32.mrf.mxu0
          %2258 = vdwg.mxu0
          %v2259 = vtanh.pop %v2254
          %v2260 = vld [vmem:[%s18] sm:$0xf]
          %v2261 = vld [vmem:[%s18 + $0x4] sm:$0xf]
          %v2262 = vld [vmem:[%s18 + $0x8] sm:$0xf]
          %v2263 = vld [vmem:[%s18 + $0xc] sm:$0xf]
          %v2264 = vpack.c.bf16 %v2259, %v2259
          %v2265 = vld [vmem:[%s19] sm:$0x1]
          %v2270 = vunpack.c.l.b16 %v2260
          %v2271 = vunpack.c.l.b16 %v2261
          %v2272 = vunpack.c.l.b16 %v2262
          %v2273 = vunpack.c.l.b16 %v2263
          %v2274 = vpack.c.b16 %v2271, %v2270
          %v2275 = vpack.c.b16 %v2273, %v2272
          %v2279 = vsel %vm869, %v2264, 0
          %2281 = vmatprep.subr.bf16.mxu0 0
          %2282 = vmatpush1.bf16.msra.mxu0 0
          %2283 = vmatprep.subr.bf16.mxu0 0
          %2284 = vmatpush1.bf16.msra.mxu0 0
          %2285 = vmatprep.subr.bf16.mxu0 0
          %2286 = vmatpush1.bf16.msra.mxu0 0
          %2287 = vmatprep.subr.bf16.mxu0 0
          %2288 = vmatpush1.bf16.msra.mxu0 0
          %2289 = vmatprep.subr.bf16.mxu0 0
          %2290 = vmatpush1.bf16.msra.mxu0 0
          %2291 = vmatprep.subr.bf16.mxu0 0
          %2292 = vmatpush1.bf16.msra.mxu0 0
          %2293 = vmatprep.subr.bf16.mxu0 0
          %2294 = vmatpush1.bf16.msra.mxu0 %v2275
          %2295 = vmatprep.subr.bf16.mxu0 0
          %2296 = vmatpush1.bf16.msra.mxu0 %v2274
          %2297 = vmatprep.subr.bf16.mxu0 0
          %2298 = vmatpush2.bf16.msra.mxu0 0
          %2299 = vmatprep.subr.bf16.mxu0 0
          %2300 = vmatpush2.bf16.msra.mxu0 0
          %2301 = vmatprep.subr.bf16.mxu0 0
          %2302 = vmatpush2.bf16.msra.mxu0 0
          %2303 = vmatprep.subr.bf16.mxu0 0
          %2304 = vmatpush2.bf16.msra.mxu0 0
          %2305 = vmatprep.subr.bf16.mxu0 0
          %2306 = vmatpush2.bf16.msra.mxu0 0
          %2307 = vmatprep.subr.bf16.mxu0 0
          %2308 = vmatpush2.bf16.msra.mxu0 0
          %2309 = vmatprep.subr.bf16.mxu0 0
          %2310 = vmatpush2.bf16.msra.mxu0 0
          %2311 = vmatprep.subr.bf16.mxu0 0
          %2312 = vmatpush2.bf16.msra.mxu0 0
          %2313 = vmatprep.mubr.bf16.mxu0 0
          %2314 = vmatmul.mubr.bf16.gmra.mxu0 %v2279
          %v2315 = vpop.f32.mrf.mxu0
          %v2316 = vadd.f32 %v2265, %v2315
          %v2317 = vpop.f32.mrf.mxu0
          %v2318 = vpop.f32.mrf.mxu0
          %v2319 = vpop.f32.mrf.mxu0
          %2320 = vdwg.mxu0
          %2321 = vst [vmem:[#allocation4] sm:$0x1] %v2316
          %v2322 = vld [vmem:[%s16] sm:$0xf]
          %v2323 = vld [vmem:[%s16 + $0x4] sm:$0xf]
          %v2324 = vld [vmem:[%s16 + $0x8] sm:$0xf]
          %v2325 = vld [vmem:[%s16 + $0xc] sm:$0xf]
          %v2326 = vpack.c.bf16 %v2191, %v2191
          %v2327 = vld [vmem:[%s17] sm:$0x1]
          %v2332 = vunpack.c.l.b16 %v2322
          %v2333 = vunpack.c.l.b16 %v2323
          %v2334 = vunpack.c.l.b16 %v2324
          %v2335 = vunpack.c.l.b16 %v2325
          %v2336 = vpack.c.b16 %v2333, %v2332
          %v2337 = vpack.c.b16 %v2335, %v2334
          %v2341 = vsel %vm869, %v2326, 0
          %2343 = vmatprep.subr.bf16.mxu0 0
          %2344 = vmatpush1.bf16.msra.mxu0 0
          %2345 = vmatprep.subr.bf16.mxu0 0
          %2346 = vmatpush1.bf16.msra.mxu0 0
          %2347 = vmatprep.subr.bf16.mxu0 0
          %2348 = vmatpush1.bf16.msra.mxu0 0
          %2349 = vmatprep.subr.bf16.mxu0 0
          %2350 = vmatpush1.bf16.msra.mxu0 0
          %2351 = vmatprep.subr.bf16.mxu0 0
          %2352 = vmatpush1.bf16.msra.mxu0 0
          %2353 = vmatprep.subr.bf16.mxu0 0
          %2354 = vmatpush1.bf16.msra.mxu0 0
          %2355 = vmatprep.subr.bf16.mxu0 0
          %2356 = vmatpush1.bf16.msra.mxu0 %v2337
          %2357 = vmatprep.subr.bf16.mxu0 0
          %2358 = vmatpush1.bf16.msra.mxu0 %v2336
          %2359 = vmatprep.subr.bf16.mxu0 0
          %2360 = vmatpush2.bf16.msra.mxu0 0
          %2361 = vmatprep.subr.bf16.mxu0 0
          %2362 = vmatpush2.bf16.msra.mxu0 0
          %2363 = vmatprep.subr.bf16.mxu0 0
          %2364 = vmatpush2.bf16.msra.mxu0 0
          %2365 = vmatprep.subr.bf16.mxu0 0
          %2366 = vmatpush2.bf16.msra.mxu0 0
          %2367 = vmatprep.subr.bf16.mxu0 0
          %2368 = vmatpush2.bf16.msra.mxu0 0
          %2369 = vmatprep.subr.bf16.mxu0 0
          %2370 = vmatpush2.bf16.msra.mxu0 0
          %2371 = vmatprep.subr.bf16.mxu0 0
          %2372 = vmatpush2.bf16.msra.mxu0 0
          %2373 = vmatprep.subr.bf16.mxu0 0
          %2374 = vmatpush2.bf16.msra.mxu0 0
          %2375 = vmatprep.mubr.bf16.mxu0 0
          %2376 = vmatmul.mubr.bf16.gmra.mxu0 %v2341
          %v2377 = vpop.f32.mrf.mxu0
          %v2378 = vadd.f32 %v2327, %v2377
          %v2379 = vpop.f32.mrf.mxu0
          %v2380 = vpop.f32.mrf.mxu0
          %v2381 = vpop.f32.mrf.mxu0
          %2382 = vdwg.mxu0
          %v2383 = vtanh.pop %v2378
          %v2384 = vld [vmem:[%s18] sm:$0xf]
          %v2385 = vld [vmem:[%s18 + $0x4] sm:$0xf]
          %v2386 = vld [vmem:[%s18 + $0x8] sm:$0xf]
          %v2387 = vld [vmem:[%s18 + $0xc] sm:$0xf]
          %v2388 = vpack.c.bf16 %v2383, %v2383
          %v2389 = vld [vmem:[%s19] sm:$0x1]
          %v2394 = vunpack.c.l.b16 %v2384
          %v2395 = vunpack.c.l.b16 %v2385
          %v2396 = vunpack.c.l.b16 %v2386
          %v2397 = vunpack.c.l.b16 %v2387
          %v2398 = vpack.c.b16 %v2395, %v2394
          %v2399 = vpack.c.b16 %v2397, %v2396
          %v2403 = vsel %vm869, %v2388, 0
          %2405 = vmatprep.subr.bf16.mxu0 0
          %2406 = vmatpush1.bf16.msra.mxu0 0
          %2407 = vmatprep.subr.bf16.mxu0 0
          %2408 = vmatpush1.bf16.msra.mxu0 0
          %2409 = vmatprep.subr.bf16.mxu0 0
          %2410 = vmatpush1.bf16.msra.mxu0 0
          %2411 = vmatprep.subr.bf16.mxu0 0
          %2412 = vmatpush1.bf16.msra.mxu0 0
          %2413 = vmatprep.subr.bf16.mxu0 0
          %2414 = vmatpush1.bf16.msra.mxu0 0
          %2415 = vmatprep.subr.bf16.mxu0 0
          %2416 = vmatpush1.bf16.msra.mxu0 0
          %2417 = vmatprep.subr.bf16.mxu0 0
          %2418 = vmatpush1.bf16.msra.mxu0 %v2399
          %2419 = vmatprep.subr.bf16.mxu0 0
          %2420 = vmatpush1.bf16.msra.mxu0 %v2398
          %2421 = vmatprep.subr.bf16.mxu0 0
          %2422 = vmatpush2.bf16.msra.mxu0 0
          %2423 = vmatprep.subr.bf16.mxu0 0
          %2424 = vmatpush2.bf16.msra.mxu0 0
          %2425 = vmatprep.subr.bf16.mxu0 0
          %2426 = vmatpush2.bf16.msra.mxu0 0
          %2427 = vmatprep.subr.bf16.mxu0 0
          %2428 = vmatpush2.bf16.msra.mxu0 0
          %2429 = vmatprep.subr.bf16.mxu0 0
          %2430 = vmatpush2.bf16.msra.mxu0 0
          %2431 = vmatprep.subr.bf16.mxu0 0
          %2432 = vmatpush2.bf16.msra.mxu0 0
          %2433 = vmatprep.subr.bf16.mxu0 0
          %2434 = vmatpush2.bf16.msra.mxu0 0
          %2435 = vmatprep.subr.bf16.mxu0 0
          %2436 = vmatpush2.bf16.msra.mxu0 0
          %2437 = vmatprep.mubr.bf16.mxu0 0
          %2438 = vmatmul.mubr.bf16.gmra.mxu0 %v2403
          %v2439 = vpop.f32.mrf.mxu0
          %v2440 = vadd.f32 %v2389, %v2439
          %v2441 = vpop.f32.mrf.mxu0
          %v2442 = vpop.f32.mrf.mxu0
          %v2443 = vpop.f32.mrf.mxu0
          %2444 = vdwg.mxu0
          %2445 = vst [vmem:[#allocation4 + $0x1] sm:$0x1] %v2440
        $region108: #{my_bertweet_forward.1} parent=99 // pred_fallthru
          _
        // Predicated region
        $region109: #{my_bertweet_forward.1} parent=99 // pred_check
          %p2446 = pneg %p525
        $region110: #{my_bertweet_forward.1} parent=99 // pred_check_branch
          %2448 = sbr.rel (%p2446) target = $region112
        $region111: #{my_bertweet_forward.1} parent=99 // pred_region
          %s2450 = ssub.s32 32, 32
          %2451 = vsyncadd [#allocation5], %s2450
          %s2453 = sshll.u32 [#allocation4], 4
          %s2454 = int_to_ptr.vmem [resolvable:$true] %s2453
          %2456 = dma.vmem_to_hbm [thread:$0]  %s2454, 32, %s20, [#allocation5]
        $region112: #{my_bertweet_forward.1} parent=99 // pred_fallthru
          _
        // Predicated region
        $region113: #{my_bertweet_forward.1} parent=99 // pred_check
          %p2457 = pneg %p525
        $region114: #{my_bertweet_forward.1} parent=99 // pred_check_branch
          %2459 = sbr.rel (%p2457) target = $region116
        $region115: #{my_bertweet_forward.1} parent=99 // pred_region
          %2460 = dma.done [#allocation5], 32
        $region116: #{my_bertweet_forward.1} parent=99 // pred_fallthru
          _
      $region100: #{my_bertweet_forward.1} parent=5 // pred_fallthru
        _
      %p2461 = scmp.le.s32.totalorder 2, %s27
      // Predicated region
      $region117: #{my_bertweet_forward.1} parent=5 // pred_check
        %p2462 = pneg %p2461
      $region118: #{my_bertweet_forward.1} parent=5 // pred_check_branch
        %2464 = sbr.rel (%p2462) target = $region120
      $region119: #{my_bertweet_forward.1} parent=5 // pred_region
        %s2465 = ssub.s32 %s27, 2
      $region120: #{my_bertweet_forward.1} parent=5 // pred_fallthru
        _
    $region6: #{my_bertweet_forward.1} parent=1 // loop_footer
      %s31 = sadd.s32 1, %s27
    $region7: #{my_bertweet_forward.1} parent=1 // loop_footer_branch
      %26 = sbr.rel target = $region3
    $region8: #{my_bertweet_forward.1} parent=1 // loop_exit
      _
    %2466 = vsyncpa [#allocation5], 1
    %s2467 = scalar_lea.sflag [#allocation5], 1
    %2468 = vsyncpa %s2467, 1

</llo_original>
